<compile_context>
chip_gen: v7x
topology: tpu7x:2x2x1
jax: 0.10.0
libtpu: 0.0.40
codegen_flags: <defaults>
</compile_context>

<pallas_src>
import jax
import jax.numpy as jnp
from jax.experimental import pallas as pl
from jax.experimental.pallas import tpu as pltpu

BN_EPS = 1e-5
LANES = 128
# MXU input dtype. jnp.float32 reproduces PyTorch f32 numerics exactly enough
# for a 1e-4-level check; set to jnp.bfloat16 on v6e/v7x for ~4x MXU throughput
# and half the activation bytes (accumulation + BN stats stay f32; relax the
# test tolerance to ~2e-2 in that case).
MXU_DTYPE = jnp.float32
VMEM_LIMIT_BYTES = 32 * 1024 * 1024   # headroom for v7x (64 MiB physical VMEM)


def _round_up(x, m):
    return (x + m - 1) // m * m


def _largest_divisor_leq(n, cap, mult=8):
    """Largest divisor of n that is a multiple of `mult` and <= cap (else n)."""
    best = None
    d = mult
    cap = max(cap, mult)
    while d <= min(n, cap):
        if n % d == 0:
            best = d
        d += mult
    return best if best is not None else n


# ----------------------------------------------------------------------------
# pass 1: ReLU -> Conv3x3(+bias)  + per-tile BN1 partial statistics
# ----------------------------------------------------------------------------
def _conv3_stats_kernel(xpad_ref, halo_ref, w3_ref, b3_ref,
                        y1_ref, st_ref, win_ref, acc_ref):
    # xpad_ref: (1, TH, W+2, Cp)   body rows of the zero-padded input
    # halo_ref: (1, 1, 2, W+2, Cp) the two rows below the body (3x3 halo)
    # w3_ref  : (3, 3, Cp, Cp)     conv weights (kh, kw, Cin, Cout)
    # b3_ref  : (1, Cp)
    # y1_ref  : (TH*W, Cp)         conv output tile (rows flattened, f32)
    # st_ref  : (1, 2, Cp)         per-tile [sum ; sum_of_squares]
    # win_ref : (TH+2, W+2, Cp)    scratch: ReLU'd halo window (MXU dtype)
    # acc_ref : (TH*W, Cp) f32     scratch accumulator
    TH = xpad_ref.shape[1]
    Wp = xpad_ref.shape[2]
    Cp = xpad_ref.shape[3]
    W = Wp - 2

    # Assemble the (TH+2)-row ReLU'd window once (ReLU + optional bf16 cast
    # happen a single time, not per tap).
    win_ref[0:TH] = jnp.maximum(xpad_ref[0], 0.0).astype(win_ref.dtype)
    win_ref[TH:TH + 2] = jnp.maximum(halo_ref[0, 0], 0.0).astype(win_ref.dtype)
    win = win_ref[...]

    acc_ref[...] = jnp.zeros_like(acc_ref)

    # 3x3 conv as 9 MXU matmuls.  dx (W shift, crosses the (8,128) tiling) is
    # hoisted -> 3 relayout slices; dy (H shift) is a cheap row-offset slice of
    # the flattened column view.
    for dx in range(3):
        col = win[:, dx:dx + W, :].reshape((TH + 2) * W, Cp)
        for dy in range(3):
            patch = col[dy * W:dy * W + TH * W, :]
            acc_ref[...] += jnp.dot(patch, w3_ref[dy, dx],
                                    preferred_element_type=jnp.float32)

    y = acc_ref[...] + b3_ref[...]          # conv bias: one broadcast add
    y1_ref[...] = y
    # Per-tile BN1 partials (f32); folded into mean/var outside the kernel.
    st_ref[0, 0:1, :] = jnp.sum(y, axis=0, keepdims=True)
    st_ref[0, 1:2, :] = jnp.sum(y * y, axis=0, keepdims=True)


# ----------------------------------------------------------------------------
# pass 2: BN1 affine -> ReLU -> Conv1x1(+bias)  + per-tile BN2 partial stats
# ----------------------------------------------------------------------------
def _bn_relu_conv1_kernel(y1_ref, sc1_ref, sh1_ref, w1_ref, b1_ref,
                          z_ref, st_ref):
    h = jnp.maximum(y1_ref[...] * sc1_ref[...] + sh1_ref[...], 0.0)
    z = jnp.dot(h.astype(w1_ref.dtype), w1_ref[...],
                preferred_element_type=jnp.float32) + b1_ref[...]
    z_ref[...] = z
    st_ref[0, 0:1, :] = jnp.sum(z, axis=0, keepdims=True)
    st_ref[0, 1:2, :] = jnp.sum(z * z, axis=0, keepdims=True)


# ----------------------------------------------------------------------------
# pass 3: BN2 affine + residual add
# ----------------------------------------------------------------------------
def _bn_residual_kernel(x_ref, z_ref, sc2_ref, sh2_ref, out_ref):
    out_ref[...] = x_ref[...] + z_ref[...] * sc2_ref[...] + sh2_ref[...]


def resblock_pallas(x_nchw, params):
    """ResBlock forward.  x_nchw: (N, C, H, W) f32.  Returns (N, C, H, W)."""
    x = jnp.transpose(x_nchw, (0, 2, 3, 1)).astype(jnp.float32)      # NHWC
    # TODO(synk): keep activations NHWC (lane-dense) end-to-end in the full
    # model so these wrapper transposes / channel pads disappear.
    N, H, W, C = x.shape
    Cp = _round_up(C, LANES)
    cpad = Cp - C
    M = N * H * W
    assert M % 8 == 0, "N*H*W must be a multiple of 8"

    # Row tiling for the 3x3 pass (halve the cap on v7x if tiles get large).
    TH = _largest_divisor_leq(H, max(8, min(H // 2, 16)))
    nH = H // TH
    assert H % TH == 0 and (TH * W) % 8 == 0
    # Row tiling for the 1x1 / elementwise passes.
    TM = _largest_divisor_leq(M, max(8, min(M // 2, 1024)))
    nM = M // TM

    # ---- glue: lane-dense channel pad + spatial zero pad for the 3x3 halo --
    xc = jnp.pad(x, ((0, 0), (0, 0), (0, 0), (0, cpad)))             # (N,H,W,Cp)
    xpad = jnp.pad(xc, ((0, 0), (1, 1), (1, 1), (0, 0)))             # (N,H+2,W+2,Cp)
    # The two halo rows below each TH-row body tile (only 2/TH extra traffic).
    xhalo = jnp.stack(
        [xpad[:, (i + 1) * TH:(i + 1) * TH + 2] for i in range(nH)],
        axis=1)                                                      # (N,nH,2,W+2,Cp)

    # ---- parameters -> lane-dense kernel layouts ---------------------------
    def pad_c(v):
        return jnp.pad(v.astype(jnp.float32), (0, cpad))

    w3 = jnp.transpose(params["w3"], (2, 3, 1, 0)).astype(jnp.float32)
    w3 = jnp.pad(w3, ((0, 0), (0, 0), (0, cpad), (0, cpad))).astype(MXU_DTYPE)
    w1 = jnp.transpose(params["w1"][:, :, 0, 0], (1, 0)).astype(jnp.float32)
    w1 = jnp.pad(w1, ((0, cpad), (0, cpad))).astype(MXU_DTYPE)
    b3 = pad_c(params["b3"]).reshape(1, Cp)
    b1 = pad_c(params["b1"]).reshape(1, Cp)
    g1, be1 = pad_c(params["g1"]), pad_c(params["be1"])
    g2, be2 = pad_c(params["g2"]), pad_c(params["be2"])

    # ======================= pass 1: ReLU -> Conv3x3 ========================
    def xpad_idx(n, i):
        return (n, i, 0, 0)

    def halo_idx(n, i):
        return (n, i, 0, 0, 0)

    def y1_idx(n, i):
        return (n * nH + i, 0)

    def st1_idx(n, i):
        return (n * nH + i, 0, 0)

    y1, st1 = pl.pallas_call(
        _conv3_stats_kernel,
        grid=(N, nH),
        in_specs=[
            pl.BlockSpec((1, TH, W + 2, Cp), xpad_idx),
            pl.BlockSpec((1, 1, 2, W + 2, Cp), halo_idx),
            pl.BlockSpec((3, 3, Cp, Cp), lambda n, i: (0, 0, 0, 0)),
            pl.BlockSpec((1, Cp), lambda n, i: (0, 0)),
        ],
        out_specs=[
            pl.BlockSpec((TH * W, Cp), y1_idx),
            pl.BlockSpec((1, 2, Cp), st1_idx),
        ],
        out_shape=[
            jax.ShapeDtypeStruct((M, Cp), jnp.float32),
            jax.ShapeDtypeStruct((N * nH, 2, Cp), jnp.float32),
        ],
        scratch_shapes=[
            pltpu.VMEM((TH + 2, W + 2, Cp), MXU_DTYPE),
            pltpu.VMEM((TH * W, Cp), jnp.float32),
        ],
        compiler_params=pltpu.CompilerParams(
            dimension_semantics=("parallel", "parallel"),
            vmem_limit_bytes=VMEM_LIMIT_BYTES),
        cost_estimate=pl.CostEstimate(
            flops=2 * M * 9 * Cp * Cp, transcendentals=0,
            bytes_accessed=int(xpad.size + xhalo.size + w3.size + 2 * M * Cp) * 4),
    )(xpad, xhalo, w3, b3)

    # ---- tiny (C,)-sized glue: fold partials into BN affine scale/shift ----
    def bn_affine(partials, gamma, beta):
        s = jnp.sum(partials[:, 0, :], axis=0)
        ss = jnp.sum(partials[:, 1, :], axis=0)
        mean = s / M
        var = jnp.maximum(ss / M - mean * mean, 0.0)     # f32 accumulators
        scale = gamma * jax.lax.rsqrt(var + BN_EPS)      # rsqrt -> EUP, no divide
        shift = beta - mean * scale
        return scale.reshape(1, Cp), shift.reshape(1, Cp)

    sc1, sh1 = bn_affine(st1, g1, be1)

    # =============== pass 2: BN1 affine -> ReLU -> Conv1x1 ==================
    z, st2 = pl.pallas_call(
        _bn_relu_conv1_kernel,
        grid=(nM,),
        in_specs=[
            pl.BlockSpec((TM, Cp), lambda m: (m, 0)),
            pl.BlockSpec((1, Cp), lambda m: (0, 0)),
            pl.BlockSpec((1, Cp), lambda m: (0, 0)),
            pl.BlockSpec((Cp, Cp), lambda m: (0, 0)),
            pl.BlockSpec((1, Cp), lambda m: (0, 0)),
        ],
        out_specs=[
            pl.BlockSpec((TM, Cp), lambda m: (m, 0)),
            pl.BlockSpec((1, 2, Cp), lambda m: (m, 0, 0)),
        ],
        out_shape=[
            jax.ShapeDtypeStruct((M, Cp), jnp.float32),
            jax.ShapeDtypeStruct((nM, 2, Cp), jnp.float32),
        ],
        compiler_params=pltpu.CompilerParams(
            dimension_semantics=("parallel",),
            vmem_limit_bytes=VMEM_LIMIT_BYTES),
        cost_estimate=pl.CostEstimate(
            flops=2 * M * Cp * Cp, transcendentals=0,
            bytes_accessed=int(2 * M * Cp + Cp * Cp) * 4),
    )(y1, sc1, sh1, w1, b1)

    sc2, sh2 = bn_affine(st2, g2, be2)

    # ================= pass 3: BN2 affine + residual add ====================
    xflat = xc.reshape(M, Cp)
    out = pl.pallas_call(
        _bn_residual_kernel,
        grid=(nM,),
        in_specs=[
            pl.BlockSpec((TM, Cp), lambda m: (m, 0)),
            pl.BlockSpec((TM, Cp), lambda m: (m, 0)),
            pl.BlockSpec((1, Cp), lambda m: (0, 0)),
            pl.BlockSpec((1, Cp), lambda m: (0, 0)),
        ],
        out_specs=pl.BlockSpec((TM, Cp), lambda m: (m, 0)),
        out_shape=jax.ShapeDtypeStruct((M, Cp), jnp.float32),
        compiler_params=pltpu.CompilerParams(
            dimension_semantics=("parallel",),
            vmem_limit_bytes=VMEM_LIMIT_BYTES),
        cost_estimate=pl.CostEstimate(
            flops=3 * M * Cp, transcendentals=0,
            bytes_accessed=int(3 * M * Cp) * 4),
    )(xflat, z, sc2, sh2)

    out = out.reshape(N, H, W, Cp)[:, :, :, :C]
    return jnp.transpose(out, (0, 3, 1, 2))                          # -> NCHW


def resblock_reference(x, p):
    """Plain-JAX reference (NCHW), mirrors the PyTorch forward in train mode."""
    def bn(y, g, b):
        m = y.mean(axis=(0, 2, 3), keepdims=True)
        v = ((y - m) ** 2).mean(axis=(0, 2, 3), keepdims=True)
        return (y - m) / jnp.sqrt(v + BN_EPS) * g[None, :, None, None] \
            + b[None, :, None, None]

    h = jnp.maximum(x, 0.0)
    y = jax.lax.conv_general_dilated(
        h, p["w3"], (1, 1), "SAME",
        dimension_numbers=("NCHW", "OIHW", "NCHW")) + p["b3"][None, :, None, None]
    y = bn(y, p["g1"], p["be1"])
    y = jnp.maximum(y, 0.0)
    y = jax.lax.conv_general_dilated(
        y, p["w1"], (1, 1), "SAME",
        dimension_numbers=("NCHW", "OIHW", "NCHW")) + p["b1"][None, :, None, None]
    y = bn(y, p["g2"], p["be2"])
    return x + y


if __name__ == "__main__":
    key = jax.random.PRNGKey(0)
    dim = 4
    ks = jax.random.split(key, 9)
    params = {
        "w3": jax.random.normal(ks[0], (dim, dim, 3, 3), jnp.float32) * 0.2,
        "b3": jax.random.normal(ks[1], (dim,), jnp.float32) * 0.1,
        "g1": 1.0 + 0.1 * jax.random.normal(ks[2], (dim,), jnp.float32),
        "be1": 0.1 * jax.random.normal(ks[3], (dim,), jnp.float32),
        "w1": jax.random.normal(ks[4], (dim, dim, 1, 1), jnp.float32) * 0.2,
        "b1": jax.random.normal(ks[5], (dim,), jnp.float32) * 0.1,
        "g2": 1.0 + 0.1 * jax.random.normal(ks[6], (dim,), jnp.float32),
        "be2": 0.1 * jax.random.normal(ks[7], (dim,), jnp.float32),
    }
    x = jax.random.normal(ks[8], (2, dim, 16, 16), jnp.float32)      # NCHW

    fwd = jax.jit(resblock_pallas)
    out = jax.block_until_ready(fwd(x, params))
    ref = resblock_reference(x, params)

    assert out.shape == x.shape
    err = jnp.max(jnp.abs(out - ref))
    assert jnp.allclose(out, ref, atol=2e-4, rtol=2e-4), f"max err {err}"
    print("KERNEL_OK")
</pallas_src>

<mosaic_0001>
module attributes {stable_mosaic.version = 11 : i64} {
  func.func @_conv3_stats_kernel(%arg0: i32, %arg1: i32, %arg2: memref<1x8x18x128xf32, #tpu.memory_space<vmem>>, %arg3: memref<1x1x2x18x128xf32, #tpu.memory_space<vmem>>, %arg4: memref<3x3x128x128xf32, #tpu.memory_space<vmem>>, %arg5: memref<1x128xf32, #tpu.memory_space<vmem>>, %arg6: memref<128x128xf32, #tpu.memory_space<vmem>>, %arg7: memref<1x2x128xf32, #tpu.memory_space<vmem>>, %arg8: memref<10x18x128xf32, #tpu.memory_space<vmem>>, %arg9: memref<128x128xf32, #tpu.memory_space<vmem>>) attributes {dimension_semantics = [#tpu.dimension_semantics<parallel>, #tpu.dimension_semantics<parallel>], iteration_bounds = array<i64: 2, 2>, scalar_prefetch = 0 : i64, scratch_operands = 2 : i64, tpu.core_type = #tpu.core_type<tc>, window_params = [{transform_indices = @transform_0, window_bounds = array<i64: 1, 8, 18, 128>}, {transform_indices = @transform_1, window_bounds = array<i64: 1, 1, 2, 18, 128>}, {pipeline_mode = #tpu.pipeline_mode<synchronous>, transform_indices = @transform_2, window_bounds = array<i64: 3, 3, 128, 128>}, {pipeline_mode = #tpu.pipeline_mode<synchronous>, transform_indices = @transform_3, window_bounds = array<i64: 1, 128>}, {transform_indices = @transform_4, window_bounds = array<i64: 128, 128>}, {transform_indices = @transform_5, window_bounds = array<i64: 1, 2, 128>}]} {
    %c0 = arith.constant 0 : index
    %c0_0 = arith.constant 0 : index
    %c0_1 = arith.constant 0 : index
    %c0_2 = arith.constant 0 : index
    %0 = vector.load %arg2[%c0, %c0_0, %c0_1, %c0_2] : memref<1x8x18x128xf32, #tpu.memory_space<vmem>>, vector<1x8x18x128xf32>
    %1 = vector.shape_cast %0 : vector<1x8x18x128xf32> to vector<8x18x128xf32>
    %cst = arith.constant 0.000000e+00 : f32
    %2 = vector.broadcast %cst : f32 to vector<8x18x128xf32>
    %3 = arith.maximumf %1, %2 : vector<8x18x128xf32>
    %c0_3 = arith.constant 0 : index
    %c0_4 = arith.constant 0 : index
    %c0_5 = arith.constant 0 : index
    %4 = vector.load %arg8[%c0_3, %c0_4, %c0_5] : memref<10x18x128xf32, #tpu.memory_space<vmem>>, vector<8x18x128xf32>
    tpu.vector_store %arg8[%c0_3, %c0_4, %c0_5], %3 {strides = array<i32>} : memref<10x18x128xf32, #tpu.memory_space<vmem>>, vector<8x18x128xf32>,
    %c0_6 = arith.constant 0 : index
    %c0_7 = arith.constant 0 : index
    %c0_8 = arith.constant 0 : index
    %c0_9 = arith.constant 0 : index
    %c0_10 = arith.constant 0 : index
    %5 = vector.load %arg3[%c0_6, %c0_7, %c0_8, %c0_9, %c0_10] : memref<1x1x2x18x128xf32, #tpu.memory_space<vmem>>, vector<1x1x2x18x128xf32>
    %6 = vector.shape_cast %5 : vector<1x1x2x18x128xf32> to vector<2x18x128xf32>
    %cst_11 = arith.constant 0.000000e+00 : f32
    %7 = vector.broadcast %cst_11 : f32 to vector<2x18x128xf32>
    %8 = arith.maximumf %6, %7 : vector<2x18x128xf32>
    %c8 = arith.constant 8 : index
    %c0_12 = arith.constant 0 : index
    %c0_13 = arith.constant 0 : index
    %9 = vector.load %arg8[%c8, %c0_12, %c0_13] : memref<10x18x128xf32, #tpu.memory_space<vmem>>, vector<2x18x128xf32>
    tpu.vector_store %arg8[%c8, %c0_12, %c0_13], %8 {strides = array<i32>} : memref<10x18x128xf32, #tpu.memory_space<vmem>>, vector<2x18x128xf32>,
    %c0_14 = arith.constant 0 : index
    %c0_15 = arith.constant 0 : index
    %c0_16 = arith.constant 0 : index
    %10 = vector.load %arg8[%c0_14, %c0_15, %c0_16] : memref<10x18x128xf32, #tpu.memory_space<vmem>>, vector<10x18x128xf32>
    %cst_17 = arith.constant 0.000000e+00 : f32
    %11 = vector.broadcast %cst_17 : f32 to vector<128x128xf32>
    %c0_18 = arith.constant 0 : index
    %c0_19 = arith.constant 0 : index
    %12 = vector.load %arg9[%c0_18, %c0_19] : memref<128x128xf32, #tpu.memory_space<vmem>>, vector<128x128xf32>
    tpu.vector_store %arg9[%c0_18, %c0_19], %11 {strides = array<i32>} : memref<128x128xf32, #tpu.memory_space<vmem>>, vector<128x128xf32>,
    %13 = vector.extract_strided_slice %10 {offsets = [0, 0, 0], sizes = [10, 16, 128], strides = [1, 1, 1]} : vector<10x18x128xf32> to vector<10x16x128xf32>
    %14 = vector.shape_cast %13 : vector<10x16x128xf32> to vector<160x128xf32>
    %15 = vector.extract_strided_slice %14 {offsets = [0, 0], sizes = [128, 128], strides = [1, 1]} : vector<160x128xf32> to vector<128x128xf32>
    %c0_20 = arith.constant 0 : index
    %c0_21 = arith.constant 0 : index
    %16 = vector.load %arg9[%c0_20, %c0_21] : memref<128x128xf32, #tpu.memory_space<vmem>>, vector<128x128xf32>
    %c0_22 = arith.constant 0 : index
    %c0_23 = arith.constant 0 : index
    %c0_24 = arith.constant 0 : index
    %c0_25 = arith.constant 0 : index
    %17 = vector.load %arg4[%c0_22, %c0_23, %c0_24, %c0_25] : memref<3x3x128x128xf32, #tpu.memory_space<vmem>>, vector<1x1x128x128xf32>
    %18 = vector.shape_cast %17 : vector<1x1x128x128xf32> to vector<128x128xf32>
    %cst_26 = arith.constant dense<0.000000e+00> : vector<128x128xf32>
    %19 = tpu.matmul %15, %18, %cst_26 {dimension_numbers = #tpu.dot_dimension_numbers<[1], [0], [0], [1], [0, 0, 1, 1], [], []>} : vector<128x128xf32>, vector<128x128xf32>, vector<128x128xf32> -> vector<128x128xf32>
    %20 = arith.addf %16, %19 : vector<128x128xf32>
    %c0_27 = arith.constant 0 : index
    %c0_28 = arith.constant 0 : index
    %21 = vector.load %arg9[%c0_27, %c0_28] : memref<128x128xf32, #tpu.memory_space<vmem>>, vector<128x128xf32>
    tpu.vector_store %arg9[%c0_27, %c0_28], %20 {strides = array<i32>} : memref<128x128xf32, #tpu.memory_space<vmem>>, vector<128x128xf32>,
    %22 = vector.extract_strided_slice %14 {offsets = [16, 0], sizes = [128, 128], strides = [1, 1]} : vector<160x128xf32> to vector<128x128xf32>
    %c0_29 = arith.constant 0 : index
    %c0_30 = arith.constant 0 : index
    %23 = vector.load %arg9[%c0_29, %c0_30] : memref<128x128xf32, #tpu.memory_space<vmem>>, vector<128x128xf32>
    %c1 = arith.constant 1 : index
    %c0_31 = arith.constant 0 : index
    %c0_32 = arith.constant 0 : index
    %c0_33 = arith.constant 0 : index
    %24 = vector.load %arg4[%c1, %c0_31, %c0_32, %c0_33] : memref<3x3x128x128xf32, #tpu.memory_space<vmem>>, vector<1x1x128x128xf32>
    %25 = vector.shape_cast %24 : vector<1x1x128x128xf32> to vector<128x128xf32>
    %cst_34 = arith.constant dense<0.000000e+00> : vector<128x128xf32>
    %26 = tpu.matmul %22, %25, %cst_34 {dimension_numbers = #tpu.dot_dimension_numbers<[1], [0], [0], [1], [0, 0, 1, 1], [], []>} : vector<128x128xf32>, vector<128x128xf32>, vector<128x128xf32> -> vector<128x128xf32>
    %27 = arith.addf %23, %26 : vector<128x128xf32>
    %c0_35 = arith.constant 0 : index
    %c0_36 = arith.constant 0 : index
    %28 = vector.load %arg9[%c0_35, %c0_36] : memref<128x128xf32, #tpu.memory_space<vmem>>, vector<128x128xf32>
    tpu.vector_store %arg9[%c0_35, %c0_36], %27 {strides = array<i32>} : memref<128x128xf32, #tpu.memory_space<vmem>>, vector<128x128xf32>,
    %29 = vector.extract_strided_slice %14 {offsets = [32, 0], sizes = [128, 128], strides = [1, 1]} : vector<160x128xf32> to vector<128x128xf32>
    %c0_37 = arith.constant 0 : index
    %c0_38 = arith.constant 0 : index
    %30 = vector.load %arg9[%c0_37, %c0_38] : memref<128x128xf32, #tpu.memory_space<vmem>>, vector<128x128xf32>
    %c2 = arith.constant 2 : index
    %c0_39 = arith.constant 0 : index
    %c0_40 = arith.constant 0 : index
    %c0_41 = arith.constant 0 : index
    %31 = vector.load %arg4[%c2, %c0_39, %c0_40, %c0_41] : memref<3x3x128x128xf32, #tpu.memory_space<vmem>>, vector<1x1x128x128xf32>
    %32 = vector.shape_cast %31 : vector<1x1x128x128xf32> to vector<128x128xf32>
    %cst_42 = arith.constant dense<0.000000e+00> : vector<128x128xf32>
    %33 = tpu.matmul %29, %32, %cst_42 {dimension_numbers = #tpu.dot_dimension_numbers<[1], [0], [0], [1], [0, 0, 1, 1], [], []>} : vector<128x128xf32>, vector<128x128xf32>, vector<128x128xf32> -> vector<128x128xf32>
    %34 = arith.addf %30, %33 : vector<128x128xf32>
    %c0_43 = arith.constant 0 : index
    %c0_44 = arith.constant 0 : index
    %35 = vector.load %arg9[%c0_43, %c0_44] : memref<128x128xf32, #tpu.memory_space<vmem>>, vector<128x128xf32>
    tpu.vector_store %arg9[%c0_43, %c0_44], %34 {strides = array<i32>} : memref<128x128xf32, #tpu.memory_space<vmem>>, vector<128x128xf32>,
    %36 = vector.extract_strided_slice %10 {offsets = [0, 1, 0], sizes = [10, 16, 128], strides = [1, 1, 1]} : vector<10x18x128xf32> to vector<10x16x128xf32>
    %37 = vector.shape_cast %36 : vector<10x16x128xf32> to vector<160x128xf32>
    %38 = vector.extract_strided_slice %37 {offsets = [0, 0], sizes = [128, 128], strides = [1, 1]} : vector<160x128xf32> to vector<128x128xf32>
    %c0_45 = arith.constant 0 : index
    %c0_46 = arith.constant 0 : index
    %39 = vector.load %arg9[%c0_45, %c0_46] : memref<128x128xf32, #tpu.memory_space<vmem>>, vector<128x128xf32>
    %c0_47 = arith.constant 0 : index
    %c1_48 = arith.constant 1 : index
    %c0_49 = arith.constant 0 : index
    %c0_50 = arith.constant 0 : index
    %40 = vector.load %arg4[%c0_47, %c1_48, %c0_49, %c0_50] : memref<3x3x128x128xf32, #tpu.memory_space<vmem>>, vector<1x1x128x128xf32>
    %41 = vector.shape_cast %40 : vector<1x1x128x128xf32> to vector<128x128xf32>
    %cst_51 = arith.constant dense<0.000000e+00> : vector<128x128xf32>
    %42 = tpu.matmul %38, %41, %cst_51 {dimension_numbers = #tpu.dot_dimension_numbers<[1], [0], [0], [1], [0, 0, 1, 1], [], []>} : vector<128x128xf32>, vector<128x128xf32>, vector<128x128xf32> -> vector<128x128xf32>
    %43 = arith.addf %39, %42 : vector<128x128xf32>
    %c0_52 = arith.constant 0 : index
    %c0_53 = arith.constant 0 : index
    %44 = vector.load %arg9[%c0_52, %c0_53] : memref<128x128xf32, #tpu.memory_space<vmem>>, vector<128x128xf32>
    tpu.vector_store %arg9[%c0_52, %c0_53], %43 {strides = array<i32>} : memref<128x128xf32, #tpu.memory_space<vmem>>, vector<128x128xf32>,
    %45 = vector.extract_strided_slice %37 {offsets = [16, 0], sizes = [128, 128], strides = [1, 1]} : vector<160x128xf32> to vector<128x128xf32>
    %c0_54 = arith.constant 0 : index
    %c0_55 = arith.constant 0 : index
    %46 = vector.load %arg9[%c0_54, %c0_55] : memref<128x128xf32, #tpu.memory_space<vmem>>, vector<128x128xf32>
    %c1_56 = arith.constant 1 : index
    %c1_57 = arith.constant 1 : index
    %c0_58 = arith.constant 0 : index
    %c0_59 = arith.constant 0 : index
    %47 = vector.load %arg4[%c1_56, %c1_57, %c0_58, %c0_59] : memref<3x3x128x128xf32, #tpu.memory_space<vmem>>, vector<1x1x128x128xf32>
    %48 = vector.shape_cast %47 : vector<1x1x128x128xf32> to vector<128x128xf32>
    %cst_60 = arith.constant dense<0.000000e+00> : vector<128x128xf32>
    %49 = tpu.matmul %45, %48, %cst_60 {dimension_numbers = #tpu.dot_dimension_numbers<[1], [0], [0], [1], [0, 0, 1, 1], [], []>} : vector<128x128xf32>, vector<128x128xf32>, vector<128x128xf32> -> vector<128x128xf32>
    %50 = arith.addf %46, %49 : vector<128x128xf32>
    %c0_61 = arith.constant 0 : index
    %c0_62 = arith.constant 0 : index
    %51 = vector.load %arg9[%c0_61, %c0_62] : memref<128x128xf32, #tpu.memory_space<vmem>>, vector<128x128xf32>
    tpu.vector_store %arg9[%c0_61, %c0_62], %50 {strides = array<i32>} : memref<128x128xf32, #tpu.memory_space<vmem>>, vector<128x128xf32>,
    %52 = vector.extract_strided_slice %37 {offsets = [32, 0], sizes = [128, 128], strides = [1, 1]} : vector<160x128xf32> to vector<128x128xf32>
    %c0_63 = arith.constant 0 : index
    %c0_64 = arith.constant 0 : index
    %53 = vector.load %arg9[%c0_63, %c0_64] : memref<128x128xf32, #tpu.memory_space<vmem>>, vector<128x128xf32>
    %c2_65 = arith.constant 2 : index
    %c1_66 = arith.constant 1 : index
    %c0_67 = arith.constant 0 : index
    %c0_68 = arith.constant 0 : index
    %54 = vector.load %arg4[%c2_65, %c1_66, %c0_67, %c0_68] : memref<3x3x128x128xf32, #tpu.memory_space<vmem>>, vector<1x1x128x128xf32>
    %55 = vector.shape_cast %54 : vector<1x1x128x128xf32> to vector<128x128xf32>
    %cst_69 = arith.constant dense<0.000000e+00> : vector<128x128xf32>
    %56 = tpu.matmul %52, %55, %cst_69 {dimension_numbers = #tpu.dot_dimension_numbers<[1], [0], [0], [1], [0, 0, 1, 1], [], []>} : vector<128x128xf32>, vector<128x128xf32>, vector<128x128xf32> -> vector<128x128xf32>
    %57 = arith.addf %53, %56 : vector<128x128xf32>
    %c0_70 = arith.constant 0 : index
    %c0_71 = arith.constant 0 : index
    %58 = vector.load %arg9[%c0_70, %c0_71] : memref<128x128xf32, #tpu.memory_space<vmem>>, vector<128x128xf32>
    tpu.vector_store %arg9[%c0_70, %c0_71], %57 {strides = array<i32>} : memref<128x128xf32, #tpu.memory_space<vmem>>, vector<128x128xf32>,
    %59 = vector.extract_strided_slice %10 {offsets = [0, 2, 0], sizes = [10, 16, 128], strides = [1, 1, 1]} : vector<10x18x128xf32> to vector<10x16x128xf32>
    %60 = vector.shape_cast %59 : vector<10x16x128xf32> to vector<160x128xf32>
    %61 = vector.extract_strided_slice %60 {offsets = [0, 0], sizes = [128, 128], strides = [1, 1]} : vector<160x128xf32> to vector<128x128xf32>
    %c0_72 = arith.constant 0 : index
    %c0_73 = arith.constant 0 : index
    %62 = vector.load %arg9[%c0_72, %c0_73] : memref<128x128xf32, #tpu.memory_space<vmem>>, vector<128x128xf32>
    %c0_74 = arith.constant 0 : index
    %c2_75 = arith.constant 2 : index
    %c0_76 = arith.constant 0 : index
    %c0_77 = arith.constant 0 : index
    %63 = vector.load %arg4[%c0_74, %c2_75, %c0_76, %c0_77] : memref<3x3x128x128xf32, #tpu.memory_space<vmem>>, vector<1x1x128x128xf32>
    %64 = vector.shape_cast %63 : vector<1x1x128x128xf32> to vector<128x128xf32>
    %cst_78 = arith.constant dense<0.000000e+00> : vector<128x128xf32>
    %65 = tpu.matmul %61, %64, %cst_78 {dimension_numbers = #tpu.dot_dimension_numbers<[1], [0], [0], [1], [0, 0, 1, 1], [], []>} : vector<128x128xf32>, vector<128x128xf32>, vector<128x128xf32> -> vector<128x128xf32>
    %66 = arith.addf %62, %65 : vector<128x128xf32>
    %c0_79 = arith.constant 0 : index
    %c0_80 = arith.constant 0 : index
    %67 = vector.load %arg9[%c0_79, %c0_80] : memref<128x128xf32, #tpu.memory_space<vmem>>, vector<128x128xf32>
    tpu.vector_store %arg9[%c0_79, %c0_80], %66 {strides = array<i32>} : memref<128x128xf32, #tpu.memory_space<vmem>>, vector<128x128xf32>,
    %68 = vector.extract_strided_slice %60 {offsets = [16, 0], sizes = [128, 128], strides = [1, 1]} : vector<160x128xf32> to vector<128x128xf32>
    %c0_81 = arith.constant 0 : index
    %c0_82 = arith.constant 0 : index
    %69 = vector.load %arg9[%c0_81, %c0_82] : memref<128x128xf32, #tpu.memory_space<vmem>>, vector<128x128xf32>
    %c1_83 = arith.constant 1 : index
    %c2_84 = arith.constant 2 : index
    %c0_85 = arith.constant 0 : index
    %c0_86 = arith.constant 0 : index
    %70 = vector.load %arg4[%c1_83, %c2_84, %c0_85, %c0_86] : memref<3x3x128x128xf32, #tpu.memory_space<vmem>>, vector<1x1x128x128xf32>
    %71 = vector.shape_cast %70 : vector<1x1x128x128xf32> to vector<128x128xf32>
    %cst_87 = arith.constant dense<0.000000e+00> : vector<128x128xf32>
    %72 = tpu.matmul %68, %71, %cst_87 {dimension_numbers = #tpu.dot_dimension_numbers<[1], [0], [0], [1], [0, 0, 1, 1], [], []>} : vector<128x128xf32>, vector<128x128xf32>, vector<128x128xf32> -> vector<128x128xf32>
    %73 = arith.addf %69, %72 : vector<128x128xf32>
    %c0_88 = arith.constant 0 : index
    %c0_89 = arith.constant 0 : index
    %74 = vector.load %arg9[%c0_88, %c0_89] : memref<128x128xf32, #tpu.memory_space<vmem>>, vector<128x128xf32>
    tpu.vector_store %arg9[%c0_88, %c0_89], %73 {strides = array<i32>} : memref<128x128xf32, #tpu.memory_space<vmem>>, vector<128x128xf32>,
    %75 = vector.extract_strided_slice %60 {offsets = [32, 0], sizes = [128, 128], strides = [1, 1]} : vector<160x128xf32> to vector<128x128xf32>
    %c0_90 = arith.constant 0 : index
    %c0_91 = arith.constant 0 : index
    %76 = vector.load %arg9[%c0_90, %c0_91] : memref<128x128xf32, #tpu.memory_space<vmem>>, vector<128x128xf32>
    %c2_92 = arith.constant 2 : index
    %c2_93 = arith.constant 2 : index
    %c0_94 = arith.constant 0 : index
    %c0_95 = arith.constant 0 : index
    %77 = vector.load %arg4[%c2_92, %c2_93, %c0_94, %c0_95] : memref<3x3x128x128xf32, #tpu.memory_space<vmem>>, vector<1x1x128x128xf32>
    %78 = vector.shape_cast %77 : vector<1x1x128x128xf32> to vector<128x128xf32>
    %cst_96 = arith.constant dense<0.000000e+00> : vector<128x128xf32>
    %79 = tpu.matmul %75, %78, %cst_96 {dimension_numbers = #tpu.dot_dimension_numbers<[1], [0], [0], [1], [0, 0, 1, 1], [], []>} : vector<128x128xf32>, vector<128x128xf32>, vector<128x128xf32> -> vector<128x128xf32>
    %80 = arith.addf %76, %79 : vector<128x128xf32>
    %c0_97 = arith.constant 0 : index
    %c0_98 = arith.constant 0 : index
    %81 = vector.load %arg9[%c0_97, %c0_98] : memref<128x128xf32, #tpu.memory_space<vmem>>, vector<128x128xf32>
    tpu.vector_store %arg9[%c0_97, %c0_98], %80 {strides = array<i32>} : memref<128x128xf32, #tpu.memory_space<vmem>>, vector<128x128xf32>,
    %c0_99 = arith.constant 0 : index
    %c0_100 = arith.constant 0 : index
    %82 = vector.load %arg9[%c0_99, %c0_100] : memref<128x128xf32, #tpu.memory_space<vmem>>, vector<128x128xf32>
    %c0_101 = arith.constant 0 : index
    %c0_102 = arith.constant 0 : index
    %83 = vector.load %arg5[%c0_101, %c0_102] : memref<1x128xf32, #tpu.memory_space<vmem>>, vector<1x128xf32>
    %84 = vector.broadcast %83 : vector<1x128xf32> to vector<128x128xf32>
    %85 = arith.addf %82, %84 : vector<128x128xf32>
    %c0_103 = arith.constant 0 : index
    %c0_104 = arith.constant 0 : index
    %86 = vector.load %arg6[%c0_103, %c0_104] : memref<128x128xf32, #tpu.memory_space<vmem>>, vector<128x128xf32>
    tpu.vector_store %arg6[%c0_103, %c0_104], %85 {strides = array<i32>} : memref<128x128xf32, #tpu.memory_space<vmem>>, vector<128x128xf32>,
    %cst_105 = arith.constant dense<0.000000e+00> : vector<128xf32>
    %87 = vector.multi_reduction <add>, %85, %cst_105 [0] : vector<128x128xf32> to vector<128xf32>
    %88 = vector.shape_cast %87 : vector<128xf32> to vector<1x128xf32>
    %c0_106 = arith.constant 0 : index
    %c0_107 = arith.constant 0 : index
    %c0_108 = arith.constant 0 : index
    %89 = vector.load %arg7[%c0_106, %c0_107, %c0_108] : memref<1x2x128xf32, #tpu.memory_space<vmem>>, vector<1x1x128xf32>
    %90 = vector.shape_cast %89 : vector<1x1x128xf32> to vector<1x128xf32>
    %91 = vector.shape_cast %88 : vector<1x128xf32> to vector<1x1x128xf32>
    tpu.vector_store %arg7[%c0_106, %c0_107, %c0_108], %91 {strides = array<i32>} : memref<1x2x128xf32, #tpu.memory_space<vmem>>, vector<1x1x128xf32>,
    %92 = arith.mulf %85, %85 : vector<128x128xf32>
    %cst_109 = arith.constant dense<0.000000e+00> : vector<128xf32>
    %93 = vector.multi_reduction <add>, %92, %cst_109 [0] : vector<128x128xf32> to vector<128xf32>
    %94 = vector.shape_cast %93 : vector<128xf32> to vector<1x128xf32>
    %c0_110 = arith.constant 0 : index
    %c1_111 = arith.constant 1 : index
    %c0_112 = arith.constant 0 : index
    %95 = vector.load %arg7[%c0_110, %c1_111, %c0_112] : memref<1x2x128xf32, #tpu.memory_space<vmem>>, vector<1x1x128xf32>
    %96 = vector.shape_cast %95 : vector<1x1x128xf32> to vector<1x128xf32>
    %97 = vector.shape_cast %94 : vector<1x128xf32> to vector<1x1x128xf32>
    tpu.vector_store %arg7[%c0_110, %c1_111, %c0_112], %97 {strides = array<i32>} : memref<1x2x128xf32, #tpu.memory_space<vmem>>, vector<1x1x128xf32>,
    return
  }
  func.func @transform_0(%arg0: i32, %arg1: i32) -> (i32, i32, i32, i32) {
    %c0_i32 = arith.constant 0 : i32
    %c0_i32_0 = arith.constant 0 : i32
    %c0_i32_1 = arith.constant 0 : i32
    return %arg0, %arg1, %c0_i32, %c0_i32_0 : i32, i32, i32, i32
  }
  func.func @transform_1(%arg0: i32, %arg1: i32) -> (i32, i32, i32, i32, i32) {
    %c0_i32 = arith.constant 0 : i32
    %c0_i32_0 = arith.constant 0 : i32
    %c0_i32_1 = arith.constant 0 : i32
    %c0_i32_2 = arith.constant 0 : i32
    return %arg0, %arg1, %c0_i32, %c0_i32_0, %c0_i32_1 : i32, i32, i32, i32, i32
  }
  func.func @transform_2(%arg0: i32, %arg1: i32) -> (i32, i32, i32, i32) {
    %c0_i32 = arith.constant 0 : i32
    %c0_i32_0 = arith.constant 0 : i32
    %c0_i32_1 = arith.constant 0 : i32
    %c0_i32_2 = arith.constant 0 : i32
    %c0_i32_3 = arith.constant 0 : i32
    return %c0_i32, %c0_i32_0, %c0_i32_1, %c0_i32_2 : i32, i32, i32, i32
  }
  func.func @transform_3(%arg0: i32, %arg1: i32) -> (i32, i32) {
    %c0_i32 = arith.constant 0 : i32
    %c0_i32_0 = arith.constant 0 : i32
    %c0_i32_1 = arith.constant 0 : i32
    return %c0_i32, %c0_i32_0 : i32, i32
  }
  func.func @transform_4(%arg0: i32, %arg1: i32) -> (i32, i32) {
    %c2_i32 = arith.constant 2 : i32
    %0 = arith.muli %arg0, %c2_i32 : i32
    %1 = arith.addi %0, %arg1 : i32
    %c0_i32 = arith.constant 0 : i32
    %c0_i32_0 = arith.constant 0 : i32
    return %1, %c0_i32 : i32, i32
  }
  func.func @transform_5(%arg0: i32, %arg1: i32) -> (i32, i32, i32) {
    %c2_i32 = arith.constant 2 : i32
    %0 = arith.muli %arg0, %c2_i32 : i32
    %1 = arith.addi %0, %arg1 : i32
    %c0_i32 = arith.constant 0 : i32
    %c0_i32_0 = arith.constant 0 : i32
    %c0_i32_1 = arith.constant 0 : i32
    return %1, %c0_i32, %c0_i32_0 : i32, i32, i32
  }
}

module attributes {stable_mosaic.version = 11 : i64} {
  func.func @_bn_relu_conv1_kernel(%arg0: i32, %arg1: memref<256x128xf32, #tpu.memory_space<vmem>>, %arg2: memref<1x128xf32, #tpu.memory_space<vmem>>, %arg3: memref<1x128xf32, #tpu.memory_space<vmem>>, %arg4: memref<128x128xf32, #tpu.memory_space<vmem>>, %arg5: memref<1x128xf32, #tpu.memory_space<vmem>>, %arg6: memref<256x128xf32, #tpu.memory_space<vmem>>, %arg7: memref<1x2x128xf32, #tpu.memory_space<vmem>>) attributes {dimension_semantics = [#tpu.dimension_semantics<parallel>], iteration_bounds = array<i64: 2>, scalar_prefetch = 0 : i64, scratch_operands = 0 : i64, tpu.core_type = #tpu.core_type<tc>, window_params = [{transform_indices = @transform_0, window_bounds = array<i64: 256, 128>}, {pipeline_mode = #tpu.pipeline_mode<synchronous>, transform_indices = @transform_1, window_bounds = array<i64: 1, 128>}, {pipeline_mode = #tpu.pipeline_mode<synchronous>, transform_indices = @transform_2, window_bounds = array<i64: 1, 128>}, {pipeline_mode = #tpu.pipeline_mode<synchronous>, transform_indices = @transform_3, window_bounds = array<i64: 128, 128>}, {pipeline_mode = #tpu.pipeline_mode<synchronous>, transform_indices = @transform_4, window_bounds = array<i64: 1, 128>}, {transform_indices = @transform_5, window_bounds = array<i64: 256, 128>}, {transform_indices = @transform_6, window_bounds = array<i64: 1, 2, 128>}]} {
    %c0 = arith.constant 0 : index
    %c0_0 = arith.constant 0 : index
    %0 = vector.load %arg1[%c0, %c0_0] : memref<256x128xf32, #tpu.memory_space<vmem>>, vector<256x128xf32>
    %c0_1 = arith.constant 0 : index
    %c0_2 = arith.constant 0 : index
    %1 = vector.load %arg2[%c0_1, %c0_2] : memref<1x128xf32, #tpu.memory_space<vmem>>, vector<1x128xf32>
    %2 = vector.broadcast %1 : vector<1x128xf32> to vector<256x128xf32>
    %3 = arith.mulf %0, %2 : vector<256x128xf32>
    %c0_3 = arith.constant 0 : index
    %c0_4 = arith.constant 0 : index
    %4 = vector.load %arg3[%c0_3, %c0_4] : memref<1x128xf32, #tpu.memory_space<vmem>>, vector<1x128xf32>
    %5 = vector.broadcast %4 : vector<1x128xf32> to vector<256x128xf32>
    %6 = arith.addf %3, %5 : vector<256x128xf32>
    %cst = arith.constant 0.000000e+00 : f32
    %7 = vector.broadcast %cst : f32 to vector<256x128xf32>
    %8 = arith.maximumf %6, %7 : vector<256x128xf32>
    %c0_5 = arith.constant 0 : index
    %c0_6 = arith.constant 0 : index
    %9 = vector.load %arg4[%c0_5, %c0_6] : memref<128x128xf32, #tpu.memory_space<vmem>>, vector<128x128xf32>
    %cst_7 = arith.constant dense<0.000000e+00> : vector<256x128xf32>
    %10 = tpu.matmul %8, %9, %cst_7 {dimension_numbers = #tpu.dot_dimension_numbers<[1], [0], [0], [1], [0, 0, 1, 1], [], []>} : vector<256x128xf32>, vector<128x128xf32>, vector<256x128xf32> -> vector<256x128xf32>
    %c0_8 = arith.constant 0 : index
    %c0_9 = arith.constant 0 : index
    %11 = vector.load %arg5[%c0_8, %c0_9] : memref<1x128xf32, #tpu.memory_space<vmem>>, vector<1x128xf32>
    %12 = vector.broadcast %11 : vector<1x128xf32> to vector<256x128xf32>
    %13 = arith.addf %10, %12 : vector<256x128xf32>
    %c0_10 = arith.constant 0 : index
    %c0_11 = arith.constant 0 : index
    %14 = vector.load %arg6[%c0_10, %c0_11] : memref<256x128xf32, #tpu.memory_space<vmem>>, vector<256x128xf32>
    tpu.vector_store %arg6[%c0_10, %c0_11], %13 {strides = array<i32>} : memref<256x128xf32, #tpu.memory_space<vmem>>, vector<256x128xf32>,
    %cst_12 = arith.constant dense<0.000000e+00> : vector<128xf32>
    %15 = vector.multi_reduction <add>, %13, %cst_12 [0] : vector<256x128xf32> to vector<128xf32>
    %16 = vector.shape_cast %15 : vector<128xf32> to vector<1x128xf32>
    %c0_13 = arith.constant 0 : index
    %c0_14 = arith.constant 0 : index
    %c0_15 = arith.constant 0 : index
    %17 = vector.load %arg7[%c0_13, %c0_14, %c0_15] : memref<1x2x128xf32, #tpu.memory_space<vmem>>, vector<1x1x128xf32>
    %18 = vector.shape_cast %17 : vector<1x1x128xf32> to vector<1x128xf32>
    %19 = vector.shape_cast %16 : vector<1x128xf32> to vector<1x1x128xf32>
    tpu.vector_store %arg7[%c0_13, %c0_14, %c0_15], %19 {strides = array<i32>} : memref<1x2x128xf32, #tpu.memory_space<vmem>>, vector<1x1x128xf32>,
    %20 = arith.mulf %13, %13 : vector<256x128xf32>
    %cst_16 = arith.constant dense<0.000000e+00> : vector<128xf32>
    %21 = vector.multi_reduction <add>, %20, %cst_16 [0] : vector<256x128xf32> to vector<128xf32>
    %22 = vector.shape_cast %21 : vector<128xf32> to vector<1x128xf32>
    %c0_17 = arith.constant 0 : index
    %c1 = arith.constant 1 : index
    %c0_18 = arith.constant 0 : index
    %23 = vector.load %arg7[%c0_17, %c1, %c0_18] : memref<1x2x128xf32, #tpu.memory_space<vmem>>, vector<1x1x128xf32>
    %24 = vector.shape_cast %23 : vector<1x1x128xf32> to vector<1x128xf32>
    %25 = vector.shape_cast %22 : vector<1x128xf32> to vector<1x1x128xf32>
    tpu.vector_store %arg7[%c0_17, %c1, %c0_18], %25 {strides = array<i32>} : memref<1x2x128xf32, #tpu.memory_space<vmem>>, vector<1x1x128xf32>,
    return
  }
  func.func @transform_0(%arg0: i32) -> (i32, i32) {
    %c0_i32 = arith.constant 0 : i32
    %c0_i32_0 = arith.constant 0 : i32
    return %arg0, %c0_i32 : i32, i32
  }
  func.func @transform_1(%arg0: i32) -> (i32, i32) {
    %c0_i32 = arith.constant 0 : i32
    %c0_i32_0 = arith.constant 0 : i32
    %c0_i32_1 = arith.constant 0 : i32
    return %c0_i32, %c0_i32_0 : i32, i32
  }
  func.func @transform_2(%arg0: i32) -> (i32, i32) {
    %c0_i32 = arith.constant 0 : i32
    %c0_i32_0 = arith.constant 0 : i32
    %c0_i32_1 = arith.constant 0 : i32
    return %c0_i32, %c0_i32_0 : i32, i32
  }
  func.func @transform_3(%arg0: i32) -> (i32, i32) {
    %c0_i32 = arith.constant 0 : i32
    %c0_i32_0 = arith.constant 0 : i32
    %c0_i32_1 = arith.constant 0 : i32
    return %c0_i32, %c0_i32_0 : i32, i32
  }
  func.func @transform_4(%arg0: i32) -> (i32, i32) {
    %c0_i32 = arith.constant 0 : i32
    %c0_i32_0 = arith.constant 0 : i32
    %c0_i32_1 = arith.constant 0 : i32
    return %c0_i32, %c0_i32_0 : i32, i32
  }
  func.func @transform_5(%arg0: i32) -> (i32, i32) {
    %c0_i32 = arith.constant 0 : i32
    %c0_i32_0 = arith.constant 0 : i32
    return %arg0, %c0_i32 : i32, i32
  }
  func.func @transform_6(%arg0: i32) -> (i32, i32, i32) {
    %c0_i32 = arith.constant 0 : i32
    %c0_i32_0 = arith.constant 0 : i32
    %c0_i32_1 = arith.constant 0 : i32
    return %arg0, %c0_i32, %c0_i32_0 : i32, i32, i32
  }
}

module attributes {stable_mosaic.version = 11 : i64} {
  func.func @_bn_residual_kernel(%arg0: i32, %arg1: memref<256x128xf32, #tpu.memory_space<vmem>>, %arg2: memref<256x128xf32, #tpu.memory_space<vmem>>, %arg3: memref<1x128xf32, #tpu.memory_space<vmem>>, %arg4: memref<1x128xf32, #tpu.memory_space<vmem>>, %arg5: memref<256x128xf32, #tpu.memory_space<vmem>>) attributes {dimension_semantics = [#tpu.dimension_semantics<parallel>], iteration_bounds = array<i64: 2>, scalar_prefetch = 0 : i64, scratch_operands = 0 : i64, tpu.core_type = #tpu.core_type<tc>, window_params = [{transform_indices = @transform_0, window_bounds = array<i64: 256, 128>}, {transform_indices = @transform_1, window_bounds = array<i64: 256, 128>}, {pipeline_mode = #tpu.pipeline_mode<synchronous>, transform_indices = @transform_2, window_bounds = array<i64: 1, 128>}, {pipeline_mode = #tpu.pipeline_mode<synchronous>, transform_indices = @transform_3, window_bounds = array<i64: 1, 128>}, {transform_indices = @transform_4, window_bounds = array<i64: 256, 128>}]} {
    %c0 = arith.constant 0 : index
    %c0_0 = arith.constant 0 : index
    %0 = vector.load %arg1[%c0, %c0_0] : memref<256x128xf32, #tpu.memory_space<vmem>>, vector<256x128xf32>
    %c0_1 = arith.constant 0 : index
    %c0_2 = arith.constant 0 : index
    %1 = vector.load %arg2[%c0_1, %c0_2] : memref<256x128xf32, #tpu.memory_space<vmem>>, vector<256x128xf32>
    %c0_3 = arith.constant 0 : index
    %c0_4 = arith.constant 0 : index
    %2 = vector.load %arg3[%c0_3, %c0_4] : memref<1x128xf32, #tpu.memory_space<vmem>>, vector<1x128xf32>
    %3 = vector.broadcast %2 : vector<1x128xf32> to vector<256x128xf32>
    %4 = arith.mulf %1, %3 : vector<256x128xf32>
    %5 = arith.addf %0, %4 : vector<256x128xf32>
    %c0_5 = arith.constant 0 : index
    %c0_6 = arith.constant 0 : index
    %6 = vector.load %arg4[%c0_5, %c0_6] : memref<1x128xf32, #tpu.memory_space<vmem>>, vector<1x128xf32>
    %7 = vector.broadcast %6 : vector<1x128xf32> to vector<256x128xf32>
    %8 = arith.addf %5, %7 : vector<256x128xf32>
    %c0_7 = arith.constant 0 : index
    %c0_8 = arith.constant 0 : index
    %9 = vector.load %arg5[%c0_7, %c0_8] : memref<256x128xf32, #tpu.memory_space<vmem>>, vector<256x128xf32>
    tpu.vector_store %arg5[%c0_7, %c0_8], %8 {strides = array<i32>} : memref<256x128xf32, #tpu.memory_space<vmem>>, vector<256x128xf32>,
    return
  }
  func.func @transform_0(%arg0: i32) -> (i32, i32) {
    %c0_i32 = arith.constant 0 : i32
    %c0_i32_0 = arith.constant 0 : i32
    return %arg0, %c0_i32 : i32, i32
  }
  func.func @transform_1(%arg0: i32) -> (i32, i32) {
    %c0_i32 = arith.constant 0 : i32
    %c0_i32_0 = arith.constant 0 : i32
    return %arg0, %c0_i32 : i32, i32
  }
  func.func @transform_2(%arg0: i32) -> (i32, i32) {
    %c0_i32 = arith.constant 0 : i32
    %c0_i32_0 = arith.constant 0 : i32
    %c0_i32_1 = arith.constant 0 : i32
    return %c0_i32, %c0_i32_0 : i32, i32
  }
  func.func @transform_3(%arg0: i32) -> (i32, i32) {
    %c0_i32 = arith.constant 0 : i32
    %c0_i32_0 = arith.constant 0 : i32
    %c0_i32_1 = arith.constant 0 : i32
    return %c0_i32, %c0_i32_0 : i32, i32
  }
  func.func @transform_4(%arg0: i32) -> (i32, i32) {
    %c0_i32 = arith.constant 0 : i32
    %c0_i32_0 = arith.constant 0 : i32
    return %arg0, %c0_i32 : i32, i32
  }
}

</mosaic_0001>

<llo_original>
// kernel: resblock_pallas.5
$region0: #{resblock_pallas.5}
  #allocation0 [shape = 'u32[]', space=smem, size = 0x4, offset = 0x4, fixed_abs, tag = 'smem constant byte address 0x4 - core index']
  #allocation1 [shape = 'u32[144,128]{1,0:T(1,128)}', space=vmem, size = 0x12000, scoped, tag = 'internal scratch']
  %s0 = inlined_call_operand.vmem [shape: f32[512,128], index: 0, kind: input, shape index: {}]
  %s1 = inlined_call_operand.vmem [shape: f32[512,128], index: 1, kind: input, shape index: {}]
  %s2 = inlined_call_operand.vmem [shape: f32[1,128], index: 2, kind: input, shape index: {}]
  %s3 = inlined_call_operand.vmem [shape: f32[1,128], index: 3, kind: input, shape index: {}]
  %s4 = inlined_call_operand.vmem [shape: f32[512,128], index: 4, kind: output, shape index: {}]
  %s5 = sld [smem:[#allocation0]]
  $region49: #{resblock_pallas.5} parent=0
    _
  %s7 = ssub.s32 1, %s5
  %s8 = scalar_select 0, %s7, %s5
  loop: start=0, step=1, limit=4
  $region2: #{resblock_pallas.5} parent=0 // loop_pre_header
    _
  $region3: #{resblock_pallas.5} parent=0 // loop_header
    %s10 = sphi 0, %s14
    %p11 = scmp.ge.s32.totalorder %s10, 4
    %s20 = sphi 0, %s22
    %s23 = sphi 0, %s20
    %s24 = sphi 0, %s23
    %s40 = sphi 0, %s24
    %s46 = sphi 0, %s48
    %s49 = sphi 0, %s46
    %s50 = sphi 0, %s49
    %s66 = sphi 0, %s50
    %s70 = sphi 0, %s70
    %s72 = sphi 0, %s70
    %s73 = sphi 0, %s72
    %s87 = sphi 0, %s73
    %s91 = sphi 0, %s91
    %s93 = sphi 0, %s91
    %s94 = sphi 0, %s93
    %s108 = sphi 0, %s94
    %s114 = sphi 0, %s116
    %s117 = sphi 0, %s114
    %s118 = sphi 0, %s117
    %s134 = sphi 0, %s118
  $region4: #{resblock_pallas.5} parent=0 // loop_header_branch
    %13 = sbr.rel (%p11) target = $region8
  $region5: #{resblock_pallas.5} parent=0 // loop_body
    %s15 = ssub.s32 %s10, 1
    %s16 = ssub.s32 %s10, 2
    %s17 = sadd.s32 %s10, 1
    %s18 = ssub.s32 %s10, %s17
    %p19 = scmp.eq.s32.totalorder %s18, 0
    %s21 = sadd.s32 %s20, 1
    %s22 = scalar_select %p19, %s20, %s21
    %p25 = pneg %p19
    %p26 = scmp.eq.s32.totalorder %s10, 1
    %p27 = por %p25, %p26
    %p28 = scmp.ne.s32.totalorder %s20, %s23
    %p29 = scmp.eq.s32.totalorder %s10, 0
    %p30 = por %p28, %p29
    %p31 = scmp.ne.s32.totalorder %s20, %s23
    %p32 = scmp.eq.s32.totalorder %s15, 1
    %p33 = por %p31, %p32
    %p34 = scmp.ne.s32.totalorder %s23, %s24
    %p35 = scmp.eq.s32.totalorder %s15, 0
    %p36 = por %p34, %p35
    %p37 = scmp.ne.s32.totalorder %s23, %s24
    %p38 = scmp.eq.s32.totalorder %s16, 1
    %p39 = por %p37, %p38
    %p41 = scmp.ne.s32.totalorder %s24, %s40
    %p42 = scmp.eq.s32.totalorder %s16, 0
    %p43 = por %p41, %p42
    %s44 = ssub.s32 %s10, %s17
    %p45 = scmp.eq.s32.totalorder %s44, 0
    %s47 = sadd.s32 %s46, 1
    %s48 = scalar_select %p45, %s46, %s47
    %p51 = pneg %p45
    %p52 = scmp.eq.s32.totalorder %s10, 1
    %p53 = por %p51, %p52
    %p54 = scmp.ne.s32.totalorder %s46, %s49
    %p55 = scmp.eq.s32.totalorder %s10, 0
    %p56 = por %p54, %p55
    %p57 = scmp.ne.s32.totalorder %s46, %s49
    %p58 = scmp.eq.s32.totalorder %s15, 1
    %p59 = por %p57, %p58
    %p60 = scmp.ne.s32.totalorder %s49, %s50
    %p61 = scmp.eq.s32.totalorder %s15, 0
    %p62 = por %p60, %p61
    %p63 = scmp.ne.s32.totalorder %s49, %s50
    %p64 = scmp.eq.s32.totalorder %s16, 1
    %p65 = por %p63, %p64
    %p67 = scmp.ne.s32.totalorder %s50, %s66
    %p68 = scmp.eq.s32.totalorder %s16, 0
    %p69 = por %p67, %p68
    %s71 = sadd.s32 %s70, 1
    %p74 = scmp.eq.s32.totalorder %s10, 1
    %p75 = scmp.ne.s32.totalorder %s70, %s72
    %p76 = scmp.eq.s32.totalorder %s10, 0
    %p77 = por %p75, %p76
    %p78 = scmp.ne.s32.totalorder %s70, %s72
    %p79 = scmp.eq.s32.totalorder %s15, 1
    %p80 = por %p78, %p79
    %p81 = scmp.ne.s32.totalorder %s72, %s73
    %p82 = scmp.eq.s32.totalorder %s15, 0
    %p83 = por %p81, %p82
    %p84 = scmp.ne.s32.totalorder %s72, %s73
    %p85 = scmp.eq.s32.totalorder %s16, 1
    %p86 = por %p84, %p85
    %p88 = scmp.ne.s32.totalorder %s73, %s87
    %p89 = scmp.eq.s32.totalorder %s16, 0
    %p90 = por %p88, %p89
    %s92 = sadd.s32 %s91, 1
    %p95 = scmp.eq.s32.totalorder %s10, 1
    %p96 = scmp.ne.s32.totalorder %s91, %s93
    %p97 = scmp.eq.s32.totalorder %s10, 0
    %p98 = por %p96, %p97
    %p99 = scmp.ne.s32.totalorder %s91, %s93
    %p100 = scmp.eq.s32.totalorder %s15, 1
    %p101 = por %p99, %p100
    %p102 = scmp.ne.s32.totalorder %s93, %s94
    %p103 = scmp.eq.s32.totalorder %s15, 0
    %p104 = por %p102, %p103
    %p105 = scmp.ne.s32.totalorder %s93, %s94
    %p106 = scmp.eq.s32.totalorder %s16, 1
    %p107 = por %p105, %p106
    %p109 = scmp.ne.s32.totalorder %s94, %s108
    %p110 = scmp.eq.s32.totalorder %s16, 0
    %p111 = por %p109, %p110
    %s112 = ssub.s32 %s10, %s17
    %p113 = scmp.eq.s32.totalorder %s112, 0
    %s115 = sadd.s32 %s114, 1
    %s116 = scalar_select %p113, %s114, %s115
    %p119 = pneg %p113
    %p120 = scmp.eq.s32.totalorder %s10, 1
    %p121 = por %p119, %p120
    %p122 = scmp.ne.s32.totalorder %s114, %s117
    %p123 = scmp.eq.s32.totalorder %s10, 0
    %p124 = por %p122, %p123
    %p125 = scmp.ne.s32.totalorder %s114, %s117
    %p126 = scmp.eq.s32.totalorder %s15, 1
    %p127 = por %p125, %p126
    %p128 = scmp.ne.s32.totalorder %s117, %s118
    %p129 = scmp.eq.s32.totalorder %s15, 0
    %p130 = por %p128, %p129
    %p131 = scmp.ne.s32.totalorder %s117, %s118
    %p132 = scmp.eq.s32.totalorder %s16, 1
    %p133 = por %p131, %p132
    %p135 = scmp.ne.s32.totalorder %s118, %s134
    %p136 = scmp.eq.s32.totalorder %s16, 0
    %p137 = por %p135, %p136
    %p138 = scmp.le.s32.totalorder 1, %s10
    %p139 = scmp.lt.s32.totalorder %s10, 3
    %p140 = pnand %p138, %p139
    %p141 = pneg %p140
    // Predicated region
    $region9: #{resblock_pallas.5} parent=5 // pred_check
      _
    $region10: #{resblock_pallas.5} parent=5 // pred_check_branch
      %143 = sbr.rel (%p140) target = $region12
    $region11: #{resblock_pallas.5} parent=5 // pred_region
      %s144 = ssub.s32 %s10, 1
      // Predicated region
      $region13: #{resblock_pallas.5} parent=11 // pred_check
        %p145 = pneg %p83
      $region14: #{resblock_pallas.5} parent=11 // pred_check_branch
        %147 = sbr.rel (%p145) target = $region16
      $region15: #{resblock_pallas.5} parent=11 // pred_region
        _
      $region16: #{resblock_pallas.5} parent=11 // pred_fallthru
        _
      // Predicated region
      $region17: #{resblock_pallas.5} parent=11 // pred_check
        %p148 = pneg %p104
      $region18: #{resblock_pallas.5} parent=11 // pred_check_branch
        %150 = sbr.rel (%p148) target = $region20
      $region19: #{resblock_pallas.5} parent=11 // pred_region
        _
      $region20: #{resblock_pallas.5} parent=11 // pred_fallthru
        _
    $region12: #{resblock_pallas.5} parent=5 // pred_fallthru
      _
    %p151 = scmp.lt.s32.totalorder %s10, 2
    // Predicated region
    $region21: #{resblock_pallas.5} parent=5 // pred_check
      %p152 = pneg %p151
    $region22: #{resblock_pallas.5} parent=5 // pred_check_branch
      %154 = sbr.rel (%p152) target = $region24
    $region23: #{resblock_pallas.5} parent=5 // pred_region
      // Predicated region
      $region25: #{resblock_pallas.5} parent=23 // pred_check
        %p155 = pneg %p30
      $region26: #{resblock_pallas.5} parent=23 // pred_check_branch
        %157 = sbr.rel (%p155) target = $region28
      $region27: #{resblock_pallas.5} parent=23 // pred_region
        %s158 = smul.u32 32, %s10
        %p159 = scmp.lt.s32.totalorder %s158, 63
        %s160 = scalar_select %p159, %s158, 63
        %s161 = smul.addr %s160, 8
        %s162 = scalar_lea.vmem %s0, %s161
        %s163 = smul.u32 32, %s10
      $region28: #{resblock_pallas.5} parent=23 // pred_fallthru
        _
      // Predicated region
      $region29: #{resblock_pallas.5} parent=23 // pred_check
        %p164 = pneg %p56
      $region30: #{resblock_pallas.5} parent=23 // pred_check_branch
        %166 = sbr.rel (%p164) target = $region32
      $region31: #{resblock_pallas.5} parent=23 // pred_region
        %s167 = smul.u32 32, %s10
        %p168 = scmp.lt.s32.totalorder %s167, 63
        %s169 = scalar_select %p168, %s167, 63
        %s170 = smul.addr %s169, 8
        %s171 = scalar_lea.vmem %s1, %s170
        %s172 = smul.u32 32, %s10
      $region32: #{resblock_pallas.5} parent=23 // pred_fallthru
        _
    $region24: #{resblock_pallas.5} parent=5 // pred_fallthru
      _
    %p173 = scmp.le.s32.totalorder 1, %s10
    %p174 = scmp.lt.s32.totalorder %s10, 3
    %p175 = pnand %p173, %p174
    %p176 = pneg %p175
    // Predicated region
    $region33: #{resblock_pallas.5} parent=5 // pred_check
      _
    $region34: #{resblock_pallas.5} parent=5 // pred_check_branch
      %178 = sbr.rel (%p175) target = $region36
    $region35: #{resblock_pallas.5} parent=5 // pred_region
      %s179 = ssub.s32 %s10, 1
      %s180 = smul.u32 32, %s15
      %p181 = scmp.lt.s32.totalorder %s180, 63
      %s182 = scalar_select %p181, %s180, 63
      %s183 = smul.addr %s182, 8
      %s184 = scalar_lea.vmem %s0, %s183
      %p185 = pneg %p36
      %p186 = pneg %p33
      %s187 = smul.u32 32, %s15
      %p188 = scmp.lt.s32.totalorder %s187, 63
      %s189 = scalar_select %p188, %s187, 63
      %s190 = smul.addr %s189, 8
      %s191 = scalar_lea.vmem %s1, %s190
      %p192 = pneg %p62
      %p193 = pneg %p59
      %p194 = pneg %p83
      %p195 = pneg %p80
      %p196 = pneg %p104
      %p197 = pneg %p101
      %p198 = pneg %p130
      %p199 = pneg %p127
      %s200 = smul.u32 32, %s15
      %p201 = scmp.lt.s32.totalorder %s200, 63
      %s202 = scalar_select %p201, %s200, 63
      %s203 = smul.addr %s202, 8
      %s204 = scalar_lea.vmem %s4, %s203
      %s205 = smul.u32 32, %s15
      %p206 = scmp.lt.s32.totalorder %s205, 63
      %s207 = scalar_select %p206, %s205, 63
      %s208 = smul.addr %s207, 8
      %s209 = scalar_lea.vmem %s0, %s208
      %s210 = smul.u32 32, %s15
      %s211 = smul.u32 32, %s15
      %p212 = scmp.lt.s32.totalorder %s211, 63
      %s213 = scalar_select %p212, %s211, 63
      %s214 = smul.addr %s213, 8
      %s215 = scalar_lea.vmem %s1, %s214
      %s216 = smul.u32 32, %s15
      %s217 = smul.u32 32, %s15
      %p218 = scmp.lt.s32.totalorder %s217, 63
      %s219 = scalar_select %p218, %s217, 63
      %s220 = smul.addr %s219, 8
      %s221 = scalar_lea.vmem %s4, %s220
      %s222 = smul.u32 32, %s15
      %v223 = vld [vmem:[%s209] sm:$0xff]
      %v224 = vld [vmem:[%s209 + $0x8] sm:$0xff]
      %v225 = vld [vmem:[%s209 + $0x10] sm:$0xff]
      %v226 = vld [vmem:[%s209 + $0x18] sm:$0xff]
      %v227 = vld [vmem:[%s209 + $0x20] sm:$0xff]
      %v228 = vld [vmem:[%s209 + $0x28] sm:$0xff]
      %v229 = vld [vmem:[%s209 + $0x30] sm:$0xff]
      %v230 = vld [vmem:[%s209 + $0x38] sm:$0xff]
      %v231 = vld [vmem:[%s209 + $0x40] sm:$0xff]
      %v232 = vld [vmem:[%s209 + $0x48] sm:$0xff]
      %v233 = vld [vmem:[%s209 + $0x50] sm:$0xff]
      %v234 = vld [vmem:[%s209 + $0x58] sm:$0xff]
      %v235 = vld [vmem:[%s209 + $0x60] sm:$0xff]
      %v236 = vld [vmem:[%s209 + $0x68] sm:$0xff]
      %v237 = vld [vmem:[%s209 + $0x70] sm:$0xff]
      %v238 = vld [vmem:[%s209 + $0x78] sm:$0xff]
      %v239 = vld [vmem:[%s209 + $0x80] sm:$0xff]
      %v240 = vld [vmem:[%s209 + $0x88] sm:$0xff]
      %v241 = vld [vmem:[%s209 + $0x90] sm:$0xff]
      %v242 = vld [vmem:[%s209 + $0x98] sm:$0xff]
      %v243 = vld [vmem:[%s209 + $0xa0] sm:$0xff]
      %v244 = vld [vmem:[%s209 + $0xa8] sm:$0xff]
      %v245 = vld [vmem:[%s209 + $0xb0] sm:$0xff]
      %v246 = vld [vmem:[%s209 + $0xb8] sm:$0xff]
      %v247 = vld [vmem:[%s209 + $0xc0] sm:$0xff]
      %v248 = vld [vmem:[%s209 + $0xc8] sm:$0xff]
      %v249 = vld [vmem:[%s209 + $0xd0] sm:$0xff]
      %v250 = vld [vmem:[%s209 + $0xd8] sm:$0xff]
      %v251 = vld [vmem:[%s209 + $0xe0] sm:$0xff]
      %v252 = vld [vmem:[%s209 + $0xe8] sm:$0xff]
      %v253 = vld [vmem:[%s209 + $0xf0] sm:$0xff]
      %v254 = vld [vmem:[%s209 + $0xf8] sm:$0xff]
      %v255 = vld [vmem:[%s215] sm:$0xff]
      %v256 = vld [vmem:[%s215 + $0x8] sm:$0xff]
      %v257 = vld [vmem:[%s215 + $0x10] sm:$0xff]
      %v258 = vld [vmem:[%s215 + $0x18] sm:$0xff]
      %v259 = vld [vmem:[%s215 + $0x20] sm:$0xff]
      %v260 = vld [vmem:[%s215 + $0x28] sm:$0xff]
      %v261 = vld [vmem:[%s215 + $0x30] sm:$0xff]
      %v262 = vld [vmem:[%s215 + $0x38] sm:$0xff]
      %v263 = vld [vmem:[%s215 + $0x40] sm:$0xff]
      %v264 = vld [vmem:[%s215 + $0x48] sm:$0xff]
      %v265 = vld [vmem:[%s215 + $0x50] sm:$0xff]
      %v266 = vld [vmem:[%s215 + $0x58] sm:$0xff]
      %v267 = vld [vmem:[%s215 + $0x60] sm:$0xff]
      %v268 = vld [vmem:[%s215 + $0x68] sm:$0xff]
      %v269 = vld [vmem:[%s215 + $0x70] sm:$0xff]
      %v270 = vld [vmem:[%s215 + $0x78] sm:$0xff]
      %v271 = vld [vmem:[%s215 + $0x80] sm:$0xff]
      %v272 = vld [vmem:[%s215 + $0x88] sm:$0xff]
      %v273 = vld [vmem:[%s215 + $0x90] sm:$0xff]
      %v274 = vld [vmem:[%s215 + $0x98] sm:$0xff]
      %v275 = vld [vmem:[%s215 + $0xa0] sm:$0xff]
      %v276 = vld [vmem:[%s215 + $0xa8] sm:$0xff]
      %v277 = vld [vmem:[%s215 + $0xb0] sm:$0xff]
      %v278 = vld [vmem:[%s215 + $0xb8] sm:$0xff]
      %v279 = vld [vmem:[%s215 + $0xc0] sm:$0xff]
      %v280 = vld [vmem:[%s215 + $0xc8] sm:$0xff]
      %v281 = vld [vmem:[%s215 + $0xd0] sm:$0xff]
      %v282 = vld [vmem:[%s215 + $0xd8] sm:$0xff]
      %v283 = vld [vmem:[%s215 + $0xe0] sm:$0xff]
      %v284 = vld [vmem:[%s215 + $0xe8] sm:$0xff]
      %v285 = vld [vmem:[%s215 + $0xf0] sm:$0xff]
      %v286 = vld [vmem:[%s215 + $0xf8] sm:$0xff]
      %v287 = vld [vmem:[%s2] sm:$0x1]
      %v289 = vlaneseq
      %v290 = vshrl.u32 %v289, 7
      %v291 = vsub.s32 0, %v290
      %v292 = vrot.slane %v287, %v291
      %v294 = vmul.f32 %v255, %v292
      %v295 = vmul.f32 %v256, %v292
      %v296 = vmul.f32 %v257, %v292
      %v297 = vmul.f32 %v258, %v292
      %v298 = vmul.f32 %v259, %v292
      %v299 = vmul.f32 %v260, %v292
      %v300 = vmul.f32 %v261, %v292
      %v301 = vmul.f32 %v262, %v292
      %v302 = vmul.f32 %v263, %v292
      %v303 = vmul.f32 %v264, %v292
      %v304 = vmul.f32 %v265, %v292
      %v305 = vmul.f32 %v266, %v292
      %v306 = vmul.f32 %v267, %v292
      %v307 = vmul.f32 %v268, %v292
      %v308 = vmul.f32 %v269, %v292
      %v309 = vmul.f32 %v270, %v292
      %v310 = vmul.f32 %v271, %v292
      %v311 = vmul.f32 %v272, %v292
      %v312 = vmul.f32 %v273, %v292
      %v313 = vmul.f32 %v274, %v292
      %v314 = vmul.f32 %v275, %v292
      %v315 = vmul.f32 %v276, %v292
      %v316 = vmul.f32 %v277, %v292
      %v317 = vmul.f32 %v278, %v292
      %v318 = vmul.f32 %v279, %v292
      %v319 = vmul.f32 %v280, %v292
      %v320 = vmul.f32 %v281, %v292
      %v321 = vmul.f32 %v282, %v292
      %v322 = vmul.f32 %v283, %v292
      %v323 = vmul.f32 %v284, %v292
      %v324 = vmul.f32 %v285, %v292
      %v325 = vmul.f32 %v286, %v292
      %v326 = vadd.f32 %v223, %v294
      %v327 = vadd.f32 %v224, %v295
      %v328 = vadd.f32 %v225, %v296
      %v329 = vadd.f32 %v226, %v297
      %v330 = vadd.f32 %v227, %v298
      %v331 = vadd.f32 %v228, %v299
      %v332 = vadd.f32 %v229, %v300
      %v333 = vadd.f32 %v230, %v301
      %v334 = vadd.f32 %v231, %v302
      %v335 = vadd.f32 %v232, %v303
      %v336 = vadd.f32 %v233, %v304
      %v337 = vadd.f32 %v234, %v305
      %v338 = vadd.f32 %v235, %v306
      %v339 = vadd.f32 %v236, %v307
      %v340 = vadd.f32 %v237, %v308
      %v341 = vadd.f32 %v238, %v309
      %v342 = vadd.f32 %v239, %v310
      %v343 = vadd.f32 %v240, %v311
      %v344 = vadd.f32 %v241, %v312
      %v345 = vadd.f32 %v242, %v313
      %v346 = vadd.f32 %v243, %v314
      %v347 = vadd.f32 %v244, %v315
      %v348 = vadd.f32 %v245, %v316
      %v349 = vadd.f32 %v246, %v317
      %v350 = vadd.f32 %v247, %v318
      %v351 = vadd.f32 %v248, %v319
      %v352 = vadd.f32 %v249, %v320
      %v353 = vadd.f32 %v250, %v321
      %v354 = vadd.f32 %v251, %v322
      %v355 = vadd.f32 %v252, %v323
      %v356 = vadd.f32 %v253, %v324
      %v357 = vadd.f32 %v254, %v325
      %v358 = vld [vmem:[%s3] sm:$0x1]
      %v360 = vlaneseq
      %v361 = vshrl.u32 %v360, 7
      %v362 = vsub.s32 0, %v361
      %v363 = vrot.slane %v358, %v362
      %v365 = vadd.f32 %v326, %v363
      %v366 = vadd.f32 %v327, %v363
      %v367 = vadd.f32 %v328, %v363
      %v368 = vadd.f32 %v329, %v363
      %v369 = vadd.f32 %v330, %v363
      %v370 = vadd.f32 %v331, %v363
      %v371 = vadd.f32 %v332, %v363
      %v372 = vadd.f32 %v333, %v363
      %v373 = vadd.f32 %v334, %v363
      %v374 = vadd.f32 %v335, %v363
      %v375 = vadd.f32 %v336, %v363
      %v376 = vadd.f32 %v337, %v363
      %v377 = vadd.f32 %v338, %v363
      %v378 = vadd.f32 %v339, %v363
      %v379 = vadd.f32 %v340, %v363
      %v380 = vadd.f32 %v341, %v363
      %v381 = vadd.f32 %v342, %v363
      %v382 = vadd.f32 %v343, %v363
      %v383 = vadd.f32 %v344, %v363
      %v384 = vadd.f32 %v345, %v363
      %v385 = vadd.f32 %v346, %v363
      %v386 = vadd.f32 %v347, %v363
      %v387 = vadd.f32 %v348, %v363
      %v388 = vadd.f32 %v349, %v363
      %v389 = vadd.f32 %v350, %v363
      %v390 = vadd.f32 %v351, %v363
      %v391 = vadd.f32 %v352, %v363
      %v392 = vadd.f32 %v353, %v363
      %v393 = vadd.f32 %v354, %v363
      %v394 = vadd.f32 %v355, %v363
      %v395 = vadd.f32 %v356, %v363
      %v396 = vadd.f32 %v357, %v363
      %397 = vst [vmem:[%s221] sm:$0xff] %v365
      %398 = vst [vmem:[%s221 + $0x8] sm:$0xff] %v366
      %399 = vst [vmem:[%s221 + $0x10] sm:$0xff] %v367
      %400 = vst [vmem:[%s221 + $0x18] sm:$0xff] %v368
      %401 = vst [vmem:[%s221 + $0x20] sm:$0xff] %v369
      %402 = vst [vmem:[%s221 + $0x28] sm:$0xff] %v370
      %403 = vst [vmem:[%s221 + $0x30] sm:$0xff] %v371
      %404 = vst [vmem:[%s221 + $0x38] sm:$0xff] %v372
      %405 = vst [vmem:[%s221 + $0x40] sm:$0xff] %v373
      %406 = vst [vmem:[%s221 + $0x48] sm:$0xff] %v374
      %407 = vst [vmem:[%s221 + $0x50] sm:$0xff] %v375
      %408 = vst [vmem:[%s221 + $0x58] sm:$0xff] %v376
      %409 = vst [vmem:[%s221 + $0x60] sm:$0xff] %v377
      %410 = vst [vmem:[%s221 + $0x68] sm:$0xff] %v378
      %411 = vst [vmem:[%s221 + $0x70] sm:$0xff] %v379
      %412 = vst [vmem:[%s221 + $0x78] sm:$0xff] %v380
      %413 = vst [vmem:[%s221 + $0x80] sm:$0xff] %v381
      %414 = vst [vmem:[%s221 + $0x88] sm:$0xff] %v382
      %415 = vst [vmem:[%s221 + $0x90] sm:$0xff] %v383
      %416 = vst [vmem:[%s221 + $0x98] sm:$0xff] %v384
      %417 = vst [vmem:[%s221 + $0xa0] sm:$0xff] %v385
      %418 = vst [vmem:[%s221 + $0xa8] sm:$0xff] %v386
      %419 = vst [vmem:[%s221 + $0xb0] sm:$0xff] %v387
      %420 = vst [vmem:[%s221 + $0xb8] sm:$0xff] %v388
      %421 = vst [vmem:[%s221 + $0xc0] sm:$0xff] %v389
      %422 = vst [vmem:[%s221 + $0xc8] sm:$0xff] %v390
      %423 = vst [vmem:[%s221 + $0xd0] sm:$0xff] %v391
      %424 = vst [vmem:[%s221 + $0xd8] sm:$0xff] %v392
      %425 = vst [vmem:[%s221 + $0xe0] sm:$0xff] %v393
      %426 = vst [vmem:[%s221 + $0xe8] sm:$0xff] %v394
      %427 = vst [vmem:[%s221 + $0xf0] sm:$0xff] %v395
      %428 = vst [vmem:[%s221 + $0xf8] sm:$0xff] %v396
      %s429 = smul.u32 32, %s15
      %p430 = scmp.lt.s32.totalorder %s429, 63
      %s431 = scalar_select %p430, %s429, 63
      %s432 = smul.addr %s431, 8
      %s433 = scalar_lea.vmem %s4, %s432
      // Predicated region
      $region37: #{resblock_pallas.5} parent=35 // pred_check
        %p434 = pneg %p127
      $region38: #{resblock_pallas.5} parent=35 // pred_check_branch
        %436 = sbr.rel (%p434) target = $region40
      $region39: #{resblock_pallas.5} parent=35 // pred_region
        %s437 = smul.u32 32, %s15
      $region40: #{resblock_pallas.5} parent=35 // pred_fallthru
        _
    $region36: #{resblock_pallas.5} parent=5 // pred_fallthru
      _
    %p438 = scmp.le.s32.totalorder 2, %s10
    // Predicated region
    $region41: #{resblock_pallas.5} parent=5 // pred_check
      %p439 = pneg %p438
    $region42: #{resblock_pallas.5} parent=5 // pred_check_branch
      %441 = sbr.rel (%p439) target = $region44
    $region43: #{resblock_pallas.5} parent=5 // pred_region
      %s442 = ssub.s32 %s10, 2
      // Predicated region
      $region45: #{resblock_pallas.5} parent=43 // pred_check
        %p443 = pneg %p133
      $region46: #{resblock_pallas.5} parent=43 // pred_check_branch
        %445 = sbr.rel (%p443) target = $region48
      $region47: #{resblock_pallas.5} parent=43 // pred_region
        %s446 = smul.u32 32, %s16
        %p447 = scmp.lt.s32.totalorder %s446, 63
        %s448 = scalar_select %p447, %s446, 63
        %s449 = smul.addr %s448, 8
        %s450 = scalar_lea.vmem %s4, %s449
      $region48: #{resblock_pallas.5} parent=43 // pred_fallthru
        _
    $region44: #{resblock_pallas.5} parent=5 // pred_fallthru
      _
  $region6: #{resblock_pallas.5} parent=0 // loop_footer
    %s14 = sadd.s32 1, %s10
  $region7: #{resblock_pallas.5} parent=0 // loop_footer_branch
    %9 = sbr.rel target = $region3
  $region8: #{resblock_pallas.5} parent=0 // loop_exit
    _

// kernel: resblock_pallas.4
$region0: #{resblock_pallas.4}
  #allocation0 [shape = 'u32[]', space=smem, size = 0x4, offset = 0x4, fixed_abs, tag = 'smem constant byte address 0x4 - core index']
  #allocation1 [shape = 'u32[144,128]{1,0:T(1,128)}', space=vmem, size = 0x12000, scoped, tag = 'internal scratch']
  %s0 = inlined_call_operand.vmem [shape: f32[512,128], index: 0, kind: input, shape index: {}]
  %s1 = inlined_call_operand.vmem [shape: f32[1,128], index: 1, kind: input, shape index: {}]
  %s2 = inlined_call_operand.vmem [shape: f32[1,128], index: 2, kind: input, shape index: {}]
  %s3 = inlined_call_operand.vmem [shape: f32[128,128], index: 3, kind: input, shape index: {}]
  %s4 = inlined_call_operand.vmem [shape: f32[1,128], index: 4, kind: input, shape index: {}]
  %s5 = inlined_call_operand.vmem [shape: f32[512,128], index: 5, kind: output, shape index: {0}]
  %s6 = inlined_call_operand.vmem [shape: f32[2,2,128], index: 6, kind: output, shape index: {1}]
  %7 = xla_tuple %s5, %s6
  %s8 = sld [smem:[#allocation0]]
  $region61: #{resblock_pallas.4} parent=0
    _
  %s10 = ssub.s32 1, %s8
  %s11 = scalar_select 0, %s10, %s8
  loop: start=0, step=1, limit=4
  $region2: #{resblock_pallas.4} parent=0 // loop_pre_header
    _
  $region3: #{resblock_pallas.4} parent=0 // loop_header
    %s13 = sphi 0, %s17
    %p14 = scmp.ge.s32.totalorder %s13, 4
    %s23 = sphi 0, %s25
    %s26 = sphi 0, %s23
    %s27 = sphi 0, %s26
    %s43 = sphi 0, %s27
    %s47 = sphi 0, %s47
    %s49 = sphi 0, %s47
    %s50 = sphi 0, %s49
    %s64 = sphi 0, %s50
    %s68 = sphi 0, %s68
    %s70 = sphi 0, %s68
    %s71 = sphi 0, %s70
    %s85 = sphi 0, %s71
    %s89 = sphi 0, %s89
    %s91 = sphi 0, %s89
    %s92 = sphi 0, %s91
    %s106 = sphi 0, %s92
    %s110 = sphi 0, %s110
    %s112 = sphi 0, %s110
    %s113 = sphi 0, %s112
    %s127 = sphi 0, %s113
    %s133 = sphi 0, %s135
    %s136 = sphi 0, %s133
    %s137 = sphi 0, %s136
    %s153 = sphi 0, %s137
    %s159 = sphi 0, %s161
    %s162 = sphi 0, %s159
    %s163 = sphi 0, %s162
    %s179 = sphi 0, %s163
  $region4: #{resblock_pallas.4} parent=0 // loop_header_branch
    %16 = sbr.rel (%p14) target = $region8
  $region5: #{resblock_pallas.4} parent=0 // loop_body
    %s18 = ssub.s32 %s13, 1
    %s19 = ssub.s32 %s13, 2
    %s20 = sadd.s32 %s13, 1
    %s21 = ssub.s32 %s13, %s20
    %p22 = scmp.eq.s32.totalorder %s21, 0
    %s24 = sadd.s32 %s23, 1
    %s25 = scalar_select %p22, %s23, %s24
    %p28 = pneg %p22
    %p29 = scmp.eq.s32.totalorder %s13, 1
    %p30 = por %p28, %p29
    %p31 = scmp.ne.s32.totalorder %s23, %s26
    %p32 = scmp.eq.s32.totalorder %s13, 0
    %p33 = por %p31, %p32
    %p34 = scmp.ne.s32.totalorder %s23, %s26
    %p35 = scmp.eq.s32.totalorder %s18, 1
    %p36 = por %p34, %p35
    %p37 = scmp.ne.s32.totalorder %s26, %s27
    %p38 = scmp.eq.s32.totalorder %s18, 0
    %p39 = por %p37, %p38
    %p40 = scmp.ne.s32.totalorder %s26, %s27
    %p41 = scmp.eq.s32.totalorder %s19, 1
    %p42 = por %p40, %p41
    %p44 = scmp.ne.s32.totalorder %s27, %s43
    %p45 = scmp.eq.s32.totalorder %s19, 0
    %p46 = por %p44, %p45
    %s48 = sadd.s32 %s47, 1
    %p51 = scmp.eq.s32.totalorder %s13, 1
    %p52 = scmp.ne.s32.totalorder %s47, %s49
    %p53 = scmp.eq.s32.totalorder %s13, 0
    %p54 = por %p52, %p53
    %p55 = scmp.ne.s32.totalorder %s47, %s49
    %p56 = scmp.eq.s32.totalorder %s18, 1
    %p57 = por %p55, %p56
    %p58 = scmp.ne.s32.totalorder %s49, %s50
    %p59 = scmp.eq.s32.totalorder %s18, 0
    %p60 = por %p58, %p59
    %p61 = scmp.ne.s32.totalorder %s49, %s50
    %p62 = scmp.eq.s32.totalorder %s19, 1
    %p63 = por %p61, %p62
    %p65 = scmp.ne.s32.totalorder %s50, %s64
    %p66 = scmp.eq.s32.totalorder %s19, 0
    %p67 = por %p65, %p66
    %s69 = sadd.s32 %s68, 1
    %p72 = scmp.eq.s32.totalorder %s13, 1
    %p73 = scmp.ne.s32.totalorder %s68, %s70
    %p74 = scmp.eq.s32.totalorder %s13, 0
    %p75 = por %p73, %p74
    %p76 = scmp.ne.s32.totalorder %s68, %s70
    %p77 = scmp.eq.s32.totalorder %s18, 1
    %p78 = por %p76, %p77
    %p79 = scmp.ne.s32.totalorder %s70, %s71
    %p80 = scmp.eq.s32.totalorder %s18, 0
    %p81 = por %p79, %p80
    %p82 = scmp.ne.s32.totalorder %s70, %s71
    %p83 = scmp.eq.s32.totalorder %s19, 1
    %p84 = por %p82, %p83
    %p86 = scmp.ne.s32.totalorder %s71, %s85
    %p87 = scmp.eq.s32.totalorder %s19, 0
    %p88 = por %p86, %p87
    %s90 = sadd.s32 %s89, 1
    %p93 = scmp.eq.s32.totalorder %s13, 1
    %p94 = scmp.ne.s32.totalorder %s89, %s91
    %p95 = scmp.eq.s32.totalorder %s13, 0
    %p96 = por %p94, %p95
    %p97 = scmp.ne.s32.totalorder %s89, %s91
    %p98 = scmp.eq.s32.totalorder %s18, 1
    %p99 = por %p97, %p98
    %p100 = scmp.ne.s32.totalorder %s91, %s92
    %p101 = scmp.eq.s32.totalorder %s18, 0
    %p102 = por %p100, %p101
    %p103 = scmp.ne.s32.totalorder %s91, %s92
    %p104 = scmp.eq.s32.totalorder %s19, 1
    %p105 = por %p103, %p104
    %p107 = scmp.ne.s32.totalorder %s92, %s106
    %p108 = scmp.eq.s32.totalorder %s19, 0
    %p109 = por %p107, %p108
    %s111 = sadd.s32 %s110, 1
    %p114 = scmp.eq.s32.totalorder %s13, 1
    %p115 = scmp.ne.s32.totalorder %s110, %s112
    %p116 = scmp.eq.s32.totalorder %s13, 0
    %p117 = por %p115, %p116
    %p118 = scmp.ne.s32.totalorder %s110, %s112
    %p119 = scmp.eq.s32.totalorder %s18, 1
    %p120 = por %p118, %p119
    %p121 = scmp.ne.s32.totalorder %s112, %s113
    %p122 = scmp.eq.s32.totalorder %s18, 0
    %p123 = por %p121, %p122
    %p124 = scmp.ne.s32.totalorder %s112, %s113
    %p125 = scmp.eq.s32.totalorder %s19, 1
    %p126 = por %p124, %p125
    %p128 = scmp.ne.s32.totalorder %s113, %s127
    %p129 = scmp.eq.s32.totalorder %s19, 0
    %p130 = por %p128, %p129
    %s131 = ssub.s32 %s13, %s20
    %p132 = scmp.eq.s32.totalorder %s131, 0
    %s134 = sadd.s32 %s133, 1
    %s135 = scalar_select %p132, %s133, %s134
    %p138 = pneg %p132
    %p139 = scmp.eq.s32.totalorder %s13, 1
    %p140 = por %p138, %p139
    %p141 = scmp.ne.s32.totalorder %s133, %s136
    %p142 = scmp.eq.s32.totalorder %s13, 0
    %p143 = por %p141, %p142
    %p144 = scmp.ne.s32.totalorder %s133, %s136
    %p145 = scmp.eq.s32.totalorder %s18, 1
    %p146 = por %p144, %p145
    %p147 = scmp.ne.s32.totalorder %s136, %s137
    %p148 = scmp.eq.s32.totalorder %s18, 0
    %p149 = por %p147, %p148
    %p150 = scmp.ne.s32.totalorder %s136, %s137
    %p151 = scmp.eq.s32.totalorder %s19, 1
    %p152 = por %p150, %p151
    %p154 = scmp.ne.s32.totalorder %s137, %s153
    %p155 = scmp.eq.s32.totalorder %s19, 0
    %p156 = por %p154, %p155
    %s157 = ssub.s32 %s13, %s20
    %p158 = scmp.eq.s32.totalorder %s157, 0
    %s160 = sadd.s32 %s159, 1
    %s161 = scalar_select %p158, %s159, %s160
    %p164 = pneg %p158
    %p165 = scmp.eq.s32.totalorder %s13, 1
    %p166 = por %p164, %p165
    %p167 = scmp.ne.s32.totalorder %s159, %s162
    %p168 = scmp.eq.s32.totalorder %s13, 0
    %p169 = por %p167, %p168
    %p170 = scmp.ne.s32.totalorder %s159, %s162
    %p171 = scmp.eq.s32.totalorder %s18, 1
    %p172 = por %p170, %p171
    %p173 = scmp.ne.s32.totalorder %s162, %s163
    %p174 = scmp.eq.s32.totalorder %s18, 0
    %p175 = por %p173, %p174
    %p176 = scmp.ne.s32.totalorder %s162, %s163
    %p177 = scmp.eq.s32.totalorder %s19, 1
    %p178 = por %p176, %p177
    %p180 = scmp.ne.s32.totalorder %s163, %s179
    %p181 = scmp.eq.s32.totalorder %s19, 0
    %p182 = por %p180, %p181
    %p183 = scmp.le.s32.totalorder 1, %s13
    %p184 = scmp.lt.s32.totalorder %s13, 3
    %p185 = pnand %p183, %p184
    %p186 = pneg %p185
    // Predicated region
    $region9: #{resblock_pallas.4} parent=5 // pred_check
      _
    $region10: #{resblock_pallas.4} parent=5 // pred_check_branch
      %188 = sbr.rel (%p185) target = $region12
    $region11: #{resblock_pallas.4} parent=5 // pred_region
      %s189 = ssub.s32 %s13, 1
      // Predicated region
      $region13: #{resblock_pallas.4} parent=11 // pred_check
        %p190 = pneg %p60
      $region14: #{resblock_pallas.4} parent=11 // pred_check_branch
        %192 = sbr.rel (%p190) target = $region16
      $region15: #{resblock_pallas.4} parent=11 // pred_region
        _
      $region16: #{resblock_pallas.4} parent=11 // pred_fallthru
        _
      // Predicated region
      $region17: #{resblock_pallas.4} parent=11 // pred_check
        %p193 = pneg %p81
      $region18: #{resblock_pallas.4} parent=11 // pred_check_branch
        %195 = sbr.rel (%p193) target = $region20
      $region19: #{resblock_pallas.4} parent=11 // pred_region
        _
      $region20: #{resblock_pallas.4} parent=11 // pred_fallthru
        _
      // Predicated region
      $region21: #{resblock_pallas.4} parent=11 // pred_check
        %p196 = pneg %p102
      $region22: #{resblock_pallas.4} parent=11 // pred_check_branch
        %198 = sbr.rel (%p196) target = $region24
      $region23: #{resblock_pallas.4} parent=11 // pred_region
        _
      $region24: #{resblock_pallas.4} parent=11 // pred_fallthru
        _
      // Predicated region
      $region25: #{resblock_pallas.4} parent=11 // pred_check
        %p199 = pneg %p123
      $region26: #{resblock_pallas.4} parent=11 // pred_check_branch
        %201 = sbr.rel (%p199) target = $region28
      $region27: #{resblock_pallas.4} parent=11 // pred_region
        _
      $region28: #{resblock_pallas.4} parent=11 // pred_fallthru
        _
    $region12: #{resblock_pallas.4} parent=5 // pred_fallthru
      _
    %p202 = scmp.lt.s32.totalorder %s13, 2
    // Predicated region
    $region29: #{resblock_pallas.4} parent=5 // pred_check
      %p203 = pneg %p202
    $region30: #{resblock_pallas.4} parent=5 // pred_check_branch
      %205 = sbr.rel (%p203) target = $region32
    $region31: #{resblock_pallas.4} parent=5 // pred_region
      // Predicated region
      $region33: #{resblock_pallas.4} parent=31 // pred_check
        %p206 = pneg %p33
      $region34: #{resblock_pallas.4} parent=31 // pred_check_branch
        %208 = sbr.rel (%p206) target = $region36
      $region35: #{resblock_pallas.4} parent=31 // pred_region
        %s209 = smul.u32 32, %s13
        %p210 = scmp.lt.s32.totalorder %s209, 63
        %s211 = scalar_select %p210, %s209, 63
        %s212 = smul.addr %s211, 8
        %s213 = scalar_lea.vmem %s0, %s212
        %s214 = smul.u32 32, %s13
      $region36: #{resblock_pallas.4} parent=31 // pred_fallthru
        _
    $region32: #{resblock_pallas.4} parent=5 // pred_fallthru
      _
    %p215 = scmp.le.s32.totalorder 1, %s13
    %p216 = scmp.lt.s32.totalorder %s13, 3
    %p217 = pnand %p215, %p216
    %p218 = pneg %p217
    // Predicated region
    $region37: #{resblock_pallas.4} parent=5 // pred_check
      _
    $region38: #{resblock_pallas.4} parent=5 // pred_check_branch
      %220 = sbr.rel (%p217) target = $region40
    $region39: #{resblock_pallas.4} parent=5 // pred_region
      %s221 = ssub.s32 %s13, 1
      %s222 = smul.u32 32, %s18
      %p223 = scmp.lt.s32.totalorder %s222, 63
      %s224 = scalar_select %p223, %s222, 63
      %s225 = smul.addr %s224, 8
      %s226 = scalar_lea.vmem %s0, %s225
      %p227 = pneg %p39
      %p228 = pneg %p36
      %p229 = pneg %p60
      %p230 = pneg %p57
      %p231 = pneg %p81
      %p232 = pneg %p78
      %p233 = pneg %p102
      %p234 = pneg %p99
      %p235 = pneg %p123
      %p236 = pneg %p120
      %p237 = pneg %p149
      %p238 = pneg %p146
      %s239 = smul.u32 32, %s18
      %p240 = scmp.lt.s32.totalorder %s239, 63
      %s241 = scalar_select %p240, %s239, 63
      %s242 = smul.addr %s241, 8
      %s243 = scalar_lea.vmem %s5, %s242
      %p244 = pneg %p175
      %p245 = pneg %p172
      %p246 = scmp.lt.s32.totalorder %s18, 1
      %s247 = scalar_select %p246, %s18, 1
      %s248 = smul.addr %s247, 2
      %s249 = scalar_lea.vmem %s6, %s248
      %s250 = smul.u32 32, %s18
      %p251 = scmp.lt.s32.totalorder %s250, 63
      %s252 = scalar_select %p251, %s250, 63
      %s253 = smul.addr %s252, 8
      %s254 = scalar_lea.vmem %s0, %s253
      %s255 = smul.u32 32, %s18
      %s256 = smul.u32 32, %s18
      %p257 = scmp.lt.s32.totalorder %s256, 63
      %s258 = scalar_select %p257, %s256, 63
      %s259 = smul.addr %s258, 8
      %s260 = scalar_lea.vmem %s5, %s259
      %s261 = smul.u32 32, %s18
      %p262 = scmp.lt.s32.totalorder %s18, 1
      %s263 = scalar_select %p262, %s18, 1
      %s264 = smul.addr %s263, 2
      %s265 = scalar_lea.vmem %s6, %s264
      %v266 = vld [vmem:[%s254] sm:$0xff]
      %v267 = vld [vmem:[%s254 + $0x8] sm:$0xff]
      %v268 = vld [vmem:[%s254 + $0x10] sm:$0xff]
      %v269 = vld [vmem:[%s254 + $0x18] sm:$0xff]
      %v270 = vld [vmem:[%s254 + $0x20] sm:$0xff]
      %v271 = vld [vmem:[%s254 + $0x28] sm:$0xff]
      %v272 = vld [vmem:[%s254 + $0x30] sm:$0xff]
      %v273 = vld [vmem:[%s254 + $0x38] sm:$0xff]
      %v274 = vld [vmem:[%s254 + $0x40] sm:$0xff]
      %v275 = vld [vmem:[%s254 + $0x48] sm:$0xff]
      %v276 = vld [vmem:[%s254 + $0x50] sm:$0xff]
      %v277 = vld [vmem:[%s254 + $0x58] sm:$0xff]
      %v278 = vld [vmem:[%s254 + $0x60] sm:$0xff]
      %v279 = vld [vmem:[%s254 + $0x68] sm:$0xff]
      %v280 = vld [vmem:[%s254 + $0x70] sm:$0xff]
      %v281 = vld [vmem:[%s254 + $0x78] sm:$0xff]
      %v282 = vld [vmem:[%s254 + $0x80] sm:$0xff]
      %v283 = vld [vmem:[%s254 + $0x88] sm:$0xff]
      %v284 = vld [vmem:[%s254 + $0x90] sm:$0xff]
      %v285 = vld [vmem:[%s254 + $0x98] sm:$0xff]
      %v286 = vld [vmem:[%s254 + $0xa0] sm:$0xff]
      %v287 = vld [vmem:[%s254 + $0xa8] sm:$0xff]
      %v288 = vld [vmem:[%s254 + $0xb0] sm:$0xff]
      %v289 = vld [vmem:[%s254 + $0xb8] sm:$0xff]
      %v290 = vld [vmem:[%s254 + $0xc0] sm:$0xff]
      %v291 = vld [vmem:[%s254 + $0xc8] sm:$0xff]
      %v292 = vld [vmem:[%s254 + $0xd0] sm:$0xff]
      %v293 = vld [vmem:[%s254 + $0xd8] sm:$0xff]
      %v294 = vld [vmem:[%s254 + $0xe0] sm:$0xff]
      %v295 = vld [vmem:[%s254 + $0xe8] sm:$0xff]
      %v296 = vld [vmem:[%s254 + $0xf0] sm:$0xff]
      %v297 = vld [vmem:[%s254 + $0xf8] sm:$0xff]
      %v298 = vld [vmem:[%s1] sm:$0x1]
      %v300 = vlaneseq
      %v301 = vshrl.u32 %v300, 7
      %v302 = vsub.s32 0, %v301
      %v303 = vrot.slane %v298, %v302
      %v305 = vmul.f32 %v266, %v303
      %v306 = vmul.f32 %v267, %v303
      %v307 = vmul.f32 %v268, %v303
      %v308 = vmul.f32 %v269, %v303
      %v309 = vmul.f32 %v270, %v303
      %v310 = vmul.f32 %v271, %v303
      %v311 = vmul.f32 %v272, %v303
      %v312 = vmul.f32 %v273, %v303
      %v313 = vmul.f32 %v274, %v303
      %v314 = vmul.f32 %v275, %v303
      %v315 = vmul.f32 %v276, %v303
      %v316 = vmul.f32 %v277, %v303
      %v317 = vmul.f32 %v278, %v303
      %v318 = vmul.f32 %v279, %v303
      %v319 = vmul.f32 %v280, %v303
      %v320 = vmul.f32 %v281, %v303
      %v321 = vmul.f32 %v282, %v303
      %v322 = vmul.f32 %v283, %v303
      %v323 = vmul.f32 %v284, %v303
      %v324 = vmul.f32 %v285, %v303
      %v325 = vmul.f32 %v286, %v303
      %v326 = vmul.f32 %v287, %v303
      %v327 = vmul.f32 %v288, %v303
      %v328 = vmul.f32 %v289, %v303
      %v329 = vmul.f32 %v290, %v303
      %v330 = vmul.f32 %v291, %v303
      %v331 = vmul.f32 %v292, %v303
      %v332 = vmul.f32 %v293, %v303
      %v333 = vmul.f32 %v294, %v303
      %v334 = vmul.f32 %v295, %v303
      %v335 = vmul.f32 %v296, %v303
      %v336 = vmul.f32 %v297, %v303
      %v337 = vld [vmem:[%s2] sm:$0x1]
      %v339 = vlaneseq
      %v340 = vshrl.u32 %v339, 7
      %v341 = vsub.s32 0, %v340
      %v342 = vrot.slane %v337, %v341
      %v344 = vadd.f32 %v305, %v342
      %v345 = vadd.f32 %v306, %v342
      %v346 = vadd.f32 %v307, %v342
      %v347 = vadd.f32 %v308, %v342
      %v348 = vadd.f32 %v309, %v342
      %v349 = vadd.f32 %v310, %v342
      %v350 = vadd.f32 %v311, %v342
      %v351 = vadd.f32 %v312, %v342
      %v352 = vadd.f32 %v313, %v342
      %v353 = vadd.f32 %v314, %v342
      %v354 = vadd.f32 %v315, %v342
      %v355 = vadd.f32 %v316, %v342
      %v356 = vadd.f32 %v317, %v342
      %v357 = vadd.f32 %v318, %v342
      %v358 = vadd.f32 %v319, %v342
      %v359 = vadd.f32 %v320, %v342
      %v360 = vadd.f32 %v321, %v342
      %v361 = vadd.f32 %v322, %v342
      %v362 = vadd.f32 %v323, %v342
      %v363 = vadd.f32 %v324, %v342
      %v364 = vadd.f32 %v325, %v342
      %v365 = vadd.f32 %v326, %v342
      %v366 = vadd.f32 %v327, %v342
      %v367 = vadd.f32 %v328, %v342
      %v368 = vadd.f32 %v329, %v342
      %v369 = vadd.f32 %v330, %v342
      %v370 = vadd.f32 %v331, %v342
      %v371 = vadd.f32 %v332, %v342
      %v372 = vadd.f32 %v333, %v342
      %v373 = vadd.f32 %v334, %v342
      %v374 = vadd.f32 %v335, %v342
      %v375 = vadd.f32 %v336, %v342
      %v376 = vmax.f32 %v344, 0.0
      %v377 = vmax.f32 %v345, 0.0
      %v378 = vmax.f32 %v346, 0.0
      %v379 = vmax.f32 %v347, 0.0
      %v380 = vmax.f32 %v348, 0.0
      %v381 = vmax.f32 %v349, 0.0
      %v382 = vmax.f32 %v350, 0.0
      %v383 = vmax.f32 %v351, 0.0
      %v384 = vmax.f32 %v352, 0.0
      %v385 = vmax.f32 %v353, 0.0
      %v386 = vmax.f32 %v354, 0.0
      %v387 = vmax.f32 %v355, 0.0
      %v388 = vmax.f32 %v356, 0.0
      %v389 = vmax.f32 %v357, 0.0
      %v390 = vmax.f32 %v358, 0.0
      %v391 = vmax.f32 %v359, 0.0
      %v392 = vmax.f32 %v360, 0.0
      %v393 = vmax.f32 %v361, 0.0
      %v394 = vmax.f32 %v362, 0.0
      %v395 = vmax.f32 %v363, 0.0
      %v396 = vmax.f32 %v364, 0.0
      %v397 = vmax.f32 %v365, 0.0
      %v398 = vmax.f32 %v366, 0.0
      %v399 = vmax.f32 %v367, 0.0
      %v400 = vmax.f32 %v368, 0.0
      %v401 = vmax.f32 %v369, 0.0
      %v402 = vmax.f32 %v370, 0.0
      %v403 = vmax.f32 %v371, 0.0
      %v404 = vmax.f32 %v372, 0.0
      %v405 = vmax.f32 %v373, 0.0
      %v406 = vmax.f32 %v374, 0.0
      %v407 = vmax.f32 %v375, 0.0
      %v408 = vld [vmem:[%s3] sm:$0xff]
      %v409 = vld [vmem:[%s3 + $0x8] sm:$0xff]
      %v410 = vld [vmem:[%s3 + $0x10] sm:$0xff]
      %v411 = vld [vmem:[%s3 + $0x18] sm:$0xff]
      %v412 = vld [vmem:[%s3 + $0x20] sm:$0xff]
      %v413 = vld [vmem:[%s3 + $0x28] sm:$0xff]
      %v414 = vld [vmem:[%s3 + $0x30] sm:$0xff]
      %v415 = vld [vmem:[%s3 + $0x38] sm:$0xff]
      %v416 = vld [vmem:[%s3 + $0x40] sm:$0xff]
      %v417 = vld [vmem:[%s3 + $0x48] sm:$0xff]
      %v418 = vld [vmem:[%s3 + $0x50] sm:$0xff]
      %v419 = vld [vmem:[%s3 + $0x58] sm:$0xff]
      %v420 = vld [vmem:[%s3 + $0x60] sm:$0xff]
      %v421 = vld [vmem:[%s3 + $0x68] sm:$0xff]
      %v422 = vld [vmem:[%s3 + $0x70] sm:$0xff]
      %v423 = vld [vmem:[%s3 + $0x78] sm:$0xff]
      %v424 = vld [vmem:[%s4] sm:$0x1]
      %v426 = vlaneseq
      %v427 = vshrl.u32 %v426, 7
      %v428 = vsub.s32 0, %v427
      %v429 = vrot.slane %v424, %v428
      %431 = vmatprep.subr.mxu0 0.0
      %432 = vmatpush1.msra.mxu0 %v408
      %433 = vmatprep.subr.mxu0 0.0
      %434 = vmatpush1.msra.mxu0 %v409
      %435 = vmatprep.subr.mxu0 0.0
      %436 = vmatpush1.msra.mxu0 %v410
      %437 = vmatprep.subr.mxu0 0.0
      %438 = vmatpush1.msra.mxu0 %v411
      %439 = vmatprep.subr.mxu0 0.0
      %440 = vmatpush1.msra.mxu0 %v412
      %441 = vmatprep.subr.mxu0 0.0
      %442 = vmatpush1.msra.mxu0 %v413
      %443 = vmatprep.subr.mxu0 0.0
      %444 = vmatpush1.msra.mxu0 %v414
      %445 = vmatprep.subr.mxu0 0.0
      %446 = vmatpush1.msra.mxu0 %v415
      %447 = vmatprep.subr.mxu0 0.0
      %448 = vmatpush1.msra.mxu0 %v416
      %449 = vmatprep.subr.mxu0 0.0
      %450 = vmatpush1.msra.mxu0 %v417
      %451 = vmatprep.subr.mxu0 0.0
      %452 = vmatpush1.msra.mxu0 %v418
      %453 = vmatprep.subr.mxu0 0.0
      %454 = vmatpush1.msra.mxu0 %v419
      %455 = vmatprep.subr.mxu0 0.0
      %456 = vmatpush1.msra.mxu0 %v420
      %457 = vmatprep.subr.mxu0 0.0
      %458 = vmatpush1.msra.mxu0 %v421
      %459 = vmatprep.subr.mxu0 0.0
      %460 = vmatpush1.msra.mxu0 %v422
      %461 = vmatprep.subr.mxu0 0.0
      %462 = vmatpush1.msra.mxu0 %v423
      %463 = vmatprep.subr.mxu0 0.0
      %464 = vmatpush1.msra.mxu0 0.0
      %465 = vmatprep.subr.mxu0 0.0
      %466 = vmatpush1.msra.mxu0 0.0
      %467 = vmatprep.subr.mxu0 0.0
      %468 = vmatpush1.msra.mxu0 0.0
      %469 = vmatprep.subr.mxu0 0.0
      %470 = vmatpush1.msra.mxu0 0.0
      %471 = vmatprep.subr.mxu0 0.0
      %472 = vmatpush1.msra.mxu0 0.0
      %473 = vmatprep.subr.mxu0 0.0
      %474 = vmatpush1.msra.mxu0 0.0
      %475 = vmatprep.subr.mxu0 0.0
      %476 = vmatpush1.msra.mxu0 0.0
      %477 = vmatprep.subr.mxu0 0.0
      %478 = vmatpush1.msra.mxu0 0.0
      %479 = vmatprep.subr.mxu0 0.0
      %480 = vmatpush1.msra.mxu0 0.0
      %481 = vmatprep.subr.mxu0 0.0
      %482 = vmatpush1.msra.mxu0 0.0
      %483 = vmatprep.subr.mxu0 0.0
      %484 = vmatpush1.msra.mxu0 0.0
      %485 = vmatprep.subr.mxu0 0.0
      %486 = vmatpush1.msra.mxu0 0.0
      %487 = vmatprep.subr.mxu0 0.0
      %488 = vmatpush1.msra.mxu0 0.0
      %489 = vmatprep.subr.mxu0 0.0
      %490 = vmatpush1.msra.mxu0 0.0
      %491 = vmatprep.subr.mxu0 0.0
      %492 = vmatpush1.msra.mxu0 0.0
      %493 = vmatprep.subr.mxu0 0.0
      %494 = vmatpush1.msra.mxu0 0.0
      %495 = vmatprep.mubr.f32.mxu0 0.0
      %496 = vmatmul.mubr.f32.gmra.mrb[0].mxu0 %v376
      %v497 = vpop.f32.mrb[0].mxu0
      %v498 = vadd.f32 %v429, %v497
      %v499 = vpop.f32.mrb[0].mxu0
      %500 = vmatprep.mubr.f32.mxu0 0.0
      %501 = vmatmul.mubr.f32.gmra.mrb[0].mxu0 %v377
      %v502 = vpop.f32.mrb[0].mxu0
      %v503 = vadd.f32 %v429, %v502
      %v504 = vpop.f32.mrb[0].mxu0
      %505 = vmatprep.mubr.f32.mxu0 0.0
      %506 = vmatmul.mubr.f32.gmra.mrb[0].mxu0 %v378
      %v507 = vpop.f32.mrb[0].mxu0
      %v508 = vadd.f32 %v429, %v507
      %v509 = vpop.f32.mrb[0].mxu0
      %510 = vmatprep.mubr.f32.mxu0 0.0
      %511 = vmatmul.mubr.f32.gmra.mrb[0].mxu0 %v379
      %v512 = vpop.f32.mrb[0].mxu0
      %v513 = vadd.f32 %v429, %v512
      %v514 = vpop.f32.mrb[0].mxu0
      %515 = vmatprep.mubr.f32.mxu0 0.0
      %516 = vmatmul.mubr.f32.gmra.mrb[0].mxu0 %v380
      %v517 = vpop.f32.mrb[0].mxu0
      %v518 = vadd.f32 %v429, %v517
      %v519 = vpop.f32.mrb[0].mxu0
      %520 = vmatprep.mubr.f32.mxu0 0.0
      %521 = vmatmul.mubr.f32.gmra.mrb[0].mxu0 %v381
      %v522 = vpop.f32.mrb[0].mxu0
      %v523 = vadd.f32 %v429, %v522
      %v524 = vpop.f32.mrb[0].mxu0
      %525 = vmatprep.mubr.f32.mxu0 0.0
      %526 = vmatmul.mubr.f32.gmra.mrb[0].mxu0 %v382
      %v527 = vpop.f32.mrb[0].mxu0
      %v528 = vadd.f32 %v429, %v527
      %v529 = vpop.f32.mrb[0].mxu0
      %530 = vmatprep.mubr.f32.mxu0 0.0
      %531 = vmatmul.mubr.f32.gmra.mrb[0].mxu0 %v383
      %v532 = vpop.f32.mrb[0].mxu0
      %v533 = vadd.f32 %v429, %v532
      %v534 = vpop.f32.mrb[0].mxu0
      %535 = vmatprep.mubr.f32.mxu0 0.0
      %536 = vmatmul.mubr.f32.gmra.mrb[0].mxu0 %v384
      %v537 = vpop.f32.mrb[0].mxu0
      %v538 = vadd.f32 %v429, %v537
      %v539 = vpop.f32.mrb[0].mxu0
      %540 = vmatprep.mubr.f32.mxu0 0.0
      %541 = vmatmul.mubr.f32.gmra.mrb[0].mxu0 %v385
      %v542 = vpop.f32.mrb[0].mxu0
      %v543 = vadd.f32 %v429, %v542
      %v544 = vpop.f32.mrb[0].mxu0
      %545 = vmatprep.mubr.f32.mxu0 0.0
      %546 = vmatmul.mubr.f32.gmra.mrb[0].mxu0 %v386
      %v547 = vpop.f32.mrb[0].mxu0
      %v548 = vadd.f32 %v429, %v547
      %v549 = vpop.f32.mrb[0].mxu0
      %550 = vmatprep.mubr.f32.mxu0 0.0
      %551 = vmatmul.mubr.f32.gmra.mrb[0].mxu0 %v387
      %v552 = vpop.f32.mrb[0].mxu0
      %v553 = vadd.f32 %v429, %v552
      %v554 = vpop.f32.mrb[0].mxu0
      %555 = vmatprep.mubr.f32.mxu0 0.0
      %556 = vmatmul.mubr.f32.gmra.mrb[0].mxu0 %v388
      %v557 = vpop.f32.mrb[0].mxu0
      %v558 = vadd.f32 %v429, %v557
      %v559 = vpop.f32.mrb[0].mxu0
      %560 = vmatprep.mubr.f32.mxu0 0.0
      %561 = vmatmul.mubr.f32.gmra.mrb[0].mxu0 %v389
      %v562 = vpop.f32.mrb[0].mxu0
      %v563 = vadd.f32 %v429, %v562
      %v564 = vpop.f32.mrb[0].mxu0
      %565 = vmatprep.mubr.f32.mxu0 0.0
      %566 = vmatmul.mubr.f32.gmra.mrb[0].mxu0 %v390
      %v567 = vpop.f32.mrb[0].mxu0
      %v568 = vadd.f32 %v429, %v567
      %v569 = vpop.f32.mrb[0].mxu0
      %570 = vmatprep.mubr.f32.mxu0 0.0
      %571 = vmatmul.mubr.f32.gmra.mrb[0].mxu0 %v391
      %v572 = vpop.f32.mrb[0].mxu0
      %v573 = vadd.f32 %v429, %v572
      %v574 = vpop.f32.mrb[0].mxu0
      %575 = vmatprep.mubr.f32.mxu0 0.0
      %576 = vmatmul.mubr.f32.gmra.mrb[0].mxu0 %v392
      %v577 = vpop.f32.mrb[0].mxu0
      %v578 = vadd.f32 %v429, %v577
      %v579 = vpop.f32.mrb[0].mxu0
      %580 = vmatprep.mubr.f32.mxu0 0.0
      %581 = vmatmul.mubr.f32.gmra.mrb[0].mxu0 %v393
      %v582 = vpop.f32.mrb[0].mxu0
      %v583 = vadd.f32 %v429, %v582
      %v584 = vpop.f32.mrb[0].mxu0
      %585 = vmatprep.mubr.f32.mxu0 0.0
      %586 = vmatmul.mubr.f32.gmra.mrb[0].mxu0 %v394
      %v587 = vpop.f32.mrb[0].mxu0
      %v588 = vadd.f32 %v429, %v587
      %v589 = vpop.f32.mrb[0].mxu0
      %590 = vmatprep.mubr.f32.mxu0 0.0
      %591 = vmatmul.mubr.f32.gmra.mrb[0].mxu0 %v395
      %v592 = vpop.f32.mrb[0].mxu0
      %v593 = vadd.f32 %v429, %v592
      %v594 = vpop.f32.mrb[0].mxu0
      %595 = vmatprep.mubr.f32.mxu0 0.0
      %596 = vmatmul.mubr.f32.gmra.mrb[0].mxu0 %v396
      %v597 = vpop.f32.mrb[0].mxu0
      %v598 = vadd.f32 %v429, %v597
      %v599 = vpop.f32.mrb[0].mxu0
      %600 = vmatprep.mubr.f32.mxu0 0.0
      %601 = vmatmul.mubr.f32.gmra.mrb[0].mxu0 %v397
      %v602 = vpop.f32.mrb[0].mxu0
      %v603 = vadd.f32 %v429, %v602
      %v604 = vpop.f32.mrb[0].mxu0
      %605 = vmatprep.mubr.f32.mxu0 0.0
      %606 = vmatmul.mubr.f32.gmra.mrb[0].mxu0 %v398
      %v607 = vpop.f32.mrb[0].mxu0
      %v608 = vadd.f32 %v429, %v607
      %v609 = vpop.f32.mrb[0].mxu0
      %610 = vmatprep.mubr.f32.mxu0 0.0
      %611 = vmatmul.mubr.f32.gmra.mrb[0].mxu0 %v399
      %v612 = vpop.f32.mrb[0].mxu0
      %v613 = vadd.f32 %v429, %v612
      %v614 = vpop.f32.mrb[0].mxu0
      %615 = vmatprep.mubr.f32.mxu0 0.0
      %616 = vmatmul.mubr.f32.gmra.mrb[0].mxu0 %v400
      %v617 = vpop.f32.mrb[0].mxu0
      %v618 = vadd.f32 %v429, %v617
      %v619 = vpop.f32.mrb[0].mxu0
      %620 = vmatprep.mubr.f32.mxu0 0.0
      %621 = vmatmul.mubr.f32.gmra.mrb[0].mxu0 %v401
      %v622 = vpop.f32.mrb[0].mxu0
      %v623 = vadd.f32 %v429, %v622
      %v624 = vpop.f32.mrb[0].mxu0
      %625 = vmatprep.mubr.f32.mxu0 0.0
      %626 = vmatmul.mubr.f32.gmra.mrb[0].mxu0 %v402
      %v627 = vpop.f32.mrb[0].mxu0
      %v628 = vadd.f32 %v429, %v627
      %v629 = vpop.f32.mrb[0].mxu0
      %630 = vmatprep.mubr.f32.mxu0 0.0
      %631 = vmatmul.mubr.f32.gmra.mrb[0].mxu0 %v403
      %v632 = vpop.f32.mrb[0].mxu0
      %v633 = vadd.f32 %v429, %v632
      %v634 = vpop.f32.mrb[0].mxu0
      %635 = vmatprep.mubr.f32.mxu0 0.0
      %636 = vmatmul.mubr.f32.gmra.mrb[0].mxu0 %v404
      %v637 = vpop.f32.mrb[0].mxu0
      %v638 = vadd.f32 %v429, %v637
      %v639 = vpop.f32.mrb[0].mxu0
      %640 = vmatprep.mubr.f32.mxu0 0.0
      %641 = vmatmul.mubr.f32.gmra.mrb[0].mxu0 %v405
      %v642 = vpop.f32.mrb[0].mxu0
      %v643 = vadd.f32 %v429, %v642
      %v644 = vpop.f32.mrb[0].mxu0
      %645 = vmatprep.mubr.f32.mxu0 0.0
      %646 = vmatmul.mubr.f32.gmra.mrb[0].mxu0 %v406
      %v647 = vpop.f32.mrb[0].mxu0
      %v648 = vadd.f32 %v429, %v647
      %v649 = vpop.f32.mrb[0].mxu0
      %650 = vmatprep.mubr.f32.mxu0 0.0
      %651 = vmatmul.mubr.f32.gmra.mrb[0].mxu0 %v407
      %v652 = vpop.f32.mrb[0].mxu0
      %v653 = vadd.f32 %v429, %v652
      %v654 = vpop.f32.mrb[0].mxu0
      %655 = vdwg.mxu0
      %656 = vst [vmem:[%s260] sm:$0xff] %v498
      %657 = vst [vmem:[%s260 + $0x8] sm:$0xff] %v503
      %658 = vst [vmem:[%s260 + $0x10] sm:$0xff] %v508
      %659 = vst [vmem:[%s260 + $0x18] sm:$0xff] %v513
      %660 = vst [vmem:[%s260 + $0x20] sm:$0xff] %v518
      %661 = vst [vmem:[%s260 + $0x28] sm:$0xff] %v523
      %662 = vst [vmem:[%s260 + $0x30] sm:$0xff] %v528
      %663 = vst [vmem:[%s260 + $0x38] sm:$0xff] %v533
      %664 = vst [vmem:[%s260 + $0x40] sm:$0xff] %v538
      %665 = vst [vmem:[%s260 + $0x48] sm:$0xff] %v543
      %666 = vst [vmem:[%s260 + $0x50] sm:$0xff] %v548
      %667 = vst [vmem:[%s260 + $0x58] sm:$0xff] %v553
      %668 = vst [vmem:[%s260 + $0x60] sm:$0xff] %v558
      %669 = vst [vmem:[%s260 + $0x68] sm:$0xff] %v563
      %670 = vst [vmem:[%s260 + $0x70] sm:$0xff] %v568
      %671 = vst [vmem:[%s260 + $0x78] sm:$0xff] %v573
      %672 = vst [vmem:[%s260 + $0x80] sm:$0xff] %v578
      %673 = vst [vmem:[%s260 + $0x88] sm:$0xff] %v583
      %674 = vst [vmem:[%s260 + $0x90] sm:$0xff] %v588
      %675 = vst [vmem:[%s260 + $0x98] sm:$0xff] %v593
      %676 = vst [vmem:[%s260 + $0xa0] sm:$0xff] %v598
      %677 = vst [vmem:[%s260 + $0xa8] sm:$0xff] %v603
      %678 = vst [vmem:[%s260 + $0xb0] sm:$0xff] %v608
      %679 = vst [vmem:[%s260 + $0xb8] sm:$0xff] %v613
      %680 = vst [vmem:[%s260 + $0xc0] sm:$0xff] %v618
      %681 = vst [vmem:[%s260 + $0xc8] sm:$0xff] %v623
      %682 = vst [vmem:[%s260 + $0xd0] sm:$0xff] %v628
      %683 = vst [vmem:[%s260 + $0xd8] sm:$0xff] %v633
      %684 = vst [vmem:[%s260 + $0xe0] sm:$0xff] %v638
      %685 = vst [vmem:[%s260 + $0xe8] sm:$0xff] %v643
      %686 = vst [vmem:[%s260 + $0xf0] sm:$0xff] %v648
      %687 = vst [vmem:[%s260 + $0xf8] sm:$0xff] %v653
      %v688 = vadd.f32 %v498, %v503
      %v689 = vadd.f32 %v688, %v508
      %v690 = vadd.f32 %v689, %v513
      %v691 = vadd.f32 %v690, %v518
      %v692 = vadd.f32 %v691, %v523
      %v693 = vadd.f32 %v692, %v528
      %v694 = vadd.f32 %v693, %v533
      %v695 = vadd.f32 %v694, %v538
      %v696 = vadd.f32 %v695, %v543
      %v697 = vadd.f32 %v696, %v548
      %v698 = vadd.f32 %v697, %v553
      %v699 = vadd.f32 %v698, %v558
      %v700 = vadd.f32 %v699, %v563
      %v701 = vadd.f32 %v700, %v568
      %v702 = vadd.f32 %v701, %v573
      %v703 = vadd.f32 %v702, %v578
      %v704 = vadd.f32 %v703, %v583
      %v705 = vadd.f32 %v704, %v588
      %v706 = vadd.f32 %v705, %v593
      %v707 = vadd.f32 %v706, %v598
      %v708 = vadd.f32 %v707, %v603
      %v709 = vadd.f32 %v708, %v608
      %v710 = vadd.f32 %v709, %v613
      %v711 = vadd.f32 %v710, %v618
      %v712 = vadd.f32 %v711, %v623
      %v713 = vadd.f32 %v712, %v628
      %v714 = vadd.f32 %v713, %v633
      %v715 = vadd.f32 %v714, %v638
      %v716 = vadd.f32 %v715, %v643
      %v717 = vadd.f32 %v716, %v648
      %v718 = vadd.f32 %v717, %v653
      %v719 = vrot.slane %v718, 4
      %v720 = vadd.f32 %v718, %v719
      %v721 = vrot.slane %v720, 2
      %v722 = vadd.f32 %v720, %v721
      %v723 = vrot.slane %v722, 1
      %v724 = vadd.f32 %v722, %v723
      %725 = vst [vmem:[%s265] sm:$0x1] %v724
      %v726 = vmul.f32 %v498, %v498
      %v727 = vmul.f32 %v503, %v503
      %v728 = vmul.f32 %v508, %v508
      %v729 = vmul.f32 %v513, %v513
      %v730 = vmul.f32 %v518, %v518
      %v731 = vmul.f32 %v523, %v523
      %v732 = vmul.f32 %v528, %v528
      %v733 = vmul.f32 %v533, %v533
      %v734 = vmul.f32 %v538, %v538
      %v735 = vmul.f32 %v543, %v543
      %v736 = vmul.f32 %v548, %v548
      %v737 = vmul.f32 %v553, %v553
      %v738 = vmul.f32 %v558, %v558
      %v739 = vmul.f32 %v563, %v563
      %v740 = vmul.f32 %v568, %v568
      %v741 = vmul.f32 %v573, %v573
      %v742 = vmul.f32 %v578, %v578
      %v743 = vmul.f32 %v583, %v583
      %v744 = vmul.f32 %v588, %v588
      %v745 = vmul.f32 %v593, %v593
      %v746 = vmul.f32 %v598, %v598
      %v747 = vmul.f32 %v603, %v603
      %v748 = vmul.f32 %v608, %v608
      %v749 = vmul.f32 %v613, %v613
      %v750 = vmul.f32 %v618, %v618
      %v751 = vmul.f32 %v623, %v623
      %v752 = vmul.f32 %v628, %v628
      %v753 = vmul.f32 %v633, %v633
      %v754 = vmul.f32 %v638, %v638
      %v755 = vmul.f32 %v643, %v643
      %v756 = vmul.f32 %v648, %v648
      %v757 = vmul.f32 %v653, %v653
      %v758 = vadd.f32 %v726, %v727
      %v759 = vadd.f32 %v758, %v728
      %v760 = vadd.f32 %v759, %v729
      %v761 = vadd.f32 %v760, %v730
      %v762 = vadd.f32 %v761, %v731
      %v763 = vadd.f32 %v762, %v732
      %v764 = vadd.f32 %v763, %v733
      %v765 = vadd.f32 %v764, %v734
      %v766 = vadd.f32 %v765, %v735
      %v767 = vadd.f32 %v766, %v736
      %v768 = vadd.f32 %v767, %v737
      %v769 = vadd.f32 %v768, %v738
      %v770 = vadd.f32 %v769, %v739
      %v771 = vadd.f32 %v770, %v740
      %v772 = vadd.f32 %v771, %v741
      %v773 = vadd.f32 %v772, %v742
      %v774 = vadd.f32 %v773, %v743
      %v775 = vadd.f32 %v774, %v744
      %v776 = vadd.f32 %v775, %v745
      %v777 = vadd.f32 %v776, %v746
      %v778 = vadd.f32 %v777, %v747
      %v779 = vadd.f32 %v778, %v748
      %v780 = vadd.f32 %v779, %v749
      %v781 = vadd.f32 %v780, %v750
      %v782 = vadd.f32 %v781, %v751
      %v783 = vadd.f32 %v782, %v752
      %v784 = vadd.f32 %v783, %v753
      %v785 = vadd.f32 %v784, %v754
      %v786 = vadd.f32 %v785, %v755
      %v787 = vadd.f32 %v786, %v756
      %v788 = vadd.f32 %v787, %v757
      %v789 = vrot.slane %v788, 4
      %v790 = vadd.f32 %v788, %v789
      %v791 = vrot.slane %v790, 2
      %v792 = vadd.f32 %v790, %v791
      %v793 = vrot.slane %v792, 1
      %v794 = vadd.f32 %v792, %v793
      %795 = vst [vmem:[%s265 + $0x1] sm:$0x1] %v794
      %s796 = smul.u32 32, %s18
      %p797 = scmp.lt.s32.totalorder %s796, 63
      %s798 = scalar_select %p797, %s796, 63
      %s799 = smul.addr %s798, 8
      %s800 = scalar_lea.vmem %s5, %s799
      %p801 = scmp.lt.s32.totalorder %s18, 1
      %s802 = scalar_select %p801, %s18, 1
      %s803 = smul.addr %s802, 2
      %s804 = scalar_lea.vmem %s6, %s803
      // Predicated region
      $region41: #{resblock_pallas.4} parent=39 // pred_check
        %p805 = pneg %p146
      $region42: #{resblock_pallas.4} parent=39 // pred_check_branch
        %807 = sbr.rel (%p805) target = $region44
      $region43: #{resblock_pallas.4} parent=39 // pred_region
        %s808 = smul.u32 32, %s18
      $region44: #{resblock_pallas.4} parent=39 // pred_fallthru
        _
      // Predicated region
      $region45: #{resblock_pallas.4} parent=39 // pred_check
        %p809 = pneg %p172
      $region46: #{resblock_pallas.4} parent=39 // pred_check_branch
        %811 = sbr.rel (%p809) target = $region48
      $region47: #{resblock_pallas.4} parent=39 // pred_region
        _
      $region48: #{resblock_pallas.4} parent=39 // pred_fallthru
        _
    $region40: #{resblock_pallas.4} parent=5 // pred_fallthru
      _
    %p812 = scmp.le.s32.totalorder 2, %s13
    // Predicated region
    $region49: #{resblock_pallas.4} parent=5 // pred_check
      %p813 = pneg %p812
    $region50: #{resblock_pallas.4} parent=5 // pred_check_branch
      %815 = sbr.rel (%p813) target = $region52
    $region51: #{resblock_pallas.4} parent=5 // pred_region
      %s816 = ssub.s32 %s13, 2
      // Predicated region
      $region53: #{resblock_pallas.4} parent=51 // pred_check
        %p817 = pneg %p152
      $region54: #{resblock_pallas.4} parent=51 // pred_check_branch
        %819 = sbr.rel (%p817) target = $region56
      $region55: #{resblock_pallas.4} parent=51 // pred_region
        %s820 = smul.u32 32, %s19
        %p821 = scmp.lt.s32.totalorder %s820, 63
        %s822 = scalar_select %p821, %s820, 63
        %s823 = smul.addr %s822, 8
        %s824 = scalar_lea.vmem %s5, %s823
      $region56: #{resblock_pallas.4} parent=51 // pred_fallthru
        _
      // Predicated region
      $region57: #{resblock_pallas.4} parent=51 // pred_check
        %p825 = pneg %p178
      $region58: #{resblock_pallas.4} parent=51 // pred_check_branch
        %827 = sbr.rel (%p825) target = $region60
      $region59: #{resblock_pallas.4} parent=51 // pred_region
        %p828 = scmp.lt.s32.totalorder %s19, 1
        %s829 = scalar_select %p828, %s19, 1
        %s830 = smul.addr %s829, 2
        %s831 = scalar_lea.vmem %s6, %s830
      $region60: #{resblock_pallas.4} parent=51 // pred_fallthru
        _
    $region52: #{resblock_pallas.4} parent=5 // pred_fallthru
      _
  $region6: #{resblock_pallas.4} parent=0 // loop_footer
    %s17 = sadd.s32 1, %s13
  $region7: #{resblock_pallas.4} parent=0 // loop_footer_branch
    %12 = sbr.rel target = $region3
  $region8: #{resblock_pallas.4} parent=0 // loop_exit
    _

// kernel: resblock_pallas.3
$region0: #{resblock_pallas.3}
  #allocation0 [shape = 'u32[]', space=smem, size = 0x4, offset = 0x4, fixed_abs, tag = 'smem constant byte address 0x4 - core index']
  #allocation1 [shape = 'u32[144,128]{1,0:T(1,128)}', space=vmem, size = 0x12000, scoped, tag = 'internal scratch']
  #allocation2 [shape = 'f32[10,18,128]{2,1,0:T(8,128)}', space=vmem, size = 0x1e000, scoped, tag = 'scratch operand']
  #allocation3 [shape = 'f32[128,128]{1,0:T(8,128)}', space=vmem, size = 0x10000, scoped, tag = 'scratch operand']
  %s0 = inlined_call_operand.vmem [shape: f32[2,18,18,128], index: 0, kind: input, shape index: {}]
  %s1 = inlined_call_operand.vmem [shape: f32[2,2,2,18,128], index: 1, kind: input, shape index: {}]
  %s2 = inlined_call_operand.vmem [shape: f32[3,3,128,128], index: 2, kind: input, shape index: {}]
  %s3 = inlined_call_operand.vmem [shape: f32[1,128], index: 3, kind: input, shape index: {}]
  %s4 = inlined_call_operand.vmem [shape: f32[512,128], index: 4, kind: output, shape index: {0}]
  %s5 = inlined_call_operand.vmem [shape: f32[4,2,128], index: 5, kind: output, shape index: {1}]
  %6 = xla_tuple %s4, %s5
  %s7 = sld [smem:[#allocation0]]
  $region57: #{resblock_pallas.3} parent=0
    _
  %s9 = ssub.s32 1, %s7
  %s10 = scalar_select 0, %s9, %s7
  loop: start=0, step=1, limit=6
  $region2: #{resblock_pallas.3} parent=0 // loop_pre_header
    _
  $region3: #{resblock_pallas.3} parent=0 // loop_header
    %s12 = sphi 0, %s16
    %p13 = scmp.ge.s32.totalorder %s12, 6
    %s19 = sphi 0, %s31
    %s20 = sphi 0, %s27
    %s21 = sphi 0, %s19
    %s22 = sphi 0, %s20
    %s23 = sphi 0, %s21
    %s24 = sphi 0, %s22
    %s36 = sphi 0, %s38
    %s39 = sphi 0, %s36
    %s40 = sphi 0, %s39
    %s56 = sphi 0, %s40
    %s64 = sphi 0, %s66
    %s67 = sphi 0, %s64
    %s68 = sphi 0, %s67
    %s84 = sphi 0, %s68
    %s88 = sphi 0, %s88
    %s90 = sphi 0, %s88
    %s91 = sphi 0, %s90
    %s105 = sphi 0, %s91
    %s109 = sphi 0, %s109
    %s111 = sphi 0, %s109
    %s112 = sphi 0, %s111
    %s126 = sphi 0, %s112
    %s136 = sphi 0, %s138
    %s139 = sphi 0, %s136
    %s140 = sphi 0, %s139
    %s156 = sphi 0, %s140
    %s166 = sphi 0, %s168
    %s169 = sphi 0, %s166
    %s170 = sphi 0, %s169
    %s186 = sphi 0, %s170
  $region4: #{resblock_pallas.3} parent=0 // loop_header_branch
    %15 = sbr.rel (%p13) target = $region8
  $region5: #{resblock_pallas.3} parent=0 // loop_body
    %s17 = ssub.s32 %s12, 1
    %s18 = ssub.s32 %s12, 2
    %s25 = sadd.s32 1, %s20
    %p26 = scmp.ge.s32.totalorder %s25, 2
    %s27 = scalar_select %p26, 0, %s25
    %s28 = sadd.s32 1, %s19
    %s29 = scalar_select %p26, %s28, %s19
    %p30 = scmp.ge.s32.totalorder %s29, 2
    %s31 = scalar_select %p30, 0, %s29
    %s32 = ssub.s32 %s19, %s31
    %s33 = ssub.s32 %s20, %s27
    %s34 = sor.u32 %s32, %s33
    %p35 = scmp.eq.s32.totalorder %s34, 0
    %s37 = sadd.s32 %s36, 1
    %s38 = scalar_select %p35, %s36, %s37
    %p41 = pneg %p35
    %p42 = scmp.eq.s32.totalorder %s12, 3
    %p43 = por %p41, %p42
    %p44 = scmp.ne.s32.totalorder %s36, %s39
    %p45 = scmp.eq.s32.totalorder %s12, 0
    %p46 = por %p44, %p45
    %p47 = scmp.ne.s32.totalorder %s36, %s39
    %p48 = scmp.eq.s32.totalorder %s17, 3
    %p49 = por %p47, %p48
    %p50 = scmp.ne.s32.totalorder %s39, %s40
    %p51 = scmp.eq.s32.totalorder %s17, 0
    %p52 = por %p50, %p51
    %p53 = scmp.ne.s32.totalorder %s39, %s40
    %p54 = scmp.eq.s32.totalorder %s18, 3
    %p55 = por %p53, %p54
    %p57 = scmp.ne.s32.totalorder %s40, %s56
    %p58 = scmp.eq.s32.totalorder %s18, 0
    %p59 = por %p57, %p58
    %s60 = ssub.s32 %s19, %s31
    %s61 = ssub.s32 %s20, %s27
    %s62 = sor.u32 %s60, %s61
    %p63 = scmp.eq.s32.totalorder %s62, 0
    %s65 = sadd.s32 %s64, 1
    %s66 = scalar_select %p63, %s64, %s65
    %p69 = pneg %p63
    %p70 = scmp.eq.s32.totalorder %s12, 3
    %p71 = por %p69, %p70
    %p72 = scmp.ne.s32.totalorder %s64, %s67
    %p73 = scmp.eq.s32.totalorder %s12, 0
    %p74 = por %p72, %p73
    %p75 = scmp.ne.s32.totalorder %s64, %s67
    %p76 = scmp.eq.s32.totalorder %s17, 3
    %p77 = por %p75, %p76
    %p78 = scmp.ne.s32.totalorder %s67, %s68
    %p79 = scmp.eq.s32.totalorder %s17, 0
    %p80 = por %p78, %p79
    %p81 = scmp.ne.s32.totalorder %s67, %s68
    %p82 = scmp.eq.s32.totalorder %s18, 3
    %p83 = por %p81, %p82
    %p85 = scmp.ne.s32.totalorder %s68, %s84
    %p86 = scmp.eq.s32.totalorder %s18, 0
    %p87 = por %p85, %p86
    %s89 = sadd.s32 %s88, 1
    %p92 = scmp.eq.s32.totalorder %s12, 3
    %p93 = scmp.ne.s32.totalorder %s88, %s90
    %p94 = scmp.eq.s32.totalorder %s12, 0
    %p95 = por %p93, %p94
    %p96 = scmp.ne.s32.totalorder %s88, %s90
    %p97 = scmp.eq.s32.totalorder %s17, 3
    %p98 = por %p96, %p97
    %p99 = scmp.ne.s32.totalorder %s90, %s91
    %p100 = scmp.eq.s32.totalorder %s17, 0
    %p101 = por %p99, %p100
    %p102 = scmp.ne.s32.totalorder %s90, %s91
    %p103 = scmp.eq.s32.totalorder %s18, 3
    %p104 = por %p102, %p103
    %p106 = scmp.ne.s32.totalorder %s91, %s105
    %p107 = scmp.eq.s32.totalorder %s18, 0
    %p108 = por %p106, %p107
    %s110 = sadd.s32 %s109, 1
    %p113 = scmp.eq.s32.totalorder %s12, 3
    %p114 = scmp.ne.s32.totalorder %s109, %s111
    %p115 = scmp.eq.s32.totalorder %s12, 0
    %p116 = por %p114, %p115
    %p117 = scmp.ne.s32.totalorder %s109, %s111
    %p118 = scmp.eq.s32.totalorder %s17, 3
    %p119 = por %p117, %p118
    %p120 = scmp.ne.s32.totalorder %s111, %s112
    %p121 = scmp.eq.s32.totalorder %s17, 0
    %p122 = por %p120, %p121
    %p123 = scmp.ne.s32.totalorder %s111, %s112
    %p124 = scmp.eq.s32.totalorder %s18, 3
    %p125 = por %p123, %p124
    %p127 = scmp.ne.s32.totalorder %s112, %s126
    %p128 = scmp.eq.s32.totalorder %s18, 0
    %p129 = por %p127, %p128
    %s130 = smul.u32 %s19, 2
    %s131 = sadd.s32 %s130, %s20
    %s132 = smul.u32 %s31, 2
    %s133 = sadd.s32 %s132, %s27
    %s134 = ssub.s32 %s131, %s133
    %p135 = scmp.eq.s32.totalorder %s134, 0
    %s137 = sadd.s32 %s136, 1
    %s138 = scalar_select %p135, %s136, %s137
    %p141 = pneg %p135
    %p142 = scmp.eq.s32.totalorder %s12, 3
    %p143 = por %p141, %p142
    %p144 = scmp.ne.s32.totalorder %s136, %s139
    %p145 = scmp.eq.s32.totalorder %s12, 0
    %p146 = por %p144, %p145
    %p147 = scmp.ne.s32.totalorder %s136, %s139
    %p148 = scmp.eq.s32.totalorder %s17, 3
    %p149 = por %p147, %p148
    %p150 = scmp.ne.s32.totalorder %s139, %s140
    %p151 = scmp.eq.s32.totalorder %s17, 0
    %p152 = por %p150, %p151
    %p153 = scmp.ne.s32.totalorder %s139, %s140
    %p154 = scmp.eq.s32.totalorder %s18, 3
    %p155 = por %p153, %p154
    %p157 = scmp.ne.s32.totalorder %s140, %s156
    %p158 = scmp.eq.s32.totalorder %s18, 0
    %p159 = por %p157, %p158
    %s160 = smul.u32 %s19, 2
    %s161 = sadd.s32 %s160, %s20
    %s162 = smul.u32 %s31, 2
    %s163 = sadd.s32 %s162, %s27
    %s164 = ssub.s32 %s161, %s163
    %p165 = scmp.eq.s32.totalorder %s164, 0
    %s167 = sadd.s32 %s166, 1
    %s168 = scalar_select %p165, %s166, %s167
    %p171 = pneg %p165
    %p172 = scmp.eq.s32.totalorder %s12, 3
    %p173 = por %p171, %p172
    %p174 = scmp.ne.s32.totalorder %s166, %s169
    %p175 = scmp.eq.s32.totalorder %s12, 0
    %p176 = por %p174, %p175
    %p177 = scmp.ne.s32.totalorder %s166, %s169
    %p178 = scmp.eq.s32.totalorder %s17, 3
    %p179 = por %p177, %p178
    %p180 = scmp.ne.s32.totalorder %s169, %s170
    %p181 = scmp.eq.s32.totalorder %s17, 0
    %p182 = por %p180, %p181
    %p183 = scmp.ne.s32.totalorder %s169, %s170
    %p184 = scmp.eq.s32.totalorder %s18, 3
    %p185 = por %p183, %p184
    %p187 = scmp.ne.s32.totalorder %s170, %s186
    %p188 = scmp.eq.s32.totalorder %s18, 0
    %p189 = por %p187, %p188
    %p190 = scmp.le.s32.totalorder 1, %s12
    %p191 = scmp.lt.s32.totalorder %s12, 5
    %p192 = pnand %p190, %p191
    %p193 = pneg %p192
    // Predicated region
    $region9: #{resblock_pallas.3} parent=5 // pred_check
      _
    $region10: #{resblock_pallas.3} parent=5 // pred_check_branch
      %195 = sbr.rel (%p192) target = $region12
    $region11: #{resblock_pallas.3} parent=5 // pred_region
      %s196 = ssub.s32 %s12, 1
      // Predicated region
      $region13: #{resblock_pallas.3} parent=11 // pred_check
        %p197 = pneg %p101
      $region14: #{resblock_pallas.3} parent=11 // pred_check_branch
        %199 = sbr.rel (%p197) target = $region16
      $region15: #{resblock_pallas.3} parent=11 // pred_region
        _
      $region16: #{resblock_pallas.3} parent=11 // pred_fallthru
        _
      // Predicated region
      $region17: #{resblock_pallas.3} parent=11 // pred_check
        %p200 = pneg %p122
      $region18: #{resblock_pallas.3} parent=11 // pred_check_branch
        %202 = sbr.rel (%p200) target = $region20
      $region19: #{resblock_pallas.3} parent=11 // pred_region
        _
      $region20: #{resblock_pallas.3} parent=11 // pred_fallthru
        _
    $region12: #{resblock_pallas.3} parent=5 // pred_fallthru
      _
    %p203 = scmp.lt.s32.totalorder %s12, 4
    // Predicated region
    $region21: #{resblock_pallas.3} parent=5 // pred_check
      %p204 = pneg %p203
    $region22: #{resblock_pallas.3} parent=5 // pred_check_branch
      %206 = sbr.rel (%p204) target = $region24
    $region23: #{resblock_pallas.3} parent=5 // pred_region
      // Predicated region
      $region25: #{resblock_pallas.3} parent=23 // pred_check
        %p207 = pneg %p46
      $region26: #{resblock_pallas.3} parent=23 // pred_check_branch
        %209 = sbr.rel (%p207) target = $region28
      $region27: #{resblock_pallas.3} parent=23 // pred_region
        %s210 = smul.u32 8, %s20
        %s211 = ssub.s32 18, %s210
        %p212 = scmp.lt.s32.totalorder %s211, 8
        %s213 = scalar_select %p212, %s211, 8
        %s214 = smul.u32 128, %s213
        %s215 = smul.u32 %s214, 3
        %p216 = scmp.lt.s32.totalorder %s19, 1
        %s217 = scalar_select %p216, %s19, 1
        %p218 = scmp.lt.s32.totalorder %s210, 17
        %s219 = scalar_select %p218, %s210, 17
        %s220 = smul.addr %s219, 3
        %s221 = smul.addr %s217, 54
        %s222 = sadd.s32 %s220, %s221
        %s223 = smul.addr %s222, 8
        %s224 = scalar_lea.vmem %s0, %s223
        %s225 = smul.u32 8, %s20
        %s226 = ssub.s32 18, %s225
        %p227 = scmp.lt.s32.totalorder %s226, 8
        %s228 = scalar_select %p227, %s226, 8
        %s229 = smul.u32 128, %s228
        %s230 = smul.u32 %s229, 3
      $region28: #{resblock_pallas.3} parent=23 // pred_fallthru
        _
      // Predicated region
      $region29: #{resblock_pallas.3} parent=23 // pred_check
        %p231 = pneg %p74
      $region30: #{resblock_pallas.3} parent=23 // pred_check_branch
        %233 = sbr.rel (%p231) target = $region32
      $region31: #{resblock_pallas.3} parent=23 // pred_region
        %p234 = scmp.lt.s32.totalorder %s19, 1
        %s235 = scalar_select %p234, %s19, 1
        %p236 = scmp.lt.s32.totalorder %s20, 1
        %s237 = scalar_select %p236, %s20, 1
        %s238 = smul.addr %s237, 6
        %s239 = smul.addr %s235, 12
        %s240 = sadd.s32 %s238, %s239
        %s241 = smul.addr %s240, 8
        %s242 = scalar_lea.vmem %s1, %s241
      $region32: #{resblock_pallas.3} parent=23 // pred_fallthru
        _
    $region24: #{resblock_pallas.3} parent=5 // pred_fallthru
      _
    %p243 = scmp.le.s32.totalorder 1, %s12
    %p244 = scmp.lt.s32.totalorder %s12, 5
    %p245 = pnand %p243, %p244
    %p246 = pneg %p245
    // Predicated region
    $region33: #{resblock_pallas.3} parent=5 // pred_check
      _
    $region34: #{resblock_pallas.3} parent=5 // pred_check_branch
      %248 = sbr.rel (%p245) target = $region36
    $region35: #{resblock_pallas.3} parent=5 // pred_region
      %s249 = ssub.s32 %s12, 1
      %s250 = smul.u32 8, %s22
      %s251 = ssub.s32 18, %s250
      %p252 = scmp.lt.s32.totalorder %s251, 8
      %s253 = scalar_select %p252, %s251, 8
      %s254 = smul.u32 128, %s253
      %s255 = smul.u32 %s254, 3
      %p256 = scmp.lt.s32.totalorder %s21, 1
      %s257 = scalar_select %p256, %s21, 1
      %p258 = scmp.lt.s32.totalorder %s250, 17
      %s259 = scalar_select %p258, %s250, 17
      %s260 = smul.addr %s259, 3
      %s261 = smul.addr %s257, 54
      %s262 = sadd.s32 %s260, %s261
      %s263 = smul.addr %s262, 8
      %s264 = scalar_lea.vmem %s0, %s263
      %p265 = pneg %p52
      %p266 = pneg %p49
      %p267 = scmp.lt.s32.totalorder %s21, 1
      %s268 = scalar_select %p267, %s21, 1
      %p269 = scmp.lt.s32.totalorder %s22, 1
      %s270 = scalar_select %p269, %s22, 1
      %s271 = smul.addr %s270, 6
      %s272 = smul.addr %s268, 12
      %s273 = sadd.s32 %s271, %s272
      %s274 = smul.addr %s273, 8
      %s275 = scalar_lea.vmem %s1, %s274
      %p276 = pneg %p80
      %p277 = pneg %p77
      %p278 = pneg %p101
      %p279 = pneg %p98
      %p280 = pneg %p122
      %p281 = pneg %p119
      %p282 = pneg %p152
      %p283 = pneg %p149
      %s284 = smul.u32 %s21, 2
      %s285 = sadd.s32 %s284, %s22
      %s286 = smul.u32 16, %s285
      %p287 = scmp.lt.s32.totalorder %s286, 63
      %s288 = scalar_select %p287, %s286, 63
      %s289 = smul.addr %s288, 8
      %s290 = scalar_lea.vmem %s4, %s289
      %p291 = pneg %p182
      %p292 = pneg %p179
      %s293 = smul.u32 %s21, 2
      %s294 = sadd.s32 %s293, %s22
      %p295 = scmp.lt.s32.totalorder %s294, 3
      %s296 = scalar_select %p295, %s294, 3
      %s297 = smul.addr %s296, 2
      %s298 = scalar_lea.vmem %s5, %s297
      %s299 = smul.u32 8, %s22
      %s300 = ssub.s32 18, %s299
      %p301 = scmp.lt.s32.totalorder %s300, 8
      %s302 = scalar_select %p301, %s300, 8
      %s303 = smul.u32 128, %s302
      %s304 = smul.u32 %s303, 3
      %p305 = scmp.lt.s32.totalorder %s21, 1
      %s306 = scalar_select %p305, %s21, 1
      %p307 = scmp.lt.s32.totalorder %s299, 17
      %s308 = scalar_select %p307, %s299, 17
      %s309 = smul.addr %s308, 3
      %s310 = smul.addr %s306, 54
      %s311 = sadd.s32 %s309, %s310
      %s312 = smul.addr %s311, 8
      %s313 = scalar_lea.vmem %s0, %s312
      %s314 = smul.u32 8, %s22
      %s315 = ssub.s32 18, %s314
      %p316 = scmp.lt.s32.totalorder %s315, 8
      %s317 = scalar_select %p316, %s315, 8
      %s318 = smul.u32 128, %s317
      %s319 = smul.u32 %s318, 3
      %p320 = scmp.lt.s32.totalorder %s21, 1
      %s321 = scalar_select %p320, %s21, 1
      %p322 = scmp.lt.s32.totalorder %s22, 1
      %s323 = scalar_select %p322, %s22, 1
      %s324 = smul.addr %s323, 6
      %s325 = smul.addr %s321, 12
      %s326 = sadd.s32 %s324, %s325
      %s327 = smul.addr %s326, 8
      %s328 = scalar_lea.vmem %s1, %s327
      %s329 = smul.u32 %s21, 2
      %s330 = sadd.s32 %s329, %s22
      %s331 = smul.u32 16, %s330
      %p332 = scmp.lt.s32.totalorder %s331, 63
      %s333 = scalar_select %p332, %s331, 63
      %s334 = smul.addr %s333, 8
      %s335 = scalar_lea.vmem %s4, %s334
      %s336 = smul.u32 %s21, 2
      %s337 = sadd.s32 %s336, %s22
      %s338 = smul.u32 16, %s337
      %s339 = smul.u32 %s21, 2
      %s340 = sadd.s32 %s339, %s22
      %p341 = scmp.lt.s32.totalorder %s340, 3
      %s342 = scalar_select %p341, %s340, 3
      %s343 = smul.addr %s342, 2
      %s344 = scalar_lea.vmem %s5, %s343
      %s345 = smul.u32 %s21, 2
      %s346 = sadd.s32 %s345, %s22
      %v347 = vld [vmem:[%s313] sm:$0xff]
      %v348 = vld [vmem:[%s313 + $0x8] sm:$0xff]
      %v349 = vld [vmem:[%s313 + $0x10] sm:$0x3]
      %v350 = vld [vmem:[%s313 + $0x18] sm:$0xff]
      %v351 = vld [vmem:[%s313 + $0x20] sm:$0xff]
      %v352 = vld [vmem:[%s313 + $0x28] sm:$0x3]
      %v353 = vld [vmem:[%s313 + $0x30] sm:$0xff]
      %v354 = vld [vmem:[%s313 + $0x38] sm:$0xff]
      %v355 = vld [vmem:[%s313 + $0x40] sm:$0x3]
      %v356 = vld [vmem:[%s313 + $0x48] sm:$0xff]
      %v357 = vld [vmem:[%s313 + $0x50] sm:$0xff]
      %v358 = vld [vmem:[%s313 + $0x58] sm:$0x3]
      %v359 = vld [vmem:[%s313 + $0x60] sm:$0xff]
      %v360 = vld [vmem:[%s313 + $0x68] sm:$0xff]
      %v361 = vld [vmem:[%s313 + $0x70] sm:$0x3]
      %v362 = vld [vmem:[%s313 + $0x78] sm:$0xff]
      %v363 = vld [vmem:[%s313 + $0x80] sm:$0xff]
      %v364 = vld [vmem:[%s313 + $0x88] sm:$0x3]
      %v365 = vld [vmem:[%s313 + $0x90] sm:$0xff]
      %v366 = vld [vmem:[%s313 + $0x98] sm:$0xff]
      %v367 = vld [vmem:[%s313 + $0xa0] sm:$0x3]
      %v368 = vld [vmem:[%s313 + $0xa8] sm:$0xff]
      %v369 = vld [vmem:[%s313 + $0xb0] sm:$0xff]
      %v370 = vld [vmem:[%s313 + $0xb8] sm:$0x3]
      %v371 = vmax.f32 %v347, 0.0
      %v372 = vmax.f32 %v348, 0.0
      %v373 = vmax.f32 %v349, 0.0
      %v374 = vmax.f32 %v350, 0.0
      %v375 = vmax.f32 %v351, 0.0
      %v376 = vmax.f32 %v352, 0.0
      %v377 = vmax.f32 %v353, 0.0
      %v378 = vmax.f32 %v354, 0.0
      %v379 = vmax.f32 %v355, 0.0
      %v380 = vmax.f32 %v356, 0.0
      %v381 = vmax.f32 %v357, 0.0
      %v382 = vmax.f32 %v358, 0.0
      %v383 = vmax.f32 %v359, 0.0
      %v384 = vmax.f32 %v360, 0.0
      %v385 = vmax.f32 %v361, 0.0
      %v386 = vmax.f32 %v362, 0.0
      %v387 = vmax.f32 %v363, 0.0
      %v388 = vmax.f32 %v364, 0.0
      %v389 = vmax.f32 %v365, 0.0
      %v390 = vmax.f32 %v366, 0.0
      %v391 = vmax.f32 %v367, 0.0
      %v392 = vmax.f32 %v368, 0.0
      %v393 = vmax.f32 %v369, 0.0
      %v394 = vmax.f32 %v370, 0.0
      %395 = vst [vmem:[#allocation2] sm:$0xff] %v371
      %396 = vst [vmem:[#allocation2 + $0x8] sm:$0xff] %v372
      %397 = vst [vmem:[#allocation2 + $0x10] sm:$0x3] %v373
      %398 = vst [vmem:[#allocation2 + $0x18] sm:$0xff] %v374
      %399 = vst [vmem:[#allocation2 + $0x20] sm:$0xff] %v375
      %400 = vst [vmem:[#allocation2 + $0x28] sm:$0x3] %v376
      %401 = vst [vmem:[#allocation2 + $0x30] sm:$0xff] %v377
      %402 = vst [vmem:[#allocation2 + $0x38] sm:$0xff] %v378
      %403 = vst [vmem:[#allocation2 + $0x40] sm:$0x3] %v379
      %404 = vst [vmem:[#allocation2 + $0x48] sm:$0xff] %v380
      %405 = vst [vmem:[#allocation2 + $0x50] sm:$0xff] %v381
      %406 = vst [vmem:[#allocation2 + $0x58] sm:$0x3] %v382
      %407 = vst [vmem:[#allocation2 + $0x60] sm:$0xff] %v383
      %408 = vst [vmem:[#allocation2 + $0x68] sm:$0xff] %v384
      %409 = vst [vmem:[#allocation2 + $0x70] sm:$0x3] %v385
      %410 = vst [vmem:[#allocation2 + $0x78] sm:$0xff] %v386
      %411 = vst [vmem:[#allocation2 + $0x80] sm:$0xff] %v387
      %412 = vst [vmem:[#allocation2 + $0x88] sm:$0x3] %v388
      %413 = vst [vmem:[#allocation2 + $0x90] sm:$0xff] %v389
      %414 = vst [vmem:[#allocation2 + $0x98] sm:$0xff] %v390
      %415 = vst [vmem:[#allocation2 + $0xa0] sm:$0x3] %v391
      %416 = vst [vmem:[#allocation2 + $0xa8] sm:$0xff] %v392
      %417 = vst [vmem:[#allocation2 + $0xb0] sm:$0xff] %v393
      %418 = vst [vmem:[#allocation2 + $0xb8] sm:$0x3] %v394
      %v419 = vld [vmem:[%s328] sm:$0xff]
      %v420 = vld [vmem:[%s328 + $0x8] sm:$0xff]
      %v421 = vld [vmem:[%s328 + $0x10] sm:$0x3]
      %v422 = vld [vmem:[%s328 + $0x18] sm:$0xff]
      %v423 = vld [vmem:[%s328 + $0x20] sm:$0xff]
      %v424 = vld [vmem:[%s328 + $0x28] sm:$0x3]
      %v425 = vmax.f32 %v419, 0.0
      %v426 = vmax.f32 %v420, 0.0
      %v427 = vmax.f32 %v421, 0.0
      %v428 = vmax.f32 %v422, 0.0
      %v429 = vmax.f32 %v423, 0.0
      %v430 = vmax.f32 %v424, 0.0
      %s431 = scalar_lea.vmem [#allocation2], 192
      %432 = vst [vmem:[%s431] sm:$0xff] %v425
      %433 = vst [vmem:[%s431 + $0x8] sm:$0xff] %v426
      %434 = vst [vmem:[%s431 + $0x10] sm:$0x3] %v427
      %435 = vst [vmem:[%s431 + $0x18] sm:$0xff] %v428
      %436 = vst [vmem:[%s431 + $0x20] sm:$0xff] %v429
      %437 = vst [vmem:[%s431 + $0x28] sm:$0x3] %v430
      %v438 = vld [vmem:[#allocation2] sm:$0xff]
      %v439 = vld [vmem:[#allocation2 + $0x8] sm:$0xff]
      %v440 = vld [vmem:[#allocation2 + $0x10] sm:$0x3]
      %v441 = vld [vmem:[#allocation2 + $0x18] sm:$0xff]
      %v442 = vld [vmem:[#allocation2 + $0x20] sm:$0xff]
      %v443 = vld [vmem:[#allocation2 + $0x28] sm:$0x3]
      %v444 = vld [vmem:[#allocation2 + $0x30] sm:$0xff]
      %v445 = vld [vmem:[#allocation2 + $0x38] sm:$0xff]
      %v446 = vld [vmem:[#allocation2 + $0x40] sm:$0x3]
      %v447 = vld [vmem:[#allocation2 + $0x48] sm:$0xff]
      %v448 = vld [vmem:[#allocation2 + $0x50] sm:$0xff]
      %v449 = vld [vmem:[#allocation2 + $0x58] sm:$0x3]
      %v450 = vld [vmem:[#allocation2 + $0x60] sm:$0xff]
      %v451 = vld [vmem:[#allocation2 + $0x68] sm:$0xff]
      %v452 = vld [vmem:[#allocation2 + $0x70] sm:$0x3]
      %v453 = vld [vmem:[#allocation2 + $0x78] sm:$0xff]
      %v454 = vld [vmem:[#allocation2 + $0x80] sm:$0xff]
      %v455 = vld [vmem:[#allocation2 + $0x88] sm:$0x3]
      %v456 = vld [vmem:[#allocation2 + $0x90] sm:$0xff]
      %v457 = vld [vmem:[#allocation2 + $0x98] sm:$0xff]
      %v458 = vld [vmem:[#allocation2 + $0xa0] sm:$0x3]
      %v459 = vld [vmem:[#allocation2 + $0xa8] sm:$0xff]
      %v460 = vld [vmem:[#allocation2 + $0xb0] sm:$0xff]
      %v461 = vld [vmem:[#allocation2 + $0xb8] sm:$0x3]
      %v462 = vld [vmem:[#allocation2 + $0xc0] sm:$0xff]
      %v463 = vld [vmem:[#allocation2 + $0xc8] sm:$0xff]
      %v464 = vld [vmem:[#allocation2 + $0xd0] sm:$0x3]
      %v465 = vld [vmem:[#allocation2 + $0xd8] sm:$0xff]
      %v466 = vld [vmem:[#allocation2 + $0xe0] sm:$0xff]
      %v467 = vld [vmem:[#allocation2 + $0xe8] sm:$0x3]
      %468 = vst [vmem:[#allocation3] sm:$0xff] 0.0
      %469 = vst [vmem:[#allocation3 + $0x8] sm:$0xff] 0.0
      %470 = vst [vmem:[#allocation3 + $0x10] sm:$0xff] 0.0
      %471 = vst [vmem:[#allocation3 + $0x18] sm:$0xff] 0.0
      %472 = vst [vmem:[#allocation3 + $0x20] sm:$0xff] 0.0
      %473 = vst [vmem:[#allocation3 + $0x28] sm:$0xff] 0.0
      %474 = vst [vmem:[#allocation3 + $0x30] sm:$0xff] 0.0
      %475 = vst [vmem:[#allocation3 + $0x38] sm:$0xff] 0.0
      %476 = vst [vmem:[#allocation3 + $0x40] sm:$0xff] 0.0
      %477 = vst [vmem:[#allocation3 + $0x48] sm:$0xff] 0.0
      %478 = vst [vmem:[#allocation3 + $0x50] sm:$0xff] 0.0
      %479 = vst [vmem:[#allocation3 + $0x58] sm:$0xff] 0.0
      %480 = vst [vmem:[#allocation3 + $0x60] sm:$0xff] 0.0
      %481 = vst [vmem:[#allocation3 + $0x68] sm:$0xff] 0.0
      %482 = vst [vmem:[#allocation3 + $0x70] sm:$0xff] 0.0
      %483 = vst [vmem:[#allocation3 + $0x78] sm:$0xff] 0.0
      %v484 = vld [vmem:[#allocation3] sm:$0xff]
      %v485 = vld [vmem:[#allocation3 + $0x8] sm:$0xff]
      %v486 = vld [vmem:[#allocation3 + $0x10] sm:$0xff]
      %v487 = vld [vmem:[#allocation3 + $0x18] sm:$0xff]
      %v488 = vld [vmem:[#allocation3 + $0x20] sm:$0xff]
      %v489 = vld [vmem:[#allocation3 + $0x28] sm:$0xff]
      %v490 = vld [vmem:[#allocation3 + $0x30] sm:$0xff]
      %v491 = vld [vmem:[#allocation3 + $0x38] sm:$0xff]
      %v492 = vld [vmem:[#allocation3 + $0x40] sm:$0xff]
      %v493 = vld [vmem:[#allocation3 + $0x48] sm:$0xff]
      %v494 = vld [vmem:[#allocation3 + $0x50] sm:$0xff]
      %v495 = vld [vmem:[#allocation3 + $0x58] sm:$0xff]
      %v496 = vld [vmem:[#allocation3 + $0x60] sm:$0xff]
      %v497 = vld [vmem:[#allocation3 + $0x68] sm:$0xff]
      %v498 = vld [vmem:[#allocation3 + $0x70] sm:$0xff]
      %v499 = vld [vmem:[#allocation3 + $0x78] sm:$0xff]
      %v500 = vld [vmem:[%s2] sm:$0xff]
      %v501 = vld [vmem:[%s2 + $0x8] sm:$0xff]
      %v502 = vld [vmem:[%s2 + $0x10] sm:$0xff]
      %v503 = vld [vmem:[%s2 + $0x18] sm:$0xff]
      %v504 = vld [vmem:[%s2 + $0x20] sm:$0xff]
      %v505 = vld [vmem:[%s2 + $0x28] sm:$0xff]
      %v506 = vld [vmem:[%s2 + $0x30] sm:$0xff]
      %v507 = vld [vmem:[%s2 + $0x38] sm:$0xff]
      %v508 = vld [vmem:[%s2 + $0x40] sm:$0xff]
      %v509 = vld [vmem:[%s2 + $0x48] sm:$0xff]
      %v510 = vld [vmem:[%s2 + $0x50] sm:$0xff]
      %v511 = vld [vmem:[%s2 + $0x58] sm:$0xff]
      %v512 = vld [vmem:[%s2 + $0x60] sm:$0xff]
      %v513 = vld [vmem:[%s2 + $0x68] sm:$0xff]
      %v514 = vld [vmem:[%s2 + $0x70] sm:$0xff]
      %v515 = vld [vmem:[%s2 + $0x78] sm:$0xff]
      %516 = vmatprep.subr.mxu0 0.0
      %517 = vmatpush1.msra.mxu0 %v500
      %518 = vmatprep.subr.mxu0 0.0
      %519 = vmatpush1.msra.mxu0 %v501
      %520 = vmatprep.subr.mxu0 0.0
      %521 = vmatpush1.msra.mxu0 %v502
      %522 = vmatprep.subr.mxu0 0.0
      %523 = vmatpush1.msra.mxu0 %v503
      %524 = vmatprep.subr.mxu0 0.0
      %525 = vmatpush1.msra.mxu0 %v504
      %526 = vmatprep.subr.mxu0 0.0
      %527 = vmatpush1.msra.mxu0 %v505
      %528 = vmatprep.subr.mxu0 0.0
      %529 = vmatpush1.msra.mxu0 %v506
      %530 = vmatprep.subr.mxu0 0.0
      %531 = vmatpush1.msra.mxu0 %v507
      %532 = vmatprep.subr.mxu0 0.0
      %533 = vmatpush1.msra.mxu0 %v508
      %534 = vmatprep.subr.mxu0 0.0
      %535 = vmatpush1.msra.mxu0 %v509
      %536 = vmatprep.subr.mxu0 0.0
      %537 = vmatpush1.msra.mxu0 %v510
      %538 = vmatprep.subr.mxu0 0.0
      %539 = vmatpush1.msra.mxu0 %v511
      %540 = vmatprep.subr.mxu0 0.0
      %541 = vmatpush1.msra.mxu0 %v512
      %542 = vmatprep.subr.mxu0 0.0
      %543 = vmatpush1.msra.mxu0 %v513
      %544 = vmatprep.subr.mxu0 0.0
      %545 = vmatpush1.msra.mxu0 %v514
      %546 = vmatprep.subr.mxu0 0.0
      %547 = vmatpush1.msra.mxu0 %v515
      %548 = vmatprep.subr.mxu0 0.0
      %549 = vmatpush1.msra.mxu0 0.0
      %550 = vmatprep.subr.mxu0 0.0
      %551 = vmatpush1.msra.mxu0 0.0
      %552 = vmatprep.subr.mxu0 0.0
      %553 = vmatpush1.msra.mxu0 0.0
      %554 = vmatprep.subr.mxu0 0.0
      %555 = vmatpush1.msra.mxu0 0.0
      %556 = vmatprep.subr.mxu0 0.0
      %557 = vmatpush1.msra.mxu0 0.0
      %558 = vmatprep.subr.mxu0 0.0
      %559 = vmatpush1.msra.mxu0 0.0
      %560 = vmatprep.subr.mxu0 0.0
      %561 = vmatpush1.msra.mxu0 0.0
      %562 = vmatprep.subr.mxu0 0.0
      %563 = vmatpush1.msra.mxu0 0.0
      %564 = vmatprep.subr.mxu0 0.0
      %565 = vmatpush1.msra.mxu0 0.0
      %566 = vmatprep.subr.mxu0 0.0
      %567 = vmatpush1.msra.mxu0 0.0
      %568 = vmatprep.subr.mxu0 0.0
      %569 = vmatpush1.msra.mxu0 0.0
      %570 = vmatprep.subr.mxu0 0.0
      %571 = vmatpush1.msra.mxu0 0.0
      %572 = vmatprep.subr.mxu0 0.0
      %573 = vmatpush1.msra.mxu0 0.0
      %574 = vmatprep.subr.mxu0 0.0
      %575 = vmatpush1.msra.mxu0 0.0
      %576 = vmatprep.subr.mxu0 0.0
      %577 = vmatpush1.msra.mxu0 0.0
      %578 = vmatprep.subr.mxu0 0.0
      %579 = vmatpush1.msra.mxu0 0.0
      %580 = vmatprep.mubr.f32.mxu0 0.0
      %581 = vmatmul.mubr.f32.gmra.mrb[0].mxu0 %v438
      %v582 = vpop.f32.mrb[0].mxu0
      %v583 = vadd.f32 0.0, %v582
      %v584 = vpop.f32.mrb[0].mxu0
      %585 = vmatprep.mubr.f32.mxu0 0.0
      %586 = vmatmul.mubr.f32.gmra.mrb[0].mxu0 %v439
      %v587 = vpop.f32.mrb[0].mxu0
      %v588 = vadd.f32 0.0, %v587
      %v589 = vpop.f32.mrb[0].mxu0
      %590 = vmatprep.mubr.f32.mxu0 0.0
      %591 = vmatmul.mubr.f32.gmra.mrb[0].mxu0 %v441
      %v592 = vpop.f32.mrb[0].mxu0
      %v593 = vadd.f32 0.0, %v592
      %v594 = vpop.f32.mrb[0].mxu0
      %595 = vmatprep.mubr.f32.mxu0 0.0
      %596 = vmatmul.mubr.f32.gmra.mrb[0].mxu0 %v442
      %v597 = vpop.f32.mrb[0].mxu0
      %v598 = vadd.f32 0.0, %v597
      %v599 = vpop.f32.mrb[0].mxu0
      %600 = vmatprep.mubr.f32.mxu0 0.0
      %601 = vmatmul.mubr.f32.gmra.mrb[0].mxu0 %v444
      %v602 = vpop.f32.mrb[0].mxu0
      %v603 = vadd.f32 0.0, %v602
      %v604 = vpop.f32.mrb[0].mxu0
      %605 = vmatprep.mubr.f32.mxu0 0.0
      %606 = vmatmul.mubr.f32.gmra.mrb[0].mxu0 %v445
      %v607 = vpop.f32.mrb[0].mxu0
      %v608 = vadd.f32 0.0, %v607
      %v609 = vpop.f32.mrb[0].mxu0
      %610 = vmatprep.mubr.f32.mxu0 0.0
      %611 = vmatmul.mubr.f32.gmra.mrb[0].mxu0 %v447
      %v612 = vpop.f32.mrb[0].mxu0
      %v613 = vadd.f32 0.0, %v612
      %v614 = vpop.f32.mrb[0].mxu0
      %615 = vmatprep.mubr.f32.mxu0 0.0
      %616 = vmatmul.mubr.f32.gmra.mrb[0].mxu0 %v448
      %v617 = vpop.f32.mrb[0].mxu0
      %v618 = vadd.f32 0.0, %v617
      %v619 = vpop.f32.mrb[0].mxu0
      %620 = vmatprep.mubr.f32.mxu0 0.0
      %621 = vmatmul.mubr.f32.gmra.mrb[0].mxu0 %v450
      %v622 = vpop.f32.mrb[0].mxu0
      %v623 = vadd.f32 0.0, %v622
      %v624 = vpop.f32.mrb[0].mxu0
      %625 = vmatprep.mubr.f32.mxu0 0.0
      %626 = vmatmul.mubr.f32.gmra.mrb[0].mxu0 %v451
      %v627 = vpop.f32.mrb[0].mxu0
      %v628 = vadd.f32 0.0, %v627
      %v629 = vpop.f32.mrb[0].mxu0
      %630 = vmatprep.mubr.f32.mxu0 0.0
      %631 = vmatmul.mubr.f32.gmra.mrb[0].mxu0 %v453
      %v632 = vpop.f32.mrb[0].mxu0
      %v633 = vadd.f32 0.0, %v632
      %v634 = vpop.f32.mrb[0].mxu0
      %635 = vmatprep.mubr.f32.mxu0 0.0
      %636 = vmatmul.mubr.f32.gmra.mrb[0].mxu0 %v454
      %v637 = vpop.f32.mrb[0].mxu0
      %v638 = vadd.f32 0.0, %v637
      %v639 = vpop.f32.mrb[0].mxu0
      %640 = vmatprep.mubr.f32.mxu0 0.0
      %641 = vmatmul.mubr.f32.gmra.mrb[0].mxu0 %v456
      %v642 = vpop.f32.mrb[0].mxu0
      %v643 = vadd.f32 0.0, %v642
      %v644 = vpop.f32.mrb[0].mxu0
      %645 = vmatprep.mubr.f32.mxu0 0.0
      %646 = vmatmul.mubr.f32.gmra.mrb[0].mxu0 %v457
      %v647 = vpop.f32.mrb[0].mxu0
      %v648 = vadd.f32 0.0, %v647
      %v649 = vpop.f32.mrb[0].mxu0
      %650 = vmatprep.mubr.f32.mxu0 0.0
      %651 = vmatmul.mubr.f32.gmra.mrb[0].mxu0 %v459
      %v652 = vpop.f32.mrb[0].mxu0
      %v653 = vadd.f32 0.0, %v652
      %v654 = vpop.f32.mrb[0].mxu0
      %655 = vmatprep.mubr.f32.mxu0 0.0
      %656 = vmatmul.mubr.f32.gmra.mrb[0].mxu0 %v460
      %v657 = vpop.f32.mrb[0].mxu0
      %v658 = vadd.f32 0.0, %v657
      %v659 = vpop.f32.mrb[0].mxu0
      %660 = vdwg.mxu0
      %v661 = vadd.f32 %v484, %v583
      %v662 = vadd.f32 %v485, %v588
      %v663 = vadd.f32 %v486, %v593
      %v664 = vadd.f32 %v487, %v598
      %v665 = vadd.f32 %v488, %v603
      %v666 = vadd.f32 %v489, %v608
      %v667 = vadd.f32 %v490, %v613
      %v668 = vadd.f32 %v491, %v618
      %v669 = vadd.f32 %v492, %v623
      %v670 = vadd.f32 %v493, %v628
      %v671 = vadd.f32 %v494, %v633
      %v672 = vadd.f32 %v495, %v638
      %v673 = vadd.f32 %v496, %v643
      %v674 = vadd.f32 %v497, %v648
      %v675 = vadd.f32 %v498, %v653
      %v676 = vadd.f32 %v499, %v658
      %677 = vst [vmem:[#allocation3] sm:$0xff] %v661
      %678 = vst [vmem:[#allocation3 + $0x8] sm:$0xff] %v662
      %679 = vst [vmem:[#allocation3 + $0x10] sm:$0xff] %v663
      %680 = vst [vmem:[#allocation3 + $0x18] sm:$0xff] %v664
      %681 = vst [vmem:[#allocation3 + $0x20] sm:$0xff] %v665
      %682 = vst [vmem:[#allocation3 + $0x28] sm:$0xff] %v666
      %683 = vst [vmem:[#allocation3 + $0x30] sm:$0xff] %v667
      %684 = vst [vmem:[#allocation3 + $0x38] sm:$0xff] %v668
      %685 = vst [vmem:[#allocation3 + $0x40] sm:$0xff] %v669
      %686 = vst [vmem:[#allocation3 + $0x48] sm:$0xff] %v670
      %687 = vst [vmem:[#allocation3 + $0x50] sm:$0xff] %v671
      %688 = vst [vmem:[#allocation3 + $0x58] sm:$0xff] %v672
      %689 = vst [vmem:[#allocation3 + $0x60] sm:$0xff] %v673
      %690 = vst [vmem:[#allocation3 + $0x68] sm:$0xff] %v674
      %691 = vst [vmem:[#allocation3 + $0x70] sm:$0xff] %v675
      %692 = vst [vmem:[#allocation3 + $0x78] sm:$0xff] %v676
      %v693 = vld [vmem:[#allocation3] sm:$0xff]
      %v694 = vld [vmem:[#allocation3 + $0x8] sm:$0xff]
      %v695 = vld [vmem:[#allocation3 + $0x10] sm:$0xff]
      %v696 = vld [vmem:[#allocation3 + $0x18] sm:$0xff]
      %v697 = vld [vmem:[#allocation3 + $0x20] sm:$0xff]
      %v698 = vld [vmem:[#allocation3 + $0x28] sm:$0xff]
      %v699 = vld [vmem:[#allocation3 + $0x30] sm:$0xff]
      %v700 = vld [vmem:[#allocation3 + $0x38] sm:$0xff]
      %v701 = vld [vmem:[#allocation3 + $0x40] sm:$0xff]
      %v702 = vld [vmem:[#allocation3 + $0x48] sm:$0xff]
      %v703 = vld [vmem:[#allocation3 + $0x50] sm:$0xff]
      %v704 = vld [vmem:[#allocation3 + $0x58] sm:$0xff]
      %v705 = vld [vmem:[#allocation3 + $0x60] sm:$0xff]
      %v706 = vld [vmem:[#allocation3 + $0x68] sm:$0xff]
      %v707 = vld [vmem:[#allocation3 + $0x70] sm:$0xff]
      %v708 = vld [vmem:[#allocation3 + $0x78] sm:$0xff]
      %s709 = scalar_lea.vmem %s2, 384
      %v710 = vld [vmem:[%s709] sm:$0xff]
      %v711 = vld [vmem:[%s709 + $0x8] sm:$0xff]
      %v712 = vld [vmem:[%s709 + $0x10] sm:$0xff]
      %v713 = vld [vmem:[%s709 + $0x18] sm:$0xff]
      %v714 = vld [vmem:[%s709 + $0x20] sm:$0xff]
      %v715 = vld [vmem:[%s709 + $0x28] sm:$0xff]
      %v716 = vld [vmem:[%s709 + $0x30] sm:$0xff]
      %v717 = vld [vmem:[%s709 + $0x38] sm:$0xff]
      %v718 = vld [vmem:[%s709 + $0x40] sm:$0xff]
      %v719 = vld [vmem:[%s709 + $0x48] sm:$0xff]
      %v720 = vld [vmem:[%s709 + $0x50] sm:$0xff]
      %v721 = vld [vmem:[%s709 + $0x58] sm:$0xff]
      %v722 = vld [vmem:[%s709 + $0x60] sm:$0xff]
      %v723 = vld [vmem:[%s709 + $0x68] sm:$0xff]
      %v724 = vld [vmem:[%s709 + $0x70] sm:$0xff]
      %v725 = vld [vmem:[%s709 + $0x78] sm:$0xff]
      %726 = vmatprep.subr.mxu0 0.0
      %727 = vmatpush1.msra.mxu0 %v710
      %728 = vmatprep.subr.mxu0 0.0
      %729 = vmatpush1.msra.mxu0 %v711
      %730 = vmatprep.subr.mxu0 0.0
      %731 = vmatpush1.msra.mxu0 %v712
      %732 = vmatprep.subr.mxu0 0.0
      %733 = vmatpush1.msra.mxu0 %v713
      %734 = vmatprep.subr.mxu0 0.0
      %735 = vmatpush1.msra.mxu0 %v714
      %736 = vmatprep.subr.mxu0 0.0
      %737 = vmatpush1.msra.mxu0 %v715
      %738 = vmatprep.subr.mxu0 0.0
      %739 = vmatpush1.msra.mxu0 %v716
      %740 = vmatprep.subr.mxu0 0.0
      %741 = vmatpush1.msra.mxu0 %v717
      %742 = vmatprep.subr.mxu0 0.0
      %743 = vmatpush1.msra.mxu0 %v718
      %744 = vmatprep.subr.mxu0 0.0
      %745 = vmatpush1.msra.mxu0 %v719
      %746 = vmatprep.subr.mxu0 0.0
      %747 = vmatpush1.msra.mxu0 %v720
      %748 = vmatprep.subr.mxu0 0.0
      %749 = vmatpush1.msra.mxu0 %v721
      %750 = vmatprep.subr.mxu0 0.0
      %751 = vmatpush1.msra.mxu0 %v722
      %752 = vmatprep.subr.mxu0 0.0
      %753 = vmatpush1.msra.mxu0 %v723
      %754 = vmatprep.subr.mxu0 0.0
      %755 = vmatpush1.msra.mxu0 %v724
      %756 = vmatprep.subr.mxu0 0.0
      %757 = vmatpush1.msra.mxu0 %v725
      %758 = vmatprep.subr.mxu0 0.0
      %759 = vmatpush1.msra.mxu0 0.0
      %760 = vmatprep.subr.mxu0 0.0
      %761 = vmatpush1.msra.mxu0 0.0
      %762 = vmatprep.subr.mxu0 0.0
      %763 = vmatpush1.msra.mxu0 0.0
      %764 = vmatprep.subr.mxu0 0.0
      %765 = vmatpush1.msra.mxu0 0.0
      %766 = vmatprep.subr.mxu0 0.0
      %767 = vmatpush1.msra.mxu0 0.0
      %768 = vmatprep.subr.mxu0 0.0
      %769 = vmatpush1.msra.mxu0 0.0
      %770 = vmatprep.subr.mxu0 0.0
      %771 = vmatpush1.msra.mxu0 0.0
      %772 = vmatprep.subr.mxu0 0.0
      %773 = vmatpush1.msra.mxu0 0.0
      %774 = vmatprep.subr.mxu0 0.0
      %775 = vmatpush1.msra.mxu0 0.0
      %776 = vmatprep.subr.mxu0 0.0
      %777 = vmatpush1.msra.mxu0 0.0
      %778 = vmatprep.subr.mxu0 0.0
      %779 = vmatpush1.msra.mxu0 0.0
      %780 = vmatprep.subr.mxu0 0.0
      %781 = vmatpush1.msra.mxu0 0.0
      %782 = vmatprep.subr.mxu0 0.0
      %783 = vmatpush1.msra.mxu0 0.0
      %784 = vmatprep.subr.mxu0 0.0
      %785 = vmatpush1.msra.mxu0 0.0
      %786 = vmatprep.subr.mxu0 0.0
      %787 = vmatpush1.msra.mxu0 0.0
      %788 = vmatprep.subr.mxu0 0.0
      %789 = vmatpush1.msra.mxu0 0.0
      %790 = vmatprep.mubr.f32.mxu0 0.0
      %791 = vmatmul.mubr.f32.gmra.mrb[0].mxu0 %v441
      %v792 = vpop.f32.mrb[0].mxu0
      %v793 = vadd.f32 0.0, %v792
      %v794 = vpop.f32.mrb[0].mxu0
      %795 = vmatprep.mubr.f32.mxu0 0.0
      %796 = vmatmul.mubr.f32.gmra.mrb[0].mxu0 %v442
      %v797 = vpop.f32.mrb[0].mxu0
      %v798 = vadd.f32 0.0, %v797
      %v799 = vpop.f32.mrb[0].mxu0
      %800 = vmatprep.mubr.f32.mxu0 0.0
      %801 = vmatmul.mubr.f32.gmra.mrb[0].mxu0 %v444
      %v802 = vpop.f32.mrb[0].mxu0
      %v803 = vadd.f32 0.0, %v802
      %v804 = vpop.f32.mrb[0].mxu0
      %805 = vmatprep.mubr.f32.mxu0 0.0
      %806 = vmatmul.mubr.f32.gmra.mrb[0].mxu0 %v445
      %v807 = vpop.f32.mrb[0].mxu0
      %v808 = vadd.f32 0.0, %v807
      %v809 = vpop.f32.mrb[0].mxu0
      %810 = vmatprep.mubr.f32.mxu0 0.0
      %811 = vmatmul.mubr.f32.gmra.mrb[0].mxu0 %v447
      %v812 = vpop.f32.mrb[0].mxu0
      %v813 = vadd.f32 0.0, %v812
      %v814 = vpop.f32.mrb[0].mxu0
      %815 = vmatprep.mubr.f32.mxu0 0.0
      %816 = vmatmul.mubr.f32.gmra.mrb[0].mxu0 %v448
      %v817 = vpop.f32.mrb[0].mxu0
      %v818 = vadd.f32 0.0, %v817
      %v819 = vpop.f32.mrb[0].mxu0
      %820 = vmatprep.mubr.f32.mxu0 0.0
      %821 = vmatmul.mubr.f32.gmra.mrb[0].mxu0 %v450
      %v822 = vpop.f32.mrb[0].mxu0
      %v823 = vadd.f32 0.0, %v822
      %v824 = vpop.f32.mrb[0].mxu0
      %825 = vmatprep.mubr.f32.mxu0 0.0
      %826 = vmatmul.mubr.f32.gmra.mrb[0].mxu0 %v451
      %v827 = vpop.f32.mrb[0].mxu0
      %v828 = vadd.f32 0.0, %v827
      %v829 = vpop.f32.mrb[0].mxu0
      %830 = vmatprep.mubr.f32.mxu0 0.0
      %831 = vmatmul.mubr.f32.gmra.mrb[0].mxu0 %v453
      %v832 = vpop.f32.mrb[0].mxu0
      %v833 = vadd.f32 0.0, %v832
      %v834 = vpop.f32.mrb[0].mxu0
      %835 = vmatprep.mubr.f32.mxu0 0.0
      %836 = vmatmul.mubr.f32.gmra.mrb[0].mxu0 %v454
      %v837 = vpop.f32.mrb[0].mxu0
      %v838 = vadd.f32 0.0, %v837
      %v839 = vpop.f32.mrb[0].mxu0
      %840 = vmatprep.mubr.f32.mxu0 0.0
      %841 = vmatmul.mubr.f32.gmra.mrb[0].mxu0 %v456
      %v842 = vpop.f32.mrb[0].mxu0
      %v843 = vadd.f32 0.0, %v842
      %v844 = vpop.f32.mrb[0].mxu0
      %845 = vmatprep.mubr.f32.mxu0 0.0
      %846 = vmatmul.mubr.f32.gmra.mrb[0].mxu0 %v457
      %v847 = vpop.f32.mrb[0].mxu0
      %v848 = vadd.f32 0.0, %v847
      %v849 = vpop.f32.mrb[0].mxu0
      %850 = vmatprep.mubr.f32.mxu0 0.0
      %851 = vmatmul.mubr.f32.gmra.mrb[0].mxu0 %v459
      %v852 = vpop.f32.mrb[0].mxu0
      %v853 = vadd.f32 0.0, %v852
      %v854 = vpop.f32.mrb[0].mxu0
      %855 = vmatprep.mubr.f32.mxu0 0.0
      %856 = vmatmul.mubr.f32.gmra.mrb[0].mxu0 %v460
      %v857 = vpop.f32.mrb[0].mxu0
      %v858 = vadd.f32 0.0, %v857
      %v859 = vpop.f32.mrb[0].mxu0
      %860 = vmatprep.mubr.f32.mxu0 0.0
      %861 = vmatmul.mubr.f32.gmra.mrb[0].mxu0 %v462
      %v862 = vpop.f32.mrb[0].mxu0
      %v863 = vadd.f32 0.0, %v862
      %v864 = vpop.f32.mrb[0].mxu0
      %865 = vmatprep.mubr.f32.mxu0 0.0
      %866 = vmatmul.mubr.f32.gmra.mrb[0].mxu0 %v463
      %v867 = vpop.f32.mrb[0].mxu0
      %v868 = vadd.f32 0.0, %v867
      %v869 = vpop.f32.mrb[0].mxu0
      %870 = vdwg.mxu0
      %v871 = vadd.f32 %v693, %v793
      %v872 = vadd.f32 %v694, %v798
      %v873 = vadd.f32 %v695, %v803
      %v874 = vadd.f32 %v696, %v808
      %v875 = vadd.f32 %v697, %v813
      %v876 = vadd.f32 %v698, %v818
      %v877 = vadd.f32 %v699, %v823
      %v878 = vadd.f32 %v700, %v828
      %v879 = vadd.f32 %v701, %v833
      %v880 = vadd.f32 %v702, %v838
      %v881 = vadd.f32 %v703, %v843
      %v882 = vadd.f32 %v704, %v848
      %v883 = vadd.f32 %v705, %v853
      %v884 = vadd.f32 %v706, %v858
      %v885 = vadd.f32 %v707, %v863
      %v886 = vadd.f32 %v708, %v868
      %887 = vst [vmem:[#allocation3] sm:$0xff] %v871
      %888 = vst [vmem:[#allocation3 + $0x8] sm:$0xff] %v872
      %889 = vst [vmem:[#allocation3 + $0x10] sm:$0xff] %v873
      %890 = vst [vmem:[#allocation3 + $0x18] sm:$0xff] %v874
      %891 = vst [vmem:[#allocation3 + $0x20] sm:$0xff] %v875
      %892 = vst [vmem:[#allocation3 + $0x28] sm:$0xff] %v876
      %893 = vst [vmem:[#allocation3 + $0x30] sm:$0xff] %v877
      %894 = vst [vmem:[#allocation3 + $0x38] sm:$0xff] %v878
      %895 = vst [vmem:[#allocation3 + $0x40] sm:$0xff] %v879
      %896 = vst [vmem:[#allocation3 + $0x48] sm:$0xff] %v880
      %897 = vst [vmem:[#allocation3 + $0x50] sm:$0xff] %v881
      %898 = vst [vmem:[#allocation3 + $0x58] sm:$0xff] %v882
      %899 = vst [vmem:[#allocation3 + $0x60] sm:$0xff] %v883
      %900 = vst [vmem:[#allocation3 + $0x68] sm:$0xff] %v884
      %901 = vst [vmem:[#allocation3 + $0x70] sm:$0xff] %v885
      %902 = vst [vmem:[#allocation3 + $0x78] sm:$0xff] %v886
      %v903 = vld [vmem:[#allocation3] sm:$0xff]
      %v904 = vld [vmem:[#allocation3 + $0x8] sm:$0xff]
      %v905 = vld [vmem:[#allocation3 + $0x10] sm:$0xff]
      %v906 = vld [vmem:[#allocation3 + $0x18] sm:$0xff]
      %v907 = vld [vmem:[#allocation3 + $0x20] sm:$0xff]
      %v908 = vld [vmem:[#allocation3 + $0x28] sm:$0xff]
      %v909 = vld [vmem:[#allocation3 + $0x30] sm:$0xff]
      %v910 = vld [vmem:[#allocation3 + $0x38] sm:$0xff]
      %v911 = vld [vmem:[#allocation3 + $0x40] sm:$0xff]
      %v912 = vld [vmem:[#allocation3 + $0x48] sm:$0xff]
      %v913 = vld [vmem:[#allocation3 + $0x50] sm:$0xff]
      %v914 = vld [vmem:[#allocation3 + $0x58] sm:$0xff]
      %v915 = vld [vmem:[#allocation3 + $0x60] sm:$0xff]
      %v916 = vld [vmem:[#allocation3 + $0x68] sm:$0xff]
      %v917 = vld [vmem:[#allocation3 + $0x70] sm:$0xff]
      %v918 = vld [vmem:[#allocation3 + $0x78] sm:$0xff]
      %s919 = scalar_lea.vmem %s2, 768
      %v920 = vld [vmem:[%s919] sm:$0xff]
      %v921 = vld [vmem:[%s919 + $0x8] sm:$0xff]
      %v922 = vld [vmem:[%s919 + $0x10] sm:$0xff]
      %v923 = vld [vmem:[%s919 + $0x18] sm:$0xff]
      %v924 = vld [vmem:[%s919 + $0x20] sm:$0xff]
      %v925 = vld [vmem:[%s919 + $0x28] sm:$0xff]
      %v926 = vld [vmem:[%s919 + $0x30] sm:$0xff]
      %v927 = vld [vmem:[%s919 + $0x38] sm:$0xff]
      %v928 = vld [vmem:[%s919 + $0x40] sm:$0xff]
      %v929 = vld [vmem:[%s919 + $0x48] sm:$0xff]
      %v930 = vld [vmem:[%s919 + $0x50] sm:$0xff]
      %v931 = vld [vmem:[%s919 + $0x58] sm:$0xff]
      %v932 = vld [vmem:[%s919 + $0x60] sm:$0xff]
      %v933 = vld [vmem:[%s919 + $0x68] sm:$0xff]
      %v934 = vld [vmem:[%s919 + $0x70] sm:$0xff]
      %v935 = vld [vmem:[%s919 + $0x78] sm:$0xff]
      %936 = vmatprep.subr.mxu0 0.0
      %937 = vmatpush1.msra.mxu0 %v920
      %938 = vmatprep.subr.mxu0 0.0
      %939 = vmatpush1.msra.mxu0 %v921
      %940 = vmatprep.subr.mxu0 0.0
      %941 = vmatpush1.msra.mxu0 %v922
      %942 = vmatprep.subr.mxu0 0.0
      %943 = vmatpush1.msra.mxu0 %v923
      %944 = vmatprep.subr.mxu0 0.0
      %945 = vmatpush1.msra.mxu0 %v924
      %946 = vmatprep.subr.mxu0 0.0
      %947 = vmatpush1.msra.mxu0 %v925
      %948 = vmatprep.subr.mxu0 0.0
      %949 = vmatpush1.msra.mxu0 %v926
      %950 = vmatprep.subr.mxu0 0.0
      %951 = vmatpush1.msra.mxu0 %v927
      %952 = vmatprep.subr.mxu0 0.0
      %953 = vmatpush1.msra.mxu0 %v928
      %954 = vmatprep.subr.mxu0 0.0
      %955 = vmatpush1.msra.mxu0 %v929
      %956 = vmatprep.subr.mxu0 0.0
      %957 = vmatpush1.msra.mxu0 %v930
      %958 = vmatprep.subr.mxu0 0.0
      %959 = vmatpush1.msra.mxu0 %v931
      %960 = vmatprep.subr.mxu0 0.0
      %961 = vmatpush1.msra.mxu0 %v932
      %962 = vmatprep.subr.mxu0 0.0
      %963 = vmatpush1.msra.mxu0 %v933
      %964 = vmatprep.subr.mxu0 0.0
      %965 = vmatpush1.msra.mxu0 %v934
      %966 = vmatprep.subr.mxu0 0.0
      %967 = vmatpush1.msra.mxu0 %v935
      %968 = vmatprep.subr.mxu0 0.0
      %969 = vmatpush1.msra.mxu0 0.0
      %970 = vmatprep.subr.mxu0 0.0
      %971 = vmatpush1.msra.mxu0 0.0
      %972 = vmatprep.subr.mxu0 0.0
      %973 = vmatpush1.msra.mxu0 0.0
      %974 = vmatprep.subr.mxu0 0.0
      %975 = vmatpush1.msra.mxu0 0.0
      %976 = vmatprep.subr.mxu0 0.0
      %977 = vmatpush1.msra.mxu0 0.0
      %978 = vmatprep.subr.mxu0 0.0
      %979 = vmatpush1.msra.mxu0 0.0
      %980 = vmatprep.subr.mxu0 0.0
      %981 = vmatpush1.msra.mxu0 0.0
      %982 = vmatprep.subr.mxu0 0.0
      %983 = vmatpush1.msra.mxu0 0.0
      %984 = vmatprep.subr.mxu0 0.0
      %985 = vmatpush1.msra.mxu0 0.0
      %986 = vmatprep.subr.mxu0 0.0
      %987 = vmatpush1.msra.mxu0 0.0
      %988 = vmatprep.subr.mxu0 0.0
      %989 = vmatpush1.msra.mxu0 0.0
      %990 = vmatprep.subr.mxu0 0.0
      %991 = vmatpush1.msra.mxu0 0.0
      %992 = vmatprep.subr.mxu0 0.0
      %993 = vmatpush1.msra.mxu0 0.0
      %994 = vmatprep.subr.mxu0 0.0
      %995 = vmatpush1.msra.mxu0 0.0
      %996 = vmatprep.subr.mxu0 0.0
      %997 = vmatpush1.msra.mxu0 0.0
      %998 = vmatprep.subr.mxu0 0.0
      %999 = vmatpush1.msra.mxu0 0.0
      %1000 = vmatprep.mubr.f32.mxu0 0.0
      %1001 = vmatmul.mubr.f32.gmra.mrb[0].mxu0 %v444
      %v1002 = vpop.f32.mrb[0].mxu0
      %v1003 = vadd.f32 0.0, %v1002
      %v1004 = vpop.f32.mrb[0].mxu0
      %1005 = vmatprep.mubr.f32.mxu0 0.0
      %1006 = vmatmul.mubr.f32.gmra.mrb[0].mxu0 %v445
      %v1007 = vpop.f32.mrb[0].mxu0
      %v1008 = vadd.f32 0.0, %v1007
      %v1009 = vpop.f32.mrb[0].mxu0
      %1010 = vmatprep.mubr.f32.mxu0 0.0
      %1011 = vmatmul.mubr.f32.gmra.mrb[0].mxu0 %v447
      %v1012 = vpop.f32.mrb[0].mxu0
      %v1013 = vadd.f32 0.0, %v1012
      %v1014 = vpop.f32.mrb[0].mxu0
      %1015 = vmatprep.mubr.f32.mxu0 0.0
      %1016 = vmatmul.mubr.f32.gmra.mrb[0].mxu0 %v448
      %v1017 = vpop.f32.mrb[0].mxu0
      %v1018 = vadd.f32 0.0, %v1017
      %v1019 = vpop.f32.mrb[0].mxu0
      %1020 = vmatprep.mubr.f32.mxu0 0.0
      %1021 = vmatmul.mubr.f32.gmra.mrb[0].mxu0 %v450
      %v1022 = vpop.f32.mrb[0].mxu0
      %v1023 = vadd.f32 0.0, %v1022
      %v1024 = vpop.f32.mrb[0].mxu0
      %1025 = vmatprep.mubr.f32.mxu0 0.0
      %1026 = vmatmul.mubr.f32.gmra.mrb[0].mxu0 %v451
      %v1027 = vpop.f32.mrb[0].mxu0
      %v1028 = vadd.f32 0.0, %v1027
      %v1029 = vpop.f32.mrb[0].mxu0
      %1030 = vmatprep.mubr.f32.mxu0 0.0
      %1031 = vmatmul.mubr.f32.gmra.mrb[0].mxu0 %v453
      %v1032 = vpop.f32.mrb[0].mxu0
      %v1033 = vadd.f32 0.0, %v1032
      %v1034 = vpop.f32.mrb[0].mxu0
      %1035 = vmatprep.mubr.f32.mxu0 0.0
      %1036 = vmatmul.mubr.f32.gmra.mrb[0].mxu0 %v454
      %v1037 = vpop.f32.mrb[0].mxu0
      %v1038 = vadd.f32 0.0, %v1037
      %v1039 = vpop.f32.mrb[0].mxu0
      %1040 = vmatprep.mubr.f32.mxu0 0.0
      %1041 = vmatmul.mubr.f32.gmra.mrb[0].mxu0 %v456
      %v1042 = vpop.f32.mrb[0].mxu0
      %v1043 = vadd.f32 0.0, %v1042
      %v1044 = vpop.f32.mrb[0].mxu0
      %1045 = vmatprep.mubr.f32.mxu0 0.0
      %1046 = vmatmul.mubr.f32.gmra.mrb[0].mxu0 %v457
      %v1047 = vpop.f32.mrb[0].mxu0
      %v1048 = vadd.f32 0.0, %v1047
      %v1049 = vpop.f32.mrb[0].mxu0
      %1050 = vmatprep.mubr.f32.mxu0 0.0
      %1051 = vmatmul.mubr.f32.gmra.mrb[0].mxu0 %v459
      %v1052 = vpop.f32.mrb[0].mxu0
      %v1053 = vadd.f32 0.0, %v1052
      %v1054 = vpop.f32.mrb[0].mxu0
      %1055 = vmatprep.mubr.f32.mxu0 0.0
      %1056 = vmatmul.mubr.f32.gmra.mrb[0].mxu0 %v460
      %v1057 = vpop.f32.mrb[0].mxu0
      %v1058 = vadd.f32 0.0, %v1057
      %v1059 = vpop.f32.mrb[0].mxu0
      %1060 = vmatprep.mubr.f32.mxu0 0.0
      %1061 = vmatmul.mubr.f32.gmra.mrb[0].mxu0 %v462
      %v1062 = vpop.f32.mrb[0].mxu0
      %v1063 = vadd.f32 0.0, %v1062
      %v1064 = vpop.f32.mrb[0].mxu0
      %1065 = vmatprep.mubr.f32.mxu0 0.0
      %1066 = vmatmul.mubr.f32.gmra.mrb[0].mxu0 %v463
      %v1067 = vpop.f32.mrb[0].mxu0
      %v1068 = vadd.f32 0.0, %v1067
      %v1069 = vpop.f32.mrb[0].mxu0
      %1070 = vmatprep.mubr.f32.mxu0 0.0
      %1071 = vmatmul.mubr.f32.gmra.mrb[0].mxu0 %v465
      %v1072 = vpop.f32.mrb[0].mxu0
      %v1073 = vadd.f32 0.0, %v1072
      %v1074 = vpop.f32.mrb[0].mxu0
      %1075 = vmatprep.mubr.f32.mxu0 0.0
      %1076 = vmatmul.mubr.f32.gmra.mrb[0].mxu0 %v466
      %v1077 = vpop.f32.mrb[0].mxu0
      %v1078 = vadd.f32 0.0, %v1077
      %v1079 = vpop.f32.mrb[0].mxu0
      %1080 = vdwg.mxu0
      %v1081 = vadd.f32 %v903, %v1003
      %v1082 = vadd.f32 %v904, %v1008
      %v1083 = vadd.f32 %v905, %v1013
      %v1084 = vadd.f32 %v906, %v1018
      %v1085 = vadd.f32 %v907, %v1023
      %v1086 = vadd.f32 %v908, %v1028
      %v1087 = vadd.f32 %v909, %v1033
      %v1088 = vadd.f32 %v910, %v1038
      %v1089 = vadd.f32 %v911, %v1043
      %v1090 = vadd.f32 %v912, %v1048
      %v1091 = vadd.f32 %v913, %v1053
      %v1092 = vadd.f32 %v914, %v1058
      %v1093 = vadd.f32 %v915, %v1063
      %v1094 = vadd.f32 %v916, %v1068
      %v1095 = vadd.f32 %v917, %v1073
      %v1096 = vadd.f32 %v918, %v1078
      %1097 = vst [vmem:[#allocation3] sm:$0xff] %v1081
      %1098 = vst [vmem:[#allocation3 + $0x8] sm:$0xff] %v1082
      %1099 = vst [vmem:[#allocation3 + $0x10] sm:$0xff] %v1083
      %1100 = vst [vmem:[#allocation3 + $0x18] sm:$0xff] %v1084
      %1101 = vst [vmem:[#allocation3 + $0x20] sm:$0xff] %v1085
      %1102 = vst [vmem:[#allocation3 + $0x28] sm:$0xff] %v1086
      %1103 = vst [vmem:[#allocation3 + $0x30] sm:$0xff] %v1087
      %1104 = vst [vmem:[#allocation3 + $0x38] sm:$0xff] %v1088
      %1105 = vst [vmem:[#allocation3 + $0x40] sm:$0xff] %v1089
      %1106 = vst [vmem:[#allocation3 + $0x48] sm:$0xff] %v1090
      %1107 = vst [vmem:[#allocation3 + $0x50] sm:$0xff] %v1091
      %1108 = vst [vmem:[#allocation3 + $0x58] sm:$0xff] %v1092
      %1109 = vst [vmem:[#allocation3 + $0x60] sm:$0xff] %v1093
      %1110 = vst [vmem:[#allocation3 + $0x68] sm:$0xff] %v1094
      %1111 = vst [vmem:[#allocation3 + $0x70] sm:$0xff] %v1095
      %1112 = vst [vmem:[#allocation3 + $0x78] sm:$0xff] %v1096
      %vm1143 = vcmask 1046528
      %v1144 = vrot.slane %v438, 1
      %v1145 = vrot.slane %v439, 1
      %v1146 = vsel %vm1143, %v1144, %v1145
      %v1147 = vrot.slane %v440, 1
      %v1148 = vsel %vm1143, %v1145, %v1147
      %v1149 = vrot.slane %v441, 1
      %v1150 = vrot.slane %v442, 1
      %v1151 = vsel %vm1143, %v1149, %v1150
      %v1152 = vrot.slane %v443, 1
      %v1153 = vsel %vm1143, %v1150, %v1152
      %v1154 = vrot.slane %v444, 1
      %v1155 = vrot.slane %v445, 1
      %v1156 = vsel %vm1143, %v1154, %v1155
      %v1157 = vrot.slane %v446, 1
      %v1158 = vsel %vm1143, %v1155, %v1157
      %v1159 = vrot.slane %v447, 1
      %v1160 = vrot.slane %v448, 1
      %v1161 = vsel %vm1143, %v1159, %v1160
      %v1162 = vrot.slane %v449, 1
      %v1163 = vsel %vm1143, %v1160, %v1162
      %v1164 = vrot.slane %v450, 1
      %v1165 = vrot.slane %v451, 1
      %v1166 = vsel %vm1143, %v1164, %v1165
      %v1167 = vrot.slane %v452, 1
      %v1168 = vsel %vm1143, %v1165, %v1167
      %v1169 = vrot.slane %v453, 1
      %v1170 = vrot.slane %v454, 1
      %v1171 = vsel %vm1143, %v1169, %v1170
      %v1172 = vrot.slane %v455, 1
      %v1173 = vsel %vm1143, %v1170, %v1172
      %v1174 = vrot.slane %v456, 1
      %v1175 = vrot.slane %v457, 1
      %v1176 = vsel %vm1143, %v1174, %v1175
      %v1177 = vrot.slane %v458, 1
      %v1178 = vsel %vm1143, %v1175, %v1177
      %v1179 = vrot.slane %v459, 1
      %v1180 = vrot.slane %v460, 1
      %v1181 = vsel %vm1143, %v1179, %v1180
      %v1182 = vrot.slane %v461, 1
      %v1183 = vsel %vm1143, %v1180, %v1182
      %v1184 = vrot.slane %v462, 1
      %v1185 = vrot.slane %v463, 1
      %v1186 = vsel %vm1143, %v1184, %v1185
      %v1187 = vrot.slane %v464, 1
      %v1188 = vsel %vm1143, %v1185, %v1187
      %v1189 = vrot.slane %v465, 1
      %v1190 = vrot.slane %v466, 1
      %v1191 = vsel %vm1143, %v1189, %v1190
      %v1192 = vrot.slane %v467, 1
      %v1193 = vsel %vm1143, %v1190, %v1192
      %v1214 = vld [vmem:[#allocation3] sm:$0xff]
      %v1215 = vld [vmem:[#allocation3 + $0x8] sm:$0xff]
      %v1216 = vld [vmem:[#allocation3 + $0x10] sm:$0xff]
      %v1217 = vld [vmem:[#allocation3 + $0x18] sm:$0xff]
      %v1218 = vld [vmem:[#allocation3 + $0x20] sm:$0xff]
      %v1219 = vld [vmem:[#allocation3 + $0x28] sm:$0xff]
      %v1220 = vld [vmem:[#allocation3 + $0x30] sm:$0xff]
      %v1221 = vld [vmem:[#allocation3 + $0x38] sm:$0xff]
      %v1222 = vld [vmem:[#allocation3 + $0x40] sm:$0xff]
      %v1223 = vld [vmem:[#allocation3 + $0x48] sm:$0xff]
      %v1224 = vld [vmem:[#allocation3 + $0x50] sm:$0xff]
      %v1225 = vld [vmem:[#allocation3 + $0x58] sm:$0xff]
      %v1226 = vld [vmem:[#allocation3 + $0x60] sm:$0xff]
      %v1227 = vld [vmem:[#allocation3 + $0x68] sm:$0xff]
      %v1228 = vld [vmem:[#allocation3 + $0x70] sm:$0xff]
      %v1229 = vld [vmem:[#allocation3 + $0x78] sm:$0xff]
      %s1230 = scalar_lea.vmem %s2, 128
      %v1231 = vld [vmem:[%s1230] sm:$0xff]
      %v1232 = vld [vmem:[%s1230 + $0x8] sm:$0xff]
      %v1233 = vld [vmem:[%s1230 + $0x10] sm:$0xff]
      %v1234 = vld [vmem:[%s1230 + $0x18] sm:$0xff]
      %v1235 = vld [vmem:[%s1230 + $0x20] sm:$0xff]
      %v1236 = vld [vmem:[%s1230 + $0x28] sm:$0xff]
      %v1237 = vld [vmem:[%s1230 + $0x30] sm:$0xff]
      %v1238 = vld [vmem:[%s1230 + $0x38] sm:$0xff]
      %v1239 = vld [vmem:[%s1230 + $0x40] sm:$0xff]
      %v1240 = vld [vmem:[%s1230 + $0x48] sm:$0xff]
      %v1241 = vld [vmem:[%s1230 + $0x50] sm:$0xff]
      %v1242 = vld [vmem:[%s1230 + $0x58] sm:$0xff]
      %v1243 = vld [vmem:[%s1230 + $0x60] sm:$0xff]
      %v1244 = vld [vmem:[%s1230 + $0x68] sm:$0xff]
      %v1245 = vld [vmem:[%s1230 + $0x70] sm:$0xff]
      %v1246 = vld [vmem:[%s1230 + $0x78] sm:$0xff]
      %1247 = vmatprep.subr.mxu0 0.0
      %1248 = vmatpush1.msra.mxu0 %v1231
      %1249 = vmatprep.subr.mxu0 0.0
      %1250 = vmatpush1.msra.mxu0 %v1232
      %1251 = vmatprep.subr.mxu0 0.0
      %1252 = vmatpush1.msra.mxu0 %v1233
      %1253 = vmatprep.subr.mxu0 0.0
      %1254 = vmatpush1.msra.mxu0 %v1234
      %1255 = vmatprep.subr.mxu0 0.0
      %1256 = vmatpush1.msra.mxu0 %v1235
      %1257 = vmatprep.subr.mxu0 0.0
      %1258 = vmatpush1.msra.mxu0 %v1236
      %1259 = vmatprep.subr.mxu0 0.0
      %1260 = vmatpush1.msra.mxu0 %v1237
      %1261 = vmatprep.subr.mxu0 0.0
      %1262 = vmatpush1.msra.mxu0 %v1238
      %1263 = vmatprep.subr.mxu0 0.0
      %1264 = vmatpush1.msra.mxu0 %v1239
      %1265 = vmatprep.subr.mxu0 0.0
      %1266 = vmatpush1.msra.mxu0 %v1240
      %1267 = vmatprep.subr.mxu0 0.0
      %1268 = vmatpush1.msra.mxu0 %v1241
      %1269 = vmatprep.subr.mxu0 0.0
      %1270 = vmatpush1.msra.mxu0 %v1242
      %1271 = vmatprep.subr.mxu0 0.0
      %1272 = vmatpush1.msra.mxu0 %v1243
      %1273 = vmatprep.subr.mxu0 0.0
      %1274 = vmatpush1.msra.mxu0 %v1244
      %1275 = vmatprep.subr.mxu0 0.0
      %1276 = vmatpush1.msra.mxu0 %v1245
      %1277 = vmatprep.subr.mxu0 0.0
      %1278 = vmatpush1.msra.mxu0 %v1246
      %1279 = vmatprep.subr.mxu0 0.0
      %1280 = vmatpush1.msra.mxu0 0.0
      %1281 = vmatprep.subr.mxu0 0.0
      %1282 = vmatpush1.msra.mxu0 0.0
      %1283 = vmatprep.subr.mxu0 0.0
      %1284 = vmatpush1.msra.mxu0 0.0
      %1285 = vmatprep.subr.mxu0 0.0
      %1286 = vmatpush1.msra.mxu0 0.0
      %1287 = vmatprep.subr.mxu0 0.0
      %1288 = vmatpush1.msra.mxu0 0.0
      %1289 = vmatprep.subr.mxu0 0.0
      %1290 = vmatpush1.msra.mxu0 0.0
      %1291 = vmatprep.subr.mxu0 0.0
      %1292 = vmatpush1.msra.mxu0 0.0
      %1293 = vmatprep.subr.mxu0 0.0
      %1294 = vmatpush1.msra.mxu0 0.0
      %1295 = vmatprep.subr.mxu0 0.0
      %1296 = vmatpush1.msra.mxu0 0.0
      %1297 = vmatprep.subr.mxu0 0.0
      %1298 = vmatpush1.msra.mxu0 0.0
      %1299 = vmatprep.subr.mxu0 0.0
      %1300 = vmatpush1.msra.mxu0 0.0
      %1301 = vmatprep.subr.mxu0 0.0
      %1302 = vmatpush1.msra.mxu0 0.0
      %1303 = vmatprep.subr.mxu0 0.0
      %1304 = vmatpush1.msra.mxu0 0.0
      %1305 = vmatprep.subr.mxu0 0.0
      %1306 = vmatpush1.msra.mxu0 0.0
      %1307 = vmatprep.subr.mxu0 0.0
      %1308 = vmatpush1.msra.mxu0 0.0
      %1309 = vmatprep.subr.mxu0 0.0
      %1310 = vmatpush1.msra.mxu0 0.0
      %1311 = vmatprep.mubr.f32.mxu0 0.0
      %1312 = vmatmul.mubr.f32.gmra.mrb[0].mxu0 %v1146
      %v1313 = vpop.f32.mrb[0].mxu0
      %v1314 = vadd.f32 0.0, %v1313
      %v1315 = vpop.f32.mrb[0].mxu0
      %1316 = vmatprep.mubr.f32.mxu0 0.0
      %1317 = vmatmul.mubr.f32.gmra.mrb[0].mxu0 %v1148
      %v1318 = vpop.f32.mrb[0].mxu0
      %v1319 = vadd.f32 0.0, %v1318
      %v1320 = vpop.f32.mrb[0].mxu0
      %1321 = vmatprep.mubr.f32.mxu0 0.0
      %1322 = vmatmul.mubr.f32.gmra.mrb[0].mxu0 %v1151
      %v1323 = vpop.f32.mrb[0].mxu0
      %v1324 = vadd.f32 0.0, %v1323
      %v1325 = vpop.f32.mrb[0].mxu0
      %1326 = vmatprep.mubr.f32.mxu0 0.0
      %1327 = vmatmul.mubr.f32.gmra.mrb[0].mxu0 %v1153
      %v1328 = vpop.f32.mrb[0].mxu0
      %v1329 = vadd.f32 0.0, %v1328
      %v1330 = vpop.f32.mrb[0].mxu0
      %1331 = vmatprep.mubr.f32.mxu0 0.0
      %1332 = vmatmul.mubr.f32.gmra.mrb[0].mxu0 %v1156
      %v1333 = vpop.f32.mrb[0].mxu0
      %v1334 = vadd.f32 0.0, %v1333
      %v1335 = vpop.f32.mrb[0].mxu0
      %1336 = vmatprep.mubr.f32.mxu0 0.0
      %1337 = vmatmul.mubr.f32.gmra.mrb[0].mxu0 %v1158
      %v1338 = vpop.f32.mrb[0].mxu0
      %v1339 = vadd.f32 0.0, %v1338
      %v1340 = vpop.f32.mrb[0].mxu0
      %1341 = vmatprep.mubr.f32.mxu0 0.0
      %1342 = vmatmul.mubr.f32.gmra.mrb[0].mxu0 %v1161
      %v1343 = vpop.f32.mrb[0].mxu0
      %v1344 = vadd.f32 0.0, %v1343
      %v1345 = vpop.f32.mrb[0].mxu0
      %1346 = vmatprep.mubr.f32.mxu0 0.0
      %1347 = vmatmul.mubr.f32.gmra.mrb[0].mxu0 %v1163
      %v1348 = vpop.f32.mrb[0].mxu0
      %v1349 = vadd.f32 0.0, %v1348
      %v1350 = vpop.f32.mrb[0].mxu0
      %1351 = vmatprep.mubr.f32.mxu0 0.0
      %1352 = vmatmul.mubr.f32.gmra.mrb[0].mxu0 %v1166
      %v1353 = vpop.f32.mrb[0].mxu0
      %v1354 = vadd.f32 0.0, %v1353
      %v1355 = vpop.f32.mrb[0].mxu0
      %1356 = vmatprep.mubr.f32.mxu0 0.0
      %1357 = vmatmul.mubr.f32.gmra.mrb[0].mxu0 %v1168
      %v1358 = vpop.f32.mrb[0].mxu0
      %v1359 = vadd.f32 0.0, %v1358
      %v1360 = vpop.f32.mrb[0].mxu0
      %1361 = vmatprep.mubr.f32.mxu0 0.0
      %1362 = vmatmul.mubr.f32.gmra.mrb[0].mxu0 %v1171
      %v1363 = vpop.f32.mrb[0].mxu0
      %v1364 = vadd.f32 0.0, %v1363
      %v1365 = vpop.f32.mrb[0].mxu0
      %1366 = vmatprep.mubr.f32.mxu0 0.0
      %1367 = vmatmul.mubr.f32.gmra.mrb[0].mxu0 %v1173
      %v1368 = vpop.f32.mrb[0].mxu0
      %v1369 = vadd.f32 0.0, %v1368
      %v1370 = vpop.f32.mrb[0].mxu0
      %1371 = vmatprep.mubr.f32.mxu0 0.0
      %1372 = vmatmul.mubr.f32.gmra.mrb[0].mxu0 %v1176
      %v1373 = vpop.f32.mrb[0].mxu0
      %v1374 = vadd.f32 0.0, %v1373
      %v1375 = vpop.f32.mrb[0].mxu0
      %1376 = vmatprep.mubr.f32.mxu0 0.0
      %1377 = vmatmul.mubr.f32.gmra.mrb[0].mxu0 %v1178
      %v1378 = vpop.f32.mrb[0].mxu0
      %v1379 = vadd.f32 0.0, %v1378
      %v1380 = vpop.f32.mrb[0].mxu0
      %1381 = vmatprep.mubr.f32.mxu0 0.0
      %1382 = vmatmul.mubr.f32.gmra.mrb[0].mxu0 %v1181
      %v1383 = vpop.f32.mrb[0].mxu0
      %v1384 = vadd.f32 0.0, %v1383
      %v1385 = vpop.f32.mrb[0].mxu0
      %1386 = vmatprep.mubr.f32.mxu0 0.0
      %1387 = vmatmul.mubr.f32.gmra.mrb[0].mxu0 %v1183
      %v1388 = vpop.f32.mrb[0].mxu0
      %v1389 = vadd.f32 0.0, %v1388
      %v1390 = vpop.f32.mrb[0].mxu0
      %1391 = vdwg.mxu0
      %v1392 = vadd.f32 %v1214, %v1314
      %v1393 = vadd.f32 %v1215, %v1319
      %v1394 = vadd.f32 %v1216, %v1324
      %v1395 = vadd.f32 %v1217, %v1329
      %v1396 = vadd.f32 %v1218, %v1334
      %v1397 = vadd.f32 %v1219, %v1339
      %v1398 = vadd.f32 %v1220, %v1344
      %v1399 = vadd.f32 %v1221, %v1349
      %v1400 = vadd.f32 %v1222, %v1354
      %v1401 = vadd.f32 %v1223, %v1359
      %v1402 = vadd.f32 %v1224, %v1364
      %v1403 = vadd.f32 %v1225, %v1369
      %v1404 = vadd.f32 %v1226, %v1374
      %v1405 = vadd.f32 %v1227, %v1379
      %v1406 = vadd.f32 %v1228, %v1384
      %v1407 = vadd.f32 %v1229, %v1389
      %1408 = vst [vmem:[#allocation3] sm:$0xff] %v1392
      %1409 = vst [vmem:[#allocation3 + $0x8] sm:$0xff] %v1393
      %1410 = vst [vmem:[#allocation3 + $0x10] sm:$0xff] %v1394
      %1411 = vst [vmem:[#allocation3 + $0x18] sm:$0xff] %v1395
      %1412 = vst [vmem:[#allocation3 + $0x20] sm:$0xff] %v1396
      %1413 = vst [vmem:[#allocation3 + $0x28] sm:$0xff] %v1397
      %1414 = vst [vmem:[#allocation3 + $0x30] sm:$0xff] %v1398
      %1415 = vst [vmem:[#allocation3 + $0x38] sm:$0xff] %v1399
      %1416 = vst [vmem:[#allocation3 + $0x40] sm:$0xff] %v1400
      %1417 = vst [vmem:[#allocation3 + $0x48] sm:$0xff] %v1401
      %1418 = vst [vmem:[#allocation3 + $0x50] sm:$0xff] %v1402
      %1419 = vst [vmem:[#allocation3 + $0x58] sm:$0xff] %v1403
      %1420 = vst [vmem:[#allocation3 + $0x60] sm:$0xff] %v1404
      %1421 = vst [vmem:[#allocation3 + $0x68] sm:$0xff] %v1405
      %1422 = vst [vmem:[#allocation3 + $0x70] sm:$0xff] %v1406
      %1423 = vst [vmem:[#allocation3 + $0x78] sm:$0xff] %v1407
      %v1424 = vld [vmem:[#allocation3] sm:$0xff]
      %v1425 = vld [vmem:[#allocation3 + $0x8] sm:$0xff]
      %v1426 = vld [vmem:[#allocation3 + $0x10] sm:$0xff]
      %v1427 = vld [vmem:[#allocation3 + $0x18] sm:$0xff]
      %v1428 = vld [vmem:[#allocation3 + $0x20] sm:$0xff]
      %v1429 = vld [vmem:[#allocation3 + $0x28] sm:$0xff]
      %v1430 = vld [vmem:[#allocation3 + $0x30] sm:$0xff]
      %v1431 = vld [vmem:[#allocation3 + $0x38] sm:$0xff]
      %v1432 = vld [vmem:[#allocation3 + $0x40] sm:$0xff]
      %v1433 = vld [vmem:[#allocation3 + $0x48] sm:$0xff]
      %v1434 = vld [vmem:[#allocation3 + $0x50] sm:$0xff]
      %v1435 = vld [vmem:[#allocation3 + $0x58] sm:$0xff]
      %v1436 = vld [vmem:[#allocation3 + $0x60] sm:$0xff]
      %v1437 = vld [vmem:[#allocation3 + $0x68] sm:$0xff]
      %v1438 = vld [vmem:[#allocation3 + $0x70] sm:$0xff]
      %v1439 = vld [vmem:[#allocation3 + $0x78] sm:$0xff]
      %s1440 = scalar_lea.vmem %s2, 512
      %v1441 = vld [vmem:[%s1440] sm:$0xff]
      %v1442 = vld [vmem:[%s1440 + $0x8] sm:$0xff]
      %v1443 = vld [vmem:[%s1440 + $0x10] sm:$0xff]
      %v1444 = vld [vmem:[%s1440 + $0x18] sm:$0xff]
      %v1445 = vld [vmem:[%s1440 + $0x20] sm:$0xff]
      %v1446 = vld [vmem:[%s1440 + $0x28] sm:$0xff]
      %v1447 = vld [vmem:[%s1440 + $0x30] sm:$0xff]
      %v1448 = vld [vmem:[%s1440 + $0x38] sm:$0xff]
      %v1449 = vld [vmem:[%s1440 + $0x40] sm:$0xff]
      %v1450 = vld [vmem:[%s1440 + $0x48] sm:$0xff]
      %v1451 = vld [vmem:[%s1440 + $0x50] sm:$0xff]
      %v1452 = vld [vmem:[%s1440 + $0x58] sm:$0xff]
      %v1453 = vld [vmem:[%s1440 + $0x60] sm:$0xff]
      %v1454 = vld [vmem:[%s1440 + $0x68] sm:$0xff]
      %v1455 = vld [vmem:[%s1440 + $0x70] sm:$0xff]
      %v1456 = vld [vmem:[%s1440 + $0x78] sm:$0xff]
      %1457 = vmatprep.subr.mxu0 0.0
      %1458 = vmatpush1.msra.mxu0 %v1441
      %1459 = vmatprep.subr.mxu0 0.0
      %1460 = vmatpush1.msra.mxu0 %v1442
      %1461 = vmatprep.subr.mxu0 0.0
      %1462 = vmatpush1.msra.mxu0 %v1443
      %1463 = vmatprep.subr.mxu0 0.0
      %1464 = vmatpush1.msra.mxu0 %v1444
      %1465 = vmatprep.subr.mxu0 0.0
      %1466 = vmatpush1.msra.mxu0 %v1445
      %1467 = vmatprep.subr.mxu0 0.0
      %1468 = vmatpush1.msra.mxu0 %v1446
      %1469 = vmatprep.subr.mxu0 0.0
      %1470 = vmatpush1.msra.mxu0 %v1447
      %1471 = vmatprep.subr.mxu0 0.0
      %1472 = vmatpush1.msra.mxu0 %v1448
      %1473 = vmatprep.subr.mxu0 0.0
      %1474 = vmatpush1.msra.mxu0 %v1449
      %1475 = vmatprep.subr.mxu0 0.0
      %1476 = vmatpush1.msra.mxu0 %v1450
      %1477 = vmatprep.subr.mxu0 0.0
      %1478 = vmatpush1.msra.mxu0 %v1451
      %1479 = vmatprep.subr.mxu0 0.0
      %1480 = vmatpush1.msra.mxu0 %v1452
      %1481 = vmatprep.subr.mxu0 0.0
      %1482 = vmatpush1.msra.mxu0 %v1453
      %1483 = vmatprep.subr.mxu0 0.0
      %1484 = vmatpush1.msra.mxu0 %v1454
      %1485 = vmatprep.subr.mxu0 0.0
      %1486 = vmatpush1.msra.mxu0 %v1455
      %1487 = vmatprep.subr.mxu0 0.0
      %1488 = vmatpush1.msra.mxu0 %v1456
      %1489 = vmatprep.subr.mxu0 0.0
      %1490 = vmatpush1.msra.mxu0 0.0
      %1491 = vmatprep.subr.mxu0 0.0
      %1492 = vmatpush1.msra.mxu0 0.0
      %1493 = vmatprep.subr.mxu0 0.0
      %1494 = vmatpush1.msra.mxu0 0.0
      %1495 = vmatprep.subr.mxu0 0.0
      %1496 = vmatpush1.msra.mxu0 0.0
      %1497 = vmatprep.subr.mxu0 0.0
      %1498 = vmatpush1.msra.mxu0 0.0
      %1499 = vmatprep.subr.mxu0 0.0
      %1500 = vmatpush1.msra.mxu0 0.0
      %1501 = vmatprep.subr.mxu0 0.0
      %1502 = vmatpush1.msra.mxu0 0.0
      %1503 = vmatprep.subr.mxu0 0.0
      %1504 = vmatpush1.msra.mxu0 0.0
      %1505 = vmatprep.subr.mxu0 0.0
      %1506 = vmatpush1.msra.mxu0 0.0
      %1507 = vmatprep.subr.mxu0 0.0
      %1508 = vmatpush1.msra.mxu0 0.0
      %1509 = vmatprep.subr.mxu0 0.0
      %1510 = vmatpush1.msra.mxu0 0.0
      %1511 = vmatprep.subr.mxu0 0.0
      %1512 = vmatpush1.msra.mxu0 0.0
      %1513 = vmatprep.subr.mxu0 0.0
      %1514 = vmatpush1.msra.mxu0 0.0
      %1515 = vmatprep.subr.mxu0 0.0
      %1516 = vmatpush1.msra.mxu0 0.0
      %1517 = vmatprep.subr.mxu0 0.0
      %1518 = vmatpush1.msra.mxu0 0.0
      %1519 = vmatprep.subr.mxu0 0.0
      %1520 = vmatpush1.msra.mxu0 0.0
      %1521 = vmatprep.mubr.f32.mxu0 0.0
      %1522 = vmatmul.mubr.f32.gmra.mrb[0].mxu0 %v1151
      %v1523 = vpop.f32.mrb[0].mxu0
      %v1524 = vadd.f32 0.0, %v1523
      %v1525 = vpop.f32.mrb[0].mxu0
      %1526 = vmatprep.mubr.f32.mxu0 0.0
      %1527 = vmatmul.mubr.f32.gmra.mrb[0].mxu0 %v1153
      %v1528 = vpop.f32.mrb[0].mxu0
      %v1529 = vadd.f32 0.0, %v1528
      %v1530 = vpop.f32.mrb[0].mxu0
      %1531 = vmatprep.mubr.f32.mxu0 0.0
      %1532 = vmatmul.mubr.f32.gmra.mrb[0].mxu0 %v1156
      %v1533 = vpop.f32.mrb[0].mxu0
      %v1534 = vadd.f32 0.0, %v1533
      %v1535 = vpop.f32.mrb[0].mxu0
      %1536 = vmatprep.mubr.f32.mxu0 0.0
      %1537 = vmatmul.mubr.f32.gmra.mrb[0].mxu0 %v1158
      %v1538 = vpop.f32.mrb[0].mxu0
      %v1539 = vadd.f32 0.0, %v1538
      %v1540 = vpop.f32.mrb[0].mxu0
      %1541 = vmatprep.mubr.f32.mxu0 0.0
      %1542 = vmatmul.mubr.f32.gmra.mrb[0].mxu0 %v1161
      %v1543 = vpop.f32.mrb[0].mxu0
      %v1544 = vadd.f32 0.0, %v1543
      %v1545 = vpop.f32.mrb[0].mxu0
      %1546 = vmatprep.mubr.f32.mxu0 0.0
      %1547 = vmatmul.mubr.f32.gmra.mrb[0].mxu0 %v1163
      %v1548 = vpop.f32.mrb[0].mxu0
      %v1549 = vadd.f32 0.0, %v1548
      %v1550 = vpop.f32.mrb[0].mxu0
      %1551 = vmatprep.mubr.f32.mxu0 0.0
      %1552 = vmatmul.mubr.f32.gmra.mrb[0].mxu0 %v1166
      %v1553 = vpop.f32.mrb[0].mxu0
      %v1554 = vadd.f32 0.0, %v1553
      %v1555 = vpop.f32.mrb[0].mxu0
      %1556 = vmatprep.mubr.f32.mxu0 0.0
      %1557 = vmatmul.mubr.f32.gmra.mrb[0].mxu0 %v1168
      %v1558 = vpop.f32.mrb[0].mxu0
      %v1559 = vadd.f32 0.0, %v1558
      %v1560 = vpop.f32.mrb[0].mxu0
      %1561 = vmatprep.mubr.f32.mxu0 0.0
      %1562 = vmatmul.mubr.f32.gmra.mrb[0].mxu0 %v1171
      %v1563 = vpop.f32.mrb[0].mxu0
      %v1564 = vadd.f32 0.0, %v1563
      %v1565 = vpop.f32.mrb[0].mxu0
      %1566 = vmatprep.mubr.f32.mxu0 0.0
      %1567 = vmatmul.mubr.f32.gmra.mrb[0].mxu0 %v1173
      %v1568 = vpop.f32.mrb[0].mxu0
      %v1569 = vadd.f32 0.0, %v1568
      %v1570 = vpop.f32.mrb[0].mxu0
      %1571 = vmatprep.mubr.f32.mxu0 0.0
      %1572 = vmatmul.mubr.f32.gmra.mrb[0].mxu0 %v1176
      %v1573 = vpop.f32.mrb[0].mxu0
      %v1574 = vadd.f32 0.0, %v1573
      %v1575 = vpop.f32.mrb[0].mxu0
      %1576 = vmatprep.mubr.f32.mxu0 0.0
      %1577 = vmatmul.mubr.f32.gmra.mrb[0].mxu0 %v1178
      %v1578 = vpop.f32.mrb[0].mxu0
      %v1579 = vadd.f32 0.0, %v1578
      %v1580 = vpop.f32.mrb[0].mxu0
      %1581 = vmatprep.mubr.f32.mxu0 0.0
      %1582 = vmatmul.mubr.f32.gmra.mrb[0].mxu0 %v1181
      %v1583 = vpop.f32.mrb[0].mxu0
      %v1584 = vadd.f32 0.0, %v1583
      %v1585 = vpop.f32.mrb[0].mxu0
      %1586 = vmatprep.mubr.f32.mxu0 0.0
      %1587 = vmatmul.mubr.f32.gmra.mrb[0].mxu0 %v1183
      %v1588 = vpop.f32.mrb[0].mxu0
      %v1589 = vadd.f32 0.0, %v1588
      %v1590 = vpop.f32.mrb[0].mxu0
      %1591 = vmatprep.mubr.f32.mxu0 0.0
      %1592 = vmatmul.mubr.f32.gmra.mrb[0].mxu0 %v1186
      %v1593 = vpop.f32.mrb[0].mxu0
      %v1594 = vadd.f32 0.0, %v1593
      %v1595 = vpop.f32.mrb[0].mxu0
      %1596 = vmatprep.mubr.f32.mxu0 0.0
      %1597 = vmatmul.mubr.f32.gmra.mrb[0].mxu0 %v1188
      %v1598 = vpop.f32.mrb[0].mxu0
      %v1599 = vadd.f32 0.0, %v1598
      %v1600 = vpop.f32.mrb[0].mxu0
      %1601 = vdwg.mxu0
      %v1602 = vadd.f32 %v1424, %v1524
      %v1603 = vadd.f32 %v1425, %v1529
      %v1604 = vadd.f32 %v1426, %v1534
      %v1605 = vadd.f32 %v1427, %v1539
      %v1606 = vadd.f32 %v1428, %v1544
      %v1607 = vadd.f32 %v1429, %v1549
      %v1608 = vadd.f32 %v1430, %v1554
      %v1609 = vadd.f32 %v1431, %v1559
      %v1610 = vadd.f32 %v1432, %v1564
      %v1611 = vadd.f32 %v1433, %v1569
      %v1612 = vadd.f32 %v1434, %v1574
      %v1613 = vadd.f32 %v1435, %v1579
      %v1614 = vadd.f32 %v1436, %v1584
      %v1615 = vadd.f32 %v1437, %v1589
      %v1616 = vadd.f32 %v1438, %v1594
      %v1617 = vadd.f32 %v1439, %v1599
      %1618 = vst [vmem:[#allocation3] sm:$0xff] %v1602
      %1619 = vst [vmem:[#allocation3 + $0x8] sm:$0xff] %v1603
      %1620 = vst [vmem:[#allocation3 + $0x10] sm:$0xff] %v1604
      %1621 = vst [vmem:[#allocation3 + $0x18] sm:$0xff] %v1605
      %1622 = vst [vmem:[#allocation3 + $0x20] sm:$0xff] %v1606
      %1623 = vst [vmem:[#allocation3 + $0x28] sm:$0xff] %v1607
      %1624 = vst [vmem:[#allocation3 + $0x30] sm:$0xff] %v1608
      %1625 = vst [vmem:[#allocation3 + $0x38] sm:$0xff] %v1609
      %1626 = vst [vmem:[#allocation3 + $0x40] sm:$0xff] %v1610
      %1627 = vst [vmem:[#allocation3 + $0x48] sm:$0xff] %v1611
      %1628 = vst [vmem:[#allocation3 + $0x50] sm:$0xff] %v1612
      %1629 = vst [vmem:[#allocation3 + $0x58] sm:$0xff] %v1613
      %1630 = vst [vmem:[#allocation3 + $0x60] sm:$0xff] %v1614
      %1631 = vst [vmem:[#allocation3 + $0x68] sm:$0xff] %v1615
      %1632 = vst [vmem:[#allocation3 + $0x70] sm:$0xff] %v1616
      %1633 = vst [vmem:[#allocation3 + $0x78] sm:$0xff] %v1617
      %v1634 = vld [vmem:[#allocation3] sm:$0xff]
      %v1635 = vld [vmem:[#allocation3 + $0x8] sm:$0xff]
      %v1636 = vld [vmem:[#allocation3 + $0x10] sm:$0xff]
      %v1637 = vld [vmem:[#allocation3 + $0x18] sm:$0xff]
      %v1638 = vld [vmem:[#allocation3 + $0x20] sm:$0xff]
      %v1639 = vld [vmem:[#allocation3 + $0x28] sm:$0xff]
      %v1640 = vld [vmem:[#allocation3 + $0x30] sm:$0xff]
      %v1641 = vld [vmem:[#allocation3 + $0x38] sm:$0xff]
      %v1642 = vld [vmem:[#allocation3 + $0x40] sm:$0xff]
      %v1643 = vld [vmem:[#allocation3 + $0x48] sm:$0xff]
      %v1644 = vld [vmem:[#allocation3 + $0x50] sm:$0xff]
      %v1645 = vld [vmem:[#allocation3 + $0x58] sm:$0xff]
      %v1646 = vld [vmem:[#allocation3 + $0x60] sm:$0xff]
      %v1647 = vld [vmem:[#allocation3 + $0x68] sm:$0xff]
      %v1648 = vld [vmem:[#allocation3 + $0x70] sm:$0xff]
      %v1649 = vld [vmem:[#allocation3 + $0x78] sm:$0xff]
      %s1650 = scalar_lea.vmem %s2, 896
      %v1651 = vld [vmem:[%s1650] sm:$0xff]
      %v1652 = vld [vmem:[%s1650 + $0x8] sm:$0xff]
      %v1653 = vld [vmem:[%s1650 + $0x10] sm:$0xff]
      %v1654 = vld [vmem:[%s1650 + $0x18] sm:$0xff]
      %v1655 = vld [vmem:[%s1650 + $0x20] sm:$0xff]
      %v1656 = vld [vmem:[%s1650 + $0x28] sm:$0xff]
      %v1657 = vld [vmem:[%s1650 + $0x30] sm:$0xff]
      %v1658 = vld [vmem:[%s1650 + $0x38] sm:$0xff]
      %v1659 = vld [vmem:[%s1650 + $0x40] sm:$0xff]
      %v1660 = vld [vmem:[%s1650 + $0x48] sm:$0xff]
      %v1661 = vld [vmem:[%s1650 + $0x50] sm:$0xff]
      %v1662 = vld [vmem:[%s1650 + $0x58] sm:$0xff]
      %v1663 = vld [vmem:[%s1650 + $0x60] sm:$0xff]
      %v1664 = vld [vmem:[%s1650 + $0x68] sm:$0xff]
      %v1665 = vld [vmem:[%s1650 + $0x70] sm:$0xff]
      %v1666 = vld [vmem:[%s1650 + $0x78] sm:$0xff]
      %1667 = vmatprep.subr.mxu0 0.0
      %1668 = vmatpush1.msra.mxu0 %v1651
      %1669 = vmatprep.subr.mxu0 0.0
      %1670 = vmatpush1.msra.mxu0 %v1652
      %1671 = vmatprep.subr.mxu0 0.0
      %1672 = vmatpush1.msra.mxu0 %v1653
      %1673 = vmatprep.subr.mxu0 0.0
      %1674 = vmatpush1.msra.mxu0 %v1654
      %1675 = vmatprep.subr.mxu0 0.0
      %1676 = vmatpush1.msra.mxu0 %v1655
      %1677 = vmatprep.subr.mxu0 0.0
      %1678 = vmatpush1.msra.mxu0 %v1656
      %1679 = vmatprep.subr.mxu0 0.0
      %1680 = vmatpush1.msra.mxu0 %v1657
      %1681 = vmatprep.subr.mxu0 0.0
      %1682 = vmatpush1.msra.mxu0 %v1658
      %1683 = vmatprep.subr.mxu0 0.0
      %1684 = vmatpush1.msra.mxu0 %v1659
      %1685 = vmatprep.subr.mxu0 0.0
      %1686 = vmatpush1.msra.mxu0 %v1660
      %1687 = vmatprep.subr.mxu0 0.0
      %1688 = vmatpush1.msra.mxu0 %v1661
      %1689 = vmatprep.subr.mxu0 0.0
      %1690 = vmatpush1.msra.mxu0 %v1662
      %1691 = vmatprep.subr.mxu0 0.0
      %1692 = vmatpush1.msra.mxu0 %v1663
      %1693 = vmatprep.subr.mxu0 0.0
      %1694 = vmatpush1.msra.mxu0 %v1664
      %1695 = vmatprep.subr.mxu0 0.0
      %1696 = vmatpush1.msra.mxu0 %v1665
      %1697 = vmatprep.subr.mxu0 0.0
      %1698 = vmatpush1.msra.mxu0 %v1666
      %1699 = vmatprep.subr.mxu0 0.0
      %1700 = vmatpush1.msra.mxu0 0.0
      %1701 = vmatprep.subr.mxu0 0.0
      %1702 = vmatpush1.msra.mxu0 0.0
      %1703 = vmatprep.subr.mxu0 0.0
      %1704 = vmatpush1.msra.mxu0 0.0
      %1705 = vmatprep.subr.mxu0 0.0
      %1706 = vmatpush1.msra.mxu0 0.0
      %1707 = vmatprep.subr.mxu0 0.0
      %1708 = vmatpush1.msra.mxu0 0.0
      %1709 = vmatprep.subr.mxu0 0.0
      %1710 = vmatpush1.msra.mxu0 0.0
      %1711 = vmatprep.subr.mxu0 0.0
      %1712 = vmatpush1.msra.mxu0 0.0
      %1713 = vmatprep.subr.mxu0 0.0
      %1714 = vmatpush1.msra.mxu0 0.0
      %1715 = vmatprep.subr.mxu0 0.0
      %1716 = vmatpush1.msra.mxu0 0.0
      %1717 = vmatprep.subr.mxu0 0.0
      %1718 = vmatpush1.msra.mxu0 0.0
      %1719 = vmatprep.subr.mxu0 0.0
      %1720 = vmatpush1.msra.mxu0 0.0
      %1721 = vmatprep.subr.mxu0 0.0
      %1722 = vmatpush1.msra.mxu0 0.0
      %1723 = vmatprep.subr.mxu0 0.0
      %1724 = vmatpush1.msra.mxu0 0.0
      %1725 = vmatprep.subr.mxu0 0.0
      %1726 = vmatpush1.msra.mxu0 0.0
      %1727 = vmatprep.subr.mxu0 0.0
      %1728 = vmatpush1.msra.mxu0 0.0
      %1729 = vmatprep.subr.mxu0 0.0
      %1730 = vmatpush1.msra.mxu0 0.0
      %1731 = vmatprep.mubr.f32.mxu0 0.0
      %1732 = vmatmul.mubr.f32.gmra.mrb[0].mxu0 %v1156
      %v1733 = vpop.f32.mrb[0].mxu0
      %v1734 = vadd.f32 0.0, %v1733
      %v1735 = vpop.f32.mrb[0].mxu0
      %1736 = vmatprep.mubr.f32.mxu0 0.0
      %1737 = vmatmul.mubr.f32.gmra.mrb[0].mxu0 %v1158
      %v1738 = vpop.f32.mrb[0].mxu0
      %v1739 = vadd.f32 0.0, %v1738
      %v1740 = vpop.f32.mrb[0].mxu0
      %1741 = vmatprep.mubr.f32.mxu0 0.0
      %1742 = vmatmul.mubr.f32.gmra.mrb[0].mxu0 %v1161
      %v1743 = vpop.f32.mrb[0].mxu0
      %v1744 = vadd.f32 0.0, %v1743
      %v1745 = vpop.f32.mrb[0].mxu0
      %1746 = vmatprep.mubr.f32.mxu0 0.0
      %1747 = vmatmul.mubr.f32.gmra.mrb[0].mxu0 %v1163
      %v1748 = vpop.f32.mrb[0].mxu0
      %v1749 = vadd.f32 0.0, %v1748
      %v1750 = vpop.f32.mrb[0].mxu0
      %1751 = vmatprep.mubr.f32.mxu0 0.0
      %1752 = vmatmul.mubr.f32.gmra.mrb[0].mxu0 %v1166
      %v1753 = vpop.f32.mrb[0].mxu0
      %v1754 = vadd.f32 0.0, %v1753
      %v1755 = vpop.f32.mrb[0].mxu0
      %1756 = vmatprep.mubr.f32.mxu0 0.0
      %1757 = vmatmul.mubr.f32.gmra.mrb[0].mxu0 %v1168
      %v1758 = vpop.f32.mrb[0].mxu0
      %v1759 = vadd.f32 0.0, %v1758
      %v1760 = vpop.f32.mrb[0].mxu0
      %1761 = vmatprep.mubr.f32.mxu0 0.0
      %1762 = vmatmul.mubr.f32.gmra.mrb[0].mxu0 %v1171
      %v1763 = vpop.f32.mrb[0].mxu0
      %v1764 = vadd.f32 0.0, %v1763
      %v1765 = vpop.f32.mrb[0].mxu0
      %1766 = vmatprep.mubr.f32.mxu0 0.0
      %1767 = vmatmul.mubr.f32.gmra.mrb[0].mxu0 %v1173
      %v1768 = vpop.f32.mrb[0].mxu0
      %v1769 = vadd.f32 0.0, %v1768
      %v1770 = vpop.f32.mrb[0].mxu0
      %1771 = vmatprep.mubr.f32.mxu0 0.0
      %1772 = vmatmul.mubr.f32.gmra.mrb[0].mxu0 %v1176
      %v1773 = vpop.f32.mrb[0].mxu0
      %v1774 = vadd.f32 0.0, %v1773
      %v1775 = vpop.f32.mrb[0].mxu0
      %1776 = vmatprep.mubr.f32.mxu0 0.0
      %1777 = vmatmul.mubr.f32.gmra.mrb[0].mxu0 %v1178
      %v1778 = vpop.f32.mrb[0].mxu0
      %v1779 = vadd.f32 0.0, %v1778
      %v1780 = vpop.f32.mrb[0].mxu0
      %1781 = vmatprep.mubr.f32.mxu0 0.0
      %1782 = vmatmul.mubr.f32.gmra.mrb[0].mxu0 %v1181
      %v1783 = vpop.f32.mrb[0].mxu0
      %v1784 = vadd.f32 0.0, %v1783
      %v1785 = vpop.f32.mrb[0].mxu0
      %1786 = vmatprep.mubr.f32.mxu0 0.0
      %1787 = vmatmul.mubr.f32.gmra.mrb[0].mxu0 %v1183
      %v1788 = vpop.f32.mrb[0].mxu0
      %v1789 = vadd.f32 0.0, %v1788
      %v1790 = vpop.f32.mrb[0].mxu0
      %1791 = vmatprep.mubr.f32.mxu0 0.0
      %1792 = vmatmul.mubr.f32.gmra.mrb[0].mxu0 %v1186
      %v1793 = vpop.f32.mrb[0].mxu0
      %v1794 = vadd.f32 0.0, %v1793
      %v1795 = vpop.f32.mrb[0].mxu0
      %1796 = vmatprep.mubr.f32.mxu0 0.0
      %1797 = vmatmul.mubr.f32.gmra.mrb[0].mxu0 %v1188
      %v1798 = vpop.f32.mrb[0].mxu0
      %v1799 = vadd.f32 0.0, %v1798
      %v1800 = vpop.f32.mrb[0].mxu0
      %1801 = vmatprep.mubr.f32.mxu0 0.0
      %1802 = vmatmul.mubr.f32.gmra.mrb[0].mxu0 %v1191
      %v1803 = vpop.f32.mrb[0].mxu0
      %v1804 = vadd.f32 0.0, %v1803
      %v1805 = vpop.f32.mrb[0].mxu0
      %1806 = vmatprep.mubr.f32.mxu0 0.0
      %1807 = vmatmul.mubr.f32.gmra.mrb[0].mxu0 %v1193
      %v1808 = vpop.f32.mrb[0].mxu0
      %v1809 = vadd.f32 0.0, %v1808
      %v1810 = vpop.f32.mrb[0].mxu0
      %1811 = vdwg.mxu0
      %v1812 = vadd.f32 %v1634, %v1734
      %v1813 = vadd.f32 %v1635, %v1739
      %v1814 = vadd.f32 %v1636, %v1744
      %v1815 = vadd.f32 %v1637, %v1749
      %v1816 = vadd.f32 %v1638, %v1754
      %v1817 = vadd.f32 %v1639, %v1759
      %v1818 = vadd.f32 %v1640, %v1764
      %v1819 = vadd.f32 %v1641, %v1769
      %v1820 = vadd.f32 %v1642, %v1774
      %v1821 = vadd.f32 %v1643, %v1779
      %v1822 = vadd.f32 %v1644, %v1784
      %v1823 = vadd.f32 %v1645, %v1789
      %v1824 = vadd.f32 %v1646, %v1794
      %v1825 = vadd.f32 %v1647, %v1799
      %v1826 = vadd.f32 %v1648, %v1804
      %v1827 = vadd.f32 %v1649, %v1809
      %1828 = vst [vmem:[#allocation3] sm:$0xff] %v1812
      %1829 = vst [vmem:[#allocation3 + $0x8] sm:$0xff] %v1813
      %1830 = vst [vmem:[#allocation3 + $0x10] sm:$0xff] %v1814
      %1831 = vst [vmem:[#allocation3 + $0x18] sm:$0xff] %v1815
      %1832 = vst [vmem:[#allocation3 + $0x20] sm:$0xff] %v1816
      %1833 = vst [vmem:[#allocation3 + $0x28] sm:$0xff] %v1817
      %1834 = vst [vmem:[#allocation3 + $0x30] sm:$0xff] %v1818
      %1835 = vst [vmem:[#allocation3 + $0x38] sm:$0xff] %v1819
      %1836 = vst [vmem:[#allocation3 + $0x40] sm:$0xff] %v1820
      %1837 = vst [vmem:[#allocation3 + $0x48] sm:$0xff] %v1821
      %1838 = vst [vmem:[#allocation3 + $0x50] sm:$0xff] %v1822
      %1839 = vst [vmem:[#allocation3 + $0x58] sm:$0xff] %v1823
      %1840 = vst [vmem:[#allocation3 + $0x60] sm:$0xff] %v1824
      %1841 = vst [vmem:[#allocation3 + $0x68] sm:$0xff] %v1825
      %1842 = vst [vmem:[#allocation3 + $0x70] sm:$0xff] %v1826
      %1843 = vst [vmem:[#allocation3 + $0x78] sm:$0xff] %v1827
      %vm1844 = vcmask 1045504
      %v1845 = vrot.slane %v438, 2
      %v1846 = vrot.slane %v439, 2
      %v1847 = vsel %vm1844, %v1845, %v1846
      %v1848 = vrot.slane %v440, 2
      %v1849 = vsel %vm1844, %v1846, %v1848
      %v1850 = vrot.slane %v441, 2
      %v1851 = vrot.slane %v442, 2
      %v1852 = vsel %vm1844, %v1850, %v1851
      %v1853 = vrot.slane %v443, 2
      %v1854 = vsel %vm1844, %v1851, %v1853
      %v1855 = vrot.slane %v444, 2
      %v1856 = vrot.slane %v445, 2
      %v1857 = vsel %vm1844, %v1855, %v1856
      %v1858 = vrot.slane %v446, 2
      %v1859 = vsel %vm1844, %v1856, %v1858
      %v1860 = vrot.slane %v447, 2
      %v1861 = vrot.slane %v448, 2
      %v1862 = vsel %vm1844, %v1860, %v1861
      %v1863 = vrot.slane %v449, 2
      %v1864 = vsel %vm1844, %v1861, %v1863
      %v1865 = vrot.slane %v450, 2
      %v1866 = vrot.slane %v451, 2
      %v1867 = vsel %vm1844, %v1865, %v1866
      %v1868 = vrot.slane %v452, 2
      %v1869 = vsel %vm1844, %v1866, %v1868
      %v1870 = vrot.slane %v453, 2
      %v1871 = vrot.slane %v454, 2
      %v1872 = vsel %vm1844, %v1870, %v1871
      %v1873 = vrot.slane %v455, 2
      %v1874 = vsel %vm1844, %v1871, %v1873
      %v1875 = vrot.slane %v456, 2
      %v1876 = vrot.slane %v457, 2
      %v1877 = vsel %vm1844, %v1875, %v1876
      %v1878 = vrot.slane %v458, 2
      %v1879 = vsel %vm1844, %v1876, %v1878
      %v1880 = vrot.slane %v459, 2
      %v1881 = vrot.slane %v460, 2
      %v1882 = vsel %vm1844, %v1880, %v1881
      %v1883 = vrot.slane %v461, 2
      %v1884 = vsel %vm1844, %v1881, %v1883
      %v1885 = vrot.slane %v462, 2
      %v1886 = vrot.slane %v463, 2
      %v1887 = vsel %vm1844, %v1885, %v1886
      %v1888 = vrot.slane %v464, 2
      %v1889 = vsel %vm1844, %v1886, %v1888
      %v1890 = vrot.slane %v465, 2
      %v1891 = vrot.slane %v466, 2
      %v1892 = vsel %vm1844, %v1890, %v1891
      %v1893 = vrot.slane %v467, 2
      %v1894 = vsel %vm1844, %v1891, %v1893
      %v1915 = vld [vmem:[#allocation3] sm:$0xff]
      %v1916 = vld [vmem:[#allocation3 + $0x8] sm:$0xff]
      %v1917 = vld [vmem:[#allocation3 + $0x10] sm:$0xff]
      %v1918 = vld [vmem:[#allocation3 + $0x18] sm:$0xff]
      %v1919 = vld [vmem:[#allocation3 + $0x20] sm:$0xff]
      %v1920 = vld [vmem:[#allocation3 + $0x28] sm:$0xff]
      %v1921 = vld [vmem:[#allocation3 + $0x30] sm:$0xff]
      %v1922 = vld [vmem:[#allocation3 + $0x38] sm:$0xff]
      %v1923 = vld [vmem:[#allocation3 + $0x40] sm:$0xff]
      %v1924 = vld [vmem:[#allocation3 + $0x48] sm:$0xff]
      %v1925 = vld [vmem:[#allocation3 + $0x50] sm:$0xff]
      %v1926 = vld [vmem:[#allocation3 + $0x58] sm:$0xff]
      %v1927 = vld [vmem:[#allocation3 + $0x60] sm:$0xff]
      %v1928 = vld [vmem:[#allocation3 + $0x68] sm:$0xff]
      %v1929 = vld [vmem:[#allocation3 + $0x70] sm:$0xff]
      %v1930 = vld [vmem:[#allocation3 + $0x78] sm:$0xff]
      %s1931 = scalar_lea.vmem %s2, 256
      %v1932 = vld [vmem:[%s1931] sm:$0xff]
      %v1933 = vld [vmem:[%s1931 + $0x8] sm:$0xff]
      %v1934 = vld [vmem:[%s1931 + $0x10] sm:$0xff]
      %v1935 = vld [vmem:[%s1931 + $0x18] sm:$0xff]
      %v1936 = vld [vmem:[%s1931 + $0x20] sm:$0xff]
      %v1937 = vld [vmem:[%s1931 + $0x28] sm:$0xff]
      %v1938 = vld [vmem:[%s1931 + $0x30] sm:$0xff]
      %v1939 = vld [vmem:[%s1931 + $0x38] sm:$0xff]
      %v1940 = vld [vmem:[%s1931 + $0x40] sm:$0xff]
      %v1941 = vld [vmem:[%s1931 + $0x48] sm:$0xff]
      %v1942 = vld [vmem:[%s1931 + $0x50] sm:$0xff]
      %v1943 = vld [vmem:[%s1931 + $0x58] sm:$0xff]
      %v1944 = vld [vmem:[%s1931 + $0x60] sm:$0xff]
      %v1945 = vld [vmem:[%s1931 + $0x68] sm:$0xff]
      %v1946 = vld [vmem:[%s1931 + $0x70] sm:$0xff]
      %v1947 = vld [vmem:[%s1931 + $0x78] sm:$0xff]
      %1948 = vmatprep.subr.mxu0 0.0
      %1949 = vmatpush1.msra.mxu0 %v1932
      %1950 = vmatprep.subr.mxu0 0.0
      %1951 = vmatpush1.msra.mxu0 %v1933
      %1952 = vmatprep.subr.mxu0 0.0
      %1953 = vmatpush1.msra.mxu0 %v1934
      %1954 = vmatprep.subr.mxu0 0.0
      %1955 = vmatpush1.msra.mxu0 %v1935
      %1956 = vmatprep.subr.mxu0 0.0
      %1957 = vmatpush1.msra.mxu0 %v1936
      %1958 = vmatprep.subr.mxu0 0.0
      %1959 = vmatpush1.msra.mxu0 %v1937
      %1960 = vmatprep.subr.mxu0 0.0
      %1961 = vmatpush1.msra.mxu0 %v1938
      %1962 = vmatprep.subr.mxu0 0.0
      %1963 = vmatpush1.msra.mxu0 %v1939
      %1964 = vmatprep.subr.mxu0 0.0
      %1965 = vmatpush1.msra.mxu0 %v1940
      %1966 = vmatprep.subr.mxu0 0.0
      %1967 = vmatpush1.msra.mxu0 %v1941
      %1968 = vmatprep.subr.mxu0 0.0
      %1969 = vmatpush1.msra.mxu0 %v1942
      %1970 = vmatprep.subr.mxu0 0.0
      %1971 = vmatpush1.msra.mxu0 %v1943
      %1972 = vmatprep.subr.mxu0 0.0
      %1973 = vmatpush1.msra.mxu0 %v1944
      %1974 = vmatprep.subr.mxu0 0.0
      %1975 = vmatpush1.msra.mxu0 %v1945
      %1976 = vmatprep.subr.mxu0 0.0
      %1977 = vmatpush1.msra.mxu0 %v1946
      %1978 = vmatprep.subr.mxu0 0.0
      %1979 = vmatpush1.msra.mxu0 %v1947
      %1980 = vmatprep.subr.mxu0 0.0
      %1981 = vmatpush1.msra.mxu0 0.0
      %1982 = vmatprep.subr.mxu0 0.0
      %1983 = vmatpush1.msra.mxu0 0.0
      %1984 = vmatprep.subr.mxu0 0.0
      %1985 = vmatpush1.msra.mxu0 0.0
      %1986 = vmatprep.subr.mxu0 0.0
      %1987 = vmatpush1.msra.mxu0 0.0
      %1988 = vmatprep.subr.mxu0 0.0
      %1989 = vmatpush1.msra.mxu0 0.0
      %1990 = vmatprep.subr.mxu0 0.0
      %1991 = vmatpush1.msra.mxu0 0.0
      %1992 = vmatprep.subr.mxu0 0.0
      %1993 = vmatpush1.msra.mxu0 0.0
      %1994 = vmatprep.subr.mxu0 0.0
      %1995 = vmatpush1.msra.mxu0 0.0
      %1996 = vmatprep.subr.mxu0 0.0
      %1997 = vmatpush1.msra.mxu0 0.0
      %1998 = vmatprep.subr.mxu0 0.0
      %1999 = vmatpush1.msra.mxu0 0.0
      %2000 = vmatprep.subr.mxu0 0.0
      %2001 = vmatpush1.msra.mxu0 0.0
      %2002 = vmatprep.subr.mxu0 0.0
      %2003 = vmatpush1.msra.mxu0 0.0
      %2004 = vmatprep.subr.mxu0 0.0
      %2005 = vmatpush1.msra.mxu0 0.0
      %2006 = vmatprep.subr.mxu0 0.0
      %2007 = vmatpush1.msra.mxu0 0.0
      %2008 = vmatprep.subr.mxu0 0.0
      %2009 = vmatpush1.msra.mxu0 0.0
      %2010 = vmatprep.subr.mxu0 0.0
      %2011 = vmatpush1.msra.mxu0 0.0
      %2012 = vmatprep.mubr.f32.mxu0 0.0
      %2013 = vmatmul.mubr.f32.gmra.mrb[0].mxu0 %v1847
      %v2014 = vpop.f32.mrb[0].mxu0
      %v2015 = vadd.f32 0.0, %v2014
      %v2016 = vpop.f32.mrb[0].mxu0
      %2017 = vmatprep.mubr.f32.mxu0 0.0
      %2018 = vmatmul.mubr.f32.gmra.mrb[0].mxu0 %v1849
      %v2019 = vpop.f32.mrb[0].mxu0
      %v2020 = vadd.f32 0.0, %v2019
      %v2021 = vpop.f32.mrb[0].mxu0
      %2022 = vmatprep.mubr.f32.mxu0 0.0
      %2023 = vmatmul.mubr.f32.gmra.mrb[0].mxu0 %v1852
      %v2024 = vpop.f32.mrb[0].mxu0
      %v2025 = vadd.f32 0.0, %v2024
      %v2026 = vpop.f32.mrb[0].mxu0
      %2027 = vmatprep.mubr.f32.mxu0 0.0
      %2028 = vmatmul.mubr.f32.gmra.mrb[0].mxu0 %v1854
      %v2029 = vpop.f32.mrb[0].mxu0
      %v2030 = vadd.f32 0.0, %v2029
      %v2031 = vpop.f32.mrb[0].mxu0
      %2032 = vmatprep.mubr.f32.mxu0 0.0
      %2033 = vmatmul.mubr.f32.gmra.mrb[0].mxu0 %v1857
      %v2034 = vpop.f32.mrb[0].mxu0
      %v2035 = vadd.f32 0.0, %v2034
      %v2036 = vpop.f32.mrb[0].mxu0
      %2037 = vmatprep.mubr.f32.mxu0 0.0
      %2038 = vmatmul.mubr.f32.gmra.mrb[0].mxu0 %v1859
      %v2039 = vpop.f32.mrb[0].mxu0
      %v2040 = vadd.f32 0.0, %v2039
      %v2041 = vpop.f32.mrb[0].mxu0
      %2042 = vmatprep.mubr.f32.mxu0 0.0
      %2043 = vmatmul.mubr.f32.gmra.mrb[0].mxu0 %v1862
      %v2044 = vpop.f32.mrb[0].mxu0
      %v2045 = vadd.f32 0.0, %v2044
      %v2046 = vpop.f32.mrb[0].mxu0
      %2047 = vmatprep.mubr.f32.mxu0 0.0
      %2048 = vmatmul.mubr.f32.gmra.mrb[0].mxu0 %v1864
      %v2049 = vpop.f32.mrb[0].mxu0
      %v2050 = vadd.f32 0.0, %v2049
      %v2051 = vpop.f32.mrb[0].mxu0
      %2052 = vmatprep.mubr.f32.mxu0 0.0
      %2053 = vmatmul.mubr.f32.gmra.mrb[0].mxu0 %v1867
      %v2054 = vpop.f32.mrb[0].mxu0
      %v2055 = vadd.f32 0.0, %v2054
      %v2056 = vpop.f32.mrb[0].mxu0
      %2057 = vmatprep.mubr.f32.mxu0 0.0
      %2058 = vmatmul.mubr.f32.gmra.mrb[0].mxu0 %v1869
      %v2059 = vpop.f32.mrb[0].mxu0
      %v2060 = vadd.f32 0.0, %v2059
      %v2061 = vpop.f32.mrb[0].mxu0
      %2062 = vmatprep.mubr.f32.mxu0 0.0
      %2063 = vmatmul.mubr.f32.gmra.mrb[0].mxu0 %v1872
      %v2064 = vpop.f32.mrb[0].mxu0
      %v2065 = vadd.f32 0.0, %v2064
      %v2066 = vpop.f32.mrb[0].mxu0
      %2067 = vmatprep.mubr.f32.mxu0 0.0
      %2068 = vmatmul.mubr.f32.gmra.mrb[0].mxu0 %v1874
      %v2069 = vpop.f32.mrb[0].mxu0
      %v2070 = vadd.f32 0.0, %v2069
      %v2071 = vpop.f32.mrb[0].mxu0
      %2072 = vmatprep.mubr.f32.mxu0 0.0
      %2073 = vmatmul.mubr.f32.gmra.mrb[0].mxu0 %v1877
      %v2074 = vpop.f32.mrb[0].mxu0
      %v2075 = vadd.f32 0.0, %v2074
      %v2076 = vpop.f32.mrb[0].mxu0
      %2077 = vmatprep.mubr.f32.mxu0 0.0
      %2078 = vmatmul.mubr.f32.gmra.mrb[0].mxu0 %v1879
      %v2079 = vpop.f32.mrb[0].mxu0
      %v2080 = vadd.f32 0.0, %v2079
      %v2081 = vpop.f32.mrb[0].mxu0
      %2082 = vmatprep.mubr.f32.mxu0 0.0
      %2083 = vmatmul.mubr.f32.gmra.mrb[0].mxu0 %v1882
      %v2084 = vpop.f32.mrb[0].mxu0
      %v2085 = vadd.f32 0.0, %v2084
      %v2086 = vpop.f32.mrb[0].mxu0
      %2087 = vmatprep.mubr.f32.mxu0 0.0
      %2088 = vmatmul.mubr.f32.gmra.mrb[0].mxu0 %v1884
      %v2089 = vpop.f32.mrb[0].mxu0
      %v2090 = vadd.f32 0.0, %v2089
      %v2091 = vpop.f32.mrb[0].mxu0
      %2092 = vdwg.mxu0
      %v2093 = vadd.f32 %v1915, %v2015
      %v2094 = vadd.f32 %v1916, %v2020
      %v2095 = vadd.f32 %v1917, %v2025
      %v2096 = vadd.f32 %v1918, %v2030
      %v2097 = vadd.f32 %v1919, %v2035
      %v2098 = vadd.f32 %v1920, %v2040
      %v2099 = vadd.f32 %v1921, %v2045
      %v2100 = vadd.f32 %v1922, %v2050
      %v2101 = vadd.f32 %v1923, %v2055
      %v2102 = vadd.f32 %v1924, %v2060
      %v2103 = vadd.f32 %v1925, %v2065
      %v2104 = vadd.f32 %v1926, %v2070
      %v2105 = vadd.f32 %v1927, %v2075
      %v2106 = vadd.f32 %v1928, %v2080
      %v2107 = vadd.f32 %v1929, %v2085
      %v2108 = vadd.f32 %v1930, %v2090
      %2109 = vst [vmem:[#allocation3] sm:$0xff] %v2093
      %2110 = vst [vmem:[#allocation3 + $0x8] sm:$0xff] %v2094
      %2111 = vst [vmem:[#allocation3 + $0x10] sm:$0xff] %v2095
      %2112 = vst [vmem:[#allocation3 + $0x18] sm:$0xff] %v2096
      %2113 = vst [vmem:[#allocation3 + $0x20] sm:$0xff] %v2097
      %2114 = vst [vmem:[#allocation3 + $0x28] sm:$0xff] %v2098
      %2115 = vst [vmem:[#allocation3 + $0x30] sm:$0xff] %v2099
      %2116 = vst [vmem:[#allocation3 + $0x38] sm:$0xff] %v2100
      %2117 = vst [vmem:[#allocation3 + $0x40] sm:$0xff] %v2101
      %2118 = vst [vmem:[#allocation3 + $0x48] sm:$0xff] %v2102
      %2119 = vst [vmem:[#allocation3 + $0x50] sm:$0xff] %v2103
      %2120 = vst [vmem:[#allocation3 + $0x58] sm:$0xff] %v2104
      %2121 = vst [vmem:[#allocation3 + $0x60] sm:$0xff] %v2105
      %2122 = vst [vmem:[#allocation3 + $0x68] sm:$0xff] %v2106
      %2123 = vst [vmem:[#allocation3 + $0x70] sm:$0xff] %v2107
      %2124 = vst [vmem:[#allocation3 + $0x78] sm:$0xff] %v2108
      %v2125 = vld [vmem:[#allocation3] sm:$0xff]
      %v2126 = vld [vmem:[#allocation3 + $0x8] sm:$0xff]
      %v2127 = vld [vmem:[#allocation3 + $0x10] sm:$0xff]
      %v2128 = vld [vmem:[#allocation3 + $0x18] sm:$0xff]
      %v2129 = vld [vmem:[#allocation3 + $0x20] sm:$0xff]
      %v2130 = vld [vmem:[#allocation3 + $0x28] sm:$0xff]
      %v2131 = vld [vmem:[#allocation3 + $0x30] sm:$0xff]
      %v2132 = vld [vmem:[#allocation3 + $0x38] sm:$0xff]
      %v2133 = vld [vmem:[#allocation3 + $0x40] sm:$0xff]
      %v2134 = vld [vmem:[#allocation3 + $0x48] sm:$0xff]
      %v2135 = vld [vmem:[#allocation3 + $0x50] sm:$0xff]
      %v2136 = vld [vmem:[#allocation3 + $0x58] sm:$0xff]
      %v2137 = vld [vmem:[#allocation3 + $0x60] sm:$0xff]
      %v2138 = vld [vmem:[#allocation3 + $0x68] sm:$0xff]
      %v2139 = vld [vmem:[#allocation3 + $0x70] sm:$0xff]
      %v2140 = vld [vmem:[#allocation3 + $0x78] sm:$0xff]
      %s2141 = scalar_lea.vmem %s2, 640
      %v2142 = vld [vmem:[%s2141] sm:$0xff]
      %v2143 = vld [vmem:[%s2141 + $0x8] sm:$0xff]
      %v2144 = vld [vmem:[%s2141 + $0x10] sm:$0xff]
      %v2145 = vld [vmem:[%s2141 + $0x18] sm:$0xff]
      %v2146 = vld [vmem:[%s2141 + $0x20] sm:$0xff]
      %v2147 = vld [vmem:[%s2141 + $0x28] sm:$0xff]
      %v2148 = vld [vmem:[%s2141 + $0x30] sm:$0xff]
      %v2149 = vld [vmem:[%s2141 + $0x38] sm:$0xff]
      %v2150 = vld [vmem:[%s2141 + $0x40] sm:$0xff]
      %v2151 = vld [vmem:[%s2141 + $0x48] sm:$0xff]
      %v2152 = vld [vmem:[%s2141 + $0x50] sm:$0xff]
      %v2153 = vld [vmem:[%s2141 + $0x58] sm:$0xff]
      %v2154 = vld [vmem:[%s2141 + $0x60] sm:$0xff]
      %v2155 = vld [vmem:[%s2141 + $0x68] sm:$0xff]
      %v2156 = vld [vmem:[%s2141 + $0x70] sm:$0xff]
      %v2157 = vld [vmem:[%s2141 + $0x78] sm:$0xff]
      %2158 = vmatprep.subr.mxu0 0.0
      %2159 = vmatpush1.msra.mxu0 %v2142
      %2160 = vmatprep.subr.mxu0 0.0
      %2161 = vmatpush1.msra.mxu0 %v2143
      %2162 = vmatprep.subr.mxu0 0.0
      %2163 = vmatpush1.msra.mxu0 %v2144
      %2164 = vmatprep.subr.mxu0 0.0
      %2165 = vmatpush1.msra.mxu0 %v2145
      %2166 = vmatprep.subr.mxu0 0.0
      %2167 = vmatpush1.msra.mxu0 %v2146
      %2168 = vmatprep.subr.mxu0 0.0
      %2169 = vmatpush1.msra.mxu0 %v2147
      %2170 = vmatprep.subr.mxu0 0.0
      %2171 = vmatpush1.msra.mxu0 %v2148
      %2172 = vmatprep.subr.mxu0 0.0
      %2173 = vmatpush1.msra.mxu0 %v2149
      %2174 = vmatprep.subr.mxu0 0.0
      %2175 = vmatpush1.msra.mxu0 %v2150
      %2176 = vmatprep.subr.mxu0 0.0
      %2177 = vmatpush1.msra.mxu0 %v2151
      %2178 = vmatprep.subr.mxu0 0.0
      %2179 = vmatpush1.msra.mxu0 %v2152
      %2180 = vmatprep.subr.mxu0 0.0
      %2181 = vmatpush1.msra.mxu0 %v2153
      %2182 = vmatprep.subr.mxu0 0.0
      %2183 = vmatpush1.msra.mxu0 %v2154
      %2184 = vmatprep.subr.mxu0 0.0
      %2185 = vmatpush1.msra.mxu0 %v2155
      %2186 = vmatprep.subr.mxu0 0.0
      %2187 = vmatpush1.msra.mxu0 %v2156
      %2188 = vmatprep.subr.mxu0 0.0
      %2189 = vmatpush1.msra.mxu0 %v2157
      %2190 = vmatprep.subr.mxu0 0.0
      %2191 = vmatpush1.msra.mxu0 0.0
      %2192 = vmatprep.subr.mxu0 0.0
      %2193 = vmatpush1.msra.mxu0 0.0
      %2194 = vmatprep.subr.mxu0 0.0
      %2195 = vmatpush1.msra.mxu0 0.0
      %2196 = vmatprep.subr.mxu0 0.0
      %2197 = vmatpush1.msra.mxu0 0.0
      %2198 = vmatprep.subr.mxu0 0.0
      %2199 = vmatpush1.msra.mxu0 0.0
      %2200 = vmatprep.subr.mxu0 0.0
      %2201 = vmatpush1.msra.mxu0 0.0
      %2202 = vmatprep.subr.mxu0 0.0
      %2203 = vmatpush1.msra.mxu0 0.0
      %2204 = vmatprep.subr.mxu0 0.0
      %2205 = vmatpush1.msra.mxu0 0.0
      %2206 = vmatprep.subr.mxu0 0.0
      %2207 = vmatpush1.msra.mxu0 0.0
      %2208 = vmatprep.subr.mxu0 0.0
      %2209 = vmatpush1.msra.mxu0 0.0
      %2210 = vmatprep.subr.mxu0 0.0
      %2211 = vmatpush1.msra.mxu0 0.0
      %2212 = vmatprep.subr.mxu0 0.0
      %2213 = vmatpush1.msra.mxu0 0.0
      %2214 = vmatprep.subr.mxu0 0.0
      %2215 = vmatpush1.msra.mxu0 0.0
      %2216 = vmatprep.subr.mxu0 0.0
      %2217 = vmatpush1.msra.mxu0 0.0
      %2218 = vmatprep.subr.mxu0 0.0
      %2219 = vmatpush1.msra.mxu0 0.0
      %2220 = vmatprep.subr.mxu0 0.0
      %2221 = vmatpush1.msra.mxu0 0.0
      %2222 = vmatprep.mubr.f32.mxu0 0.0
      %2223 = vmatmul.mubr.f32.gmra.mrb[0].mxu0 %v1852
      %v2224 = vpop.f32.mrb[0].mxu0
      %v2225 = vadd.f32 0.0, %v2224
      %v2226 = vpop.f32.mrb[0].mxu0
      %2227 = vmatprep.mubr.f32.mxu0 0.0
      %2228 = vmatmul.mubr.f32.gmra.mrb[0].mxu0 %v1854
      %v2229 = vpop.f32.mrb[0].mxu0
      %v2230 = vadd.f32 0.0, %v2229
      %v2231 = vpop.f32.mrb[0].mxu0
      %2232 = vmatprep.mubr.f32.mxu0 0.0
      %2233 = vmatmul.mubr.f32.gmra.mrb[0].mxu0 %v1857
      %v2234 = vpop.f32.mrb[0].mxu0
      %v2235 = vadd.f32 0.0, %v2234
      %v2236 = vpop.f32.mrb[0].mxu0
      %2237 = vmatprep.mubr.f32.mxu0 0.0
      %2238 = vmatmul.mubr.f32.gmra.mrb[0].mxu0 %v1859
      %v2239 = vpop.f32.mrb[0].mxu0
      %v2240 = vadd.f32 0.0, %v2239
      %v2241 = vpop.f32.mrb[0].mxu0
      %2242 = vmatprep.mubr.f32.mxu0 0.0
      %2243 = vmatmul.mubr.f32.gmra.mrb[0].mxu0 %v1862
      %v2244 = vpop.f32.mrb[0].mxu0
      %v2245 = vadd.f32 0.0, %v2244
      %v2246 = vpop.f32.mrb[0].mxu0
      %2247 = vmatprep.mubr.f32.mxu0 0.0
      %2248 = vmatmul.mubr.f32.gmra.mrb[0].mxu0 %v1864
      %v2249 = vpop.f32.mrb[0].mxu0
      %v2250 = vadd.f32 0.0, %v2249
      %v2251 = vpop.f32.mrb[0].mxu0
      %2252 = vmatprep.mubr.f32.mxu0 0.0
      %2253 = vmatmul.mubr.f32.gmra.mrb[0].mxu0 %v1867
      %v2254 = vpop.f32.mrb[0].mxu0
      %v2255 = vadd.f32 0.0, %v2254
      %v2256 = vpop.f32.mrb[0].mxu0
      %2257 = vmatprep.mubr.f32.mxu0 0.0
      %2258 = vmatmul.mubr.f32.gmra.mrb[0].mxu0 %v1869
      %v2259 = vpop.f32.mrb[0].mxu0
      %v2260 = vadd.f32 0.0, %v2259
      %v2261 = vpop.f32.mrb[0].mxu0
      %2262 = vmatprep.mubr.f32.mxu0 0.0
      %2263 = vmatmul.mubr.f32.gmra.mrb[0].mxu0 %v1872
      %v2264 = vpop.f32.mrb[0].mxu0
      %v2265 = vadd.f32 0.0, %v2264
      %v2266 = vpop.f32.mrb[0].mxu0
      %2267 = vmatprep.mubr.f32.mxu0 0.0
      %2268 = vmatmul.mubr.f32.gmra.mrb[0].mxu0 %v1874
      %v2269 = vpop.f32.mrb[0].mxu0
      %v2270 = vadd.f32 0.0, %v2269
      %v2271 = vpop.f32.mrb[0].mxu0
      %2272 = vmatprep.mubr.f32.mxu0 0.0
      %2273 = vmatmul.mubr.f32.gmra.mrb[0].mxu0 %v1877
      %v2274 = vpop.f32.mrb[0].mxu0
      %v2275 = vadd.f32 0.0, %v2274
      %v2276 = vpop.f32.mrb[0].mxu0
      %2277 = vmatprep.mubr.f32.mxu0 0.0
      %2278 = vmatmul.mubr.f32.gmra.mrb[0].mxu0 %v1879
      %v2279 = vpop.f32.mrb[0].mxu0
      %v2280 = vadd.f32 0.0, %v2279
      %v2281 = vpop.f32.mrb[0].mxu0
      %2282 = vmatprep.mubr.f32.mxu0 0.0
      %2283 = vmatmul.mubr.f32.gmra.mrb[0].mxu0 %v1882
      %v2284 = vpop.f32.mrb[0].mxu0
      %v2285 = vadd.f32 0.0, %v2284
      %v2286 = vpop.f32.mrb[0].mxu0
      %2287 = vmatprep.mubr.f32.mxu0 0.0
      %2288 = vmatmul.mubr.f32.gmra.mrb[0].mxu0 %v1884
      %v2289 = vpop.f32.mrb[0].mxu0
      %v2290 = vadd.f32 0.0, %v2289
      %v2291 = vpop.f32.mrb[0].mxu0
      %2292 = vmatprep.mubr.f32.mxu0 0.0
      %2293 = vmatmul.mubr.f32.gmra.mrb[0].mxu0 %v1887
      %v2294 = vpop.f32.mrb[0].mxu0
      %v2295 = vadd.f32 0.0, %v2294
      %v2296 = vpop.f32.mrb[0].mxu0
      %2297 = vmatprep.mubr.f32.mxu0 0.0
      %2298 = vmatmul.mubr.f32.gmra.mrb[0].mxu0 %v1889
      %v2299 = vpop.f32.mrb[0].mxu0
      %v2300 = vadd.f32 0.0, %v2299
      %v2301 = vpop.f32.mrb[0].mxu0
      %2302 = vdwg.mxu0
      %v2303 = vadd.f32 %v2125, %v2225
      %v2304 = vadd.f32 %v2126, %v2230
      %v2305 = vadd.f32 %v2127, %v2235
      %v2306 = vadd.f32 %v2128, %v2240
      %v2307 = vadd.f32 %v2129, %v2245
      %v2308 = vadd.f32 %v2130, %v2250
      %v2309 = vadd.f32 %v2131, %v2255
      %v2310 = vadd.f32 %v2132, %v2260
      %v2311 = vadd.f32 %v2133, %v2265
      %v2312 = vadd.f32 %v2134, %v2270
      %v2313 = vadd.f32 %v2135, %v2275
      %v2314 = vadd.f32 %v2136, %v2280
      %v2315 = vadd.f32 %v2137, %v2285
      %v2316 = vadd.f32 %v2138, %v2290
      %v2317 = vadd.f32 %v2139, %v2295
      %v2318 = vadd.f32 %v2140, %v2300
      %2319 = vst [vmem:[#allocation3] sm:$0xff] %v2303
      %2320 = vst [vmem:[#allocation3 + $0x8] sm:$0xff] %v2304
      %2321 = vst [vmem:[#allocation3 + $0x10] sm:$0xff] %v2305
      %2322 = vst [vmem:[#allocation3 + $0x18] sm:$0xff] %v2306
      %2323 = vst [vmem:[#allocation3 + $0x20] sm:$0xff] %v2307
      %2324 = vst [vmem:[#allocation3 + $0x28] sm:$0xff] %v2308
      %2325 = vst [vmem:[#allocation3 + $0x30] sm:$0xff] %v2309
      %2326 = vst [vmem:[#allocation3 + $0x38] sm:$0xff] %v2310
      %2327 = vst [vmem:[#allocation3 + $0x40] sm:$0xff] %v2311
      %2328 = vst [vmem:[#allocation3 + $0x48] sm:$0xff] %v2312
      %2329 = vst [vmem:[#allocation3 + $0x50] sm:$0xff] %v2313
      %2330 = vst [vmem:[#allocation3 + $0x58] sm:$0xff] %v2314
      %2331 = vst [vmem:[#allocation3 + $0x60] sm:$0xff] %v2315
      %2332 = vst [vmem:[#allocation3 + $0x68] sm:$0xff] %v2316
      %2333 = vst [vmem:[#allocation3 + $0x70] sm:$0xff] %v2317
      %2334 = vst [vmem:[#allocation3 + $0x78] sm:$0xff] %v2318
      %v2335 = vld [vmem:[#allocation3] sm:$0xff]
      %v2336 = vld [vmem:[#allocation3 + $0x8] sm:$0xff]
      %v2337 = vld [vmem:[#allocation3 + $0x10] sm:$0xff]
      %v2338 = vld [vmem:[#allocation3 + $0x18] sm:$0xff]
      %v2339 = vld [vmem:[#allocation3 + $0x20] sm:$0xff]
      %v2340 = vld [vmem:[#allocation3 + $0x28] sm:$0xff]
      %v2341 = vld [vmem:[#allocation3 + $0x30] sm:$0xff]
      %v2342 = vld [vmem:[#allocation3 + $0x38] sm:$0xff]
      %v2343 = vld [vmem:[#allocation3 + $0x40] sm:$0xff]
      %v2344 = vld [vmem:[#allocation3 + $0x48] sm:$0xff]
      %v2345 = vld [vmem:[#allocation3 + $0x50] sm:$0xff]
      %v2346 = vld [vmem:[#allocation3 + $0x58] sm:$0xff]
      %v2347 = vld [vmem:[#allocation3 + $0x60] sm:$0xff]
      %v2348 = vld [vmem:[#allocation3 + $0x68] sm:$0xff]
      %v2349 = vld [vmem:[#allocation3 + $0x70] sm:$0xff]
      %v2350 = vld [vmem:[#allocation3 + $0x78] sm:$0xff]
      %s2351 = scalar_lea.vmem %s2, 1024
      %v2352 = vld [vmem:[%s2351] sm:$0xff]
      %v2353 = vld [vmem:[%s2351 + $0x8] sm:$0xff]
      %v2354 = vld [vmem:[%s2351 + $0x10] sm:$0xff]
      %v2355 = vld [vmem:[%s2351 + $0x18] sm:$0xff]
      %v2356 = vld [vmem:[%s2351 + $0x20] sm:$0xff]
      %v2357 = vld [vmem:[%s2351 + $0x28] sm:$0xff]
      %v2358 = vld [vmem:[%s2351 + $0x30] sm:$0xff]
      %v2359 = vld [vmem:[%s2351 + $0x38] sm:$0xff]
      %v2360 = vld [vmem:[%s2351 + $0x40] sm:$0xff]
      %v2361 = vld [vmem:[%s2351 + $0x48] sm:$0xff]
      %v2362 = vld [vmem:[%s2351 + $0x50] sm:$0xff]
      %v2363 = vld [vmem:[%s2351 + $0x58] sm:$0xff]
      %v2364 = vld [vmem:[%s2351 + $0x60] sm:$0xff]
      %v2365 = vld [vmem:[%s2351 + $0x68] sm:$0xff]
      %v2366 = vld [vmem:[%s2351 + $0x70] sm:$0xff]
      %v2367 = vld [vmem:[%s2351 + $0x78] sm:$0xff]
      %2368 = vmatprep.subr.mxu0 0.0
      %2369 = vmatpush1.msra.mxu0 %v2352
      %2370 = vmatprep.subr.mxu0 0.0
      %2371 = vmatpush1.msra.mxu0 %v2353
      %2372 = vmatprep.subr.mxu0 0.0
      %2373 = vmatpush1.msra.mxu0 %v2354
      %2374 = vmatprep.subr.mxu0 0.0
      %2375 = vmatpush1.msra.mxu0 %v2355
      %2376 = vmatprep.subr.mxu0 0.0
      %2377 = vmatpush1.msra.mxu0 %v2356
      %2378 = vmatprep.subr.mxu0 0.0
      %2379 = vmatpush1.msra.mxu0 %v2357
      %2380 = vmatprep.subr.mxu0 0.0
      %2381 = vmatpush1.msra.mxu0 %v2358
      %2382 = vmatprep.subr.mxu0 0.0
      %2383 = vmatpush1.msra.mxu0 %v2359
      %2384 = vmatprep.subr.mxu0 0.0
      %2385 = vmatpush1.msra.mxu0 %v2360
      %2386 = vmatprep.subr.mxu0 0.0
      %2387 = vmatpush1.msra.mxu0 %v2361
      %2388 = vmatprep.subr.mxu0 0.0
      %2389 = vmatpush1.msra.mxu0 %v2362
      %2390 = vmatprep.subr.mxu0 0.0
      %2391 = vmatpush1.msra.mxu0 %v2363
      %2392 = vmatprep.subr.mxu0 0.0
      %2393 = vmatpush1.msra.mxu0 %v2364
      %2394 = vmatprep.subr.mxu0 0.0
      %2395 = vmatpush1.msra.mxu0 %v2365
      %2396 = vmatprep.subr.mxu0 0.0
      %2397 = vmatpush1.msra.mxu0 %v2366
      %2398 = vmatprep.subr.mxu0 0.0
      %2399 = vmatpush1.msra.mxu0 %v2367
      %2400 = vmatprep.subr.mxu0 0.0
      %2401 = vmatpush1.msra.mxu0 0.0
      %2402 = vmatprep.subr.mxu0 0.0
      %2403 = vmatpush1.msra.mxu0 0.0
      %2404 = vmatprep.subr.mxu0 0.0
      %2405 = vmatpush1.msra.mxu0 0.0
      %2406 = vmatprep.subr.mxu0 0.0
      %2407 = vmatpush1.msra.mxu0 0.0
      %2408 = vmatprep.subr.mxu0 0.0
      %2409 = vmatpush1.msra.mxu0 0.0
      %2410 = vmatprep.subr.mxu0 0.0
      %2411 = vmatpush1.msra.mxu0 0.0
      %2412 = vmatprep.subr.mxu0 0.0
      %2413 = vmatpush1.msra.mxu0 0.0
      %2414 = vmatprep.subr.mxu0 0.0
      %2415 = vmatpush1.msra.mxu0 0.0
      %2416 = vmatprep.subr.mxu0 0.0
      %2417 = vmatpush1.msra.mxu0 0.0
      %2418 = vmatprep.subr.mxu0 0.0
      %2419 = vmatpush1.msra.mxu0 0.0
      %2420 = vmatprep.subr.mxu0 0.0
      %2421 = vmatpush1.msra.mxu0 0.0
      %2422 = vmatprep.subr.mxu0 0.0
      %2423 = vmatpush1.msra.mxu0 0.0
      %2424 = vmatprep.subr.mxu0 0.0
      %2425 = vmatpush1.msra.mxu0 0.0
      %2426 = vmatprep.subr.mxu0 0.0
      %2427 = vmatpush1.msra.mxu0 0.0
      %2428 = vmatprep.subr.mxu0 0.0
      %2429 = vmatpush1.msra.mxu0 0.0
      %2430 = vmatprep.subr.mxu0 0.0
      %2431 = vmatpush1.msra.mxu0 0.0
      %2432 = vmatprep.mubr.f32.mxu0 0.0
      %2433 = vmatmul.mubr.f32.gmra.mrb[0].mxu0 %v1857
      %v2434 = vpop.f32.mrb[0].mxu0
      %v2435 = vadd.f32 0.0, %v2434
      %v2436 = vpop.f32.mrb[0].mxu0
      %2437 = vmatprep.mubr.f32.mxu0 0.0
      %2438 = vmatmul.mubr.f32.gmra.mrb[0].mxu0 %v1859
      %v2439 = vpop.f32.mrb[0].mxu0
      %v2440 = vadd.f32 0.0, %v2439
      %v2441 = vpop.f32.mrb[0].mxu0
      %2442 = vmatprep.mubr.f32.mxu0 0.0
      %2443 = vmatmul.mubr.f32.gmra.mrb[0].mxu0 %v1862
      %v2444 = vpop.f32.mrb[0].mxu0
      %v2445 = vadd.f32 0.0, %v2444
      %v2446 = vpop.f32.mrb[0].mxu0
      %2447 = vmatprep.mubr.f32.mxu0 0.0
      %2448 = vmatmul.mubr.f32.gmra.mrb[0].mxu0 %v1864
      %v2449 = vpop.f32.mrb[0].mxu0
      %v2450 = vadd.f32 0.0, %v2449
      %v2451 = vpop.f32.mrb[0].mxu0
      %2452 = vmatprep.mubr.f32.mxu0 0.0
      %2453 = vmatmul.mubr.f32.gmra.mrb[0].mxu0 %v1867
      %v2454 = vpop.f32.mrb[0].mxu0
      %v2455 = vadd.f32 0.0, %v2454
      %v2456 = vpop.f32.mrb[0].mxu0
      %2457 = vmatprep.mubr.f32.mxu0 0.0
      %2458 = vmatmul.mubr.f32.gmra.mrb[0].mxu0 %v1869
      %v2459 = vpop.f32.mrb[0].mxu0
      %v2460 = vadd.f32 0.0, %v2459
      %v2461 = vpop.f32.mrb[0].mxu0
      %2462 = vmatprep.mubr.f32.mxu0 0.0
      %2463 = vmatmul.mubr.f32.gmra.mrb[0].mxu0 %v1872
      %v2464 = vpop.f32.mrb[0].mxu0
      %v2465 = vadd.f32 0.0, %v2464
      %v2466 = vpop.f32.mrb[0].mxu0
      %2467 = vmatprep.mubr.f32.mxu0 0.0
      %2468 = vmatmul.mubr.f32.gmra.mrb[0].mxu0 %v1874
      %v2469 = vpop.f32.mrb[0].mxu0
      %v2470 = vadd.f32 0.0, %v2469
      %v2471 = vpop.f32.mrb[0].mxu0
      %2472 = vmatprep.mubr.f32.mxu0 0.0
      %2473 = vmatmul.mubr.f32.gmra.mrb[0].mxu0 %v1877
      %v2474 = vpop.f32.mrb[0].mxu0
      %v2475 = vadd.f32 0.0, %v2474
      %v2476 = vpop.f32.mrb[0].mxu0
      %2477 = vmatprep.mubr.f32.mxu0 0.0
      %2478 = vmatmul.mubr.f32.gmra.mrb[0].mxu0 %v1879
      %v2479 = vpop.f32.mrb[0].mxu0
      %v2480 = vadd.f32 0.0, %v2479
      %v2481 = vpop.f32.mrb[0].mxu0
      %2482 = vmatprep.mubr.f32.mxu0 0.0
      %2483 = vmatmul.mubr.f32.gmra.mrb[0].mxu0 %v1882
      %v2484 = vpop.f32.mrb[0].mxu0
      %v2485 = vadd.f32 0.0, %v2484
      %v2486 = vpop.f32.mrb[0].mxu0
      %2487 = vmatprep.mubr.f32.mxu0 0.0
      %2488 = vmatmul.mubr.f32.gmra.mrb[0].mxu0 %v1884
      %v2489 = vpop.f32.mrb[0].mxu0
      %v2490 = vadd.f32 0.0, %v2489
      %v2491 = vpop.f32.mrb[0].mxu0
      %2492 = vmatprep.mubr.f32.mxu0 0.0
      %2493 = vmatmul.mubr.f32.gmra.mrb[0].mxu0 %v1887
      %v2494 = vpop.f32.mrb[0].mxu0
      %v2495 = vadd.f32 0.0, %v2494
      %v2496 = vpop.f32.mrb[0].mxu0
      %2497 = vmatprep.mubr.f32.mxu0 0.0
      %2498 = vmatmul.mubr.f32.gmra.mrb[0].mxu0 %v1889
      %v2499 = vpop.f32.mrb[0].mxu0
      %v2500 = vadd.f32 0.0, %v2499
      %v2501 = vpop.f32.mrb[0].mxu0
      %2502 = vmatprep.mubr.f32.mxu0 0.0
      %2503 = vmatmul.mubr.f32.gmra.mrb[0].mxu0 %v1892
      %v2504 = vpop.f32.mrb[0].mxu0
      %v2505 = vadd.f32 0.0, %v2504
      %v2506 = vpop.f32.mrb[0].mxu0
      %2507 = vmatprep.mubr.f32.mxu0 0.0
      %2508 = vmatmul.mubr.f32.gmra.mrb[0].mxu0 %v1894
      %v2509 = vpop.f32.mrb[0].mxu0
      %v2510 = vadd.f32 0.0, %v2509
      %v2511 = vpop.f32.mrb[0].mxu0
      %2512 = vdwg.mxu0
      %v2513 = vadd.f32 %v2335, %v2435
      %v2514 = vadd.f32 %v2336, %v2440
      %v2515 = vadd.f32 %v2337, %v2445
      %v2516 = vadd.f32 %v2338, %v2450
      %v2517 = vadd.f32 %v2339, %v2455
      %v2518 = vadd.f32 %v2340, %v2460
      %v2519 = vadd.f32 %v2341, %v2465
      %v2520 = vadd.f32 %v2342, %v2470
      %v2521 = vadd.f32 %v2343, %v2475
      %v2522 = vadd.f32 %v2344, %v2480
      %v2523 = vadd.f32 %v2345, %v2485
      %v2524 = vadd.f32 %v2346, %v2490
      %v2525 = vadd.f32 %v2347, %v2495
      %v2526 = vadd.f32 %v2348, %v2500
      %v2527 = vadd.f32 %v2349, %v2505
      %v2528 = vadd.f32 %v2350, %v2510
      %2529 = vst [vmem:[#allocation3] sm:$0xff] %v2513
      %2530 = vst [vmem:[#allocation3 + $0x8] sm:$0xff] %v2514
      %2531 = vst [vmem:[#allocation3 + $0x10] sm:$0xff] %v2515
      %2532 = vst [vmem:[#allocation3 + $0x18] sm:$0xff] %v2516
      %2533 = vst [vmem:[#allocation3 + $0x20] sm:$0xff] %v2517
      %2534 = vst [vmem:[#allocation3 + $0x28] sm:$0xff] %v2518
      %2535 = vst [vmem:[#allocation3 + $0x30] sm:$0xff] %v2519
      %2536 = vst [vmem:[#allocation3 + $0x38] sm:$0xff] %v2520
      %2537 = vst [vmem:[#allocation3 + $0x40] sm:$0xff] %v2521
      %2538 = vst [vmem:[#allocation3 + $0x48] sm:$0xff] %v2522
      %2539 = vst [vmem:[#allocation3 + $0x50] sm:$0xff] %v2523
      %2540 = vst [vmem:[#allocation3 + $0x58] sm:$0xff] %v2524
      %2541 = vst [vmem:[#allocation3 + $0x60] sm:$0xff] %v2525
      %2542 = vst [vmem:[#allocation3 + $0x68] sm:$0xff] %v2526
      %2543 = vst [vmem:[#allocation3 + $0x70] sm:$0xff] %v2527
      %2544 = vst [vmem:[#allocation3 + $0x78] sm:$0xff] %v2528
      %v2545 = vld [vmem:[#allocation3] sm:$0xff]
      %v2546 = vld [vmem:[#allocation3 + $0x8] sm:$0xff]
      %v2547 = vld [vmem:[#allocation3 + $0x10] sm:$0xff]
      %v2548 = vld [vmem:[#allocation3 + $0x18] sm:$0xff]
      %v2549 = vld [vmem:[#allocation3 + $0x20] sm:$0xff]
      %v2550 = vld [vmem:[#allocation3 + $0x28] sm:$0xff]
      %v2551 = vld [vmem:[#allocation3 + $0x30] sm:$0xff]
      %v2552 = vld [vmem:[#allocation3 + $0x38] sm:$0xff]
      %v2553 = vld [vmem:[#allocation3 + $0x40] sm:$0xff]
      %v2554 = vld [vmem:[#allocation3 + $0x48] sm:$0xff]
      %v2555 = vld [vmem:[#allocation3 + $0x50] sm:$0xff]
      %v2556 = vld [vmem:[#allocation3 + $0x58] sm:$0xff]
      %v2557 = vld [vmem:[#allocation3 + $0x60] sm:$0xff]
      %v2558 = vld [vmem:[#allocation3 + $0x68] sm:$0xff]
      %v2559 = vld [vmem:[#allocation3 + $0x70] sm:$0xff]
      %v2560 = vld [vmem:[#allocation3 + $0x78] sm:$0xff]
      %v2561 = vld [vmem:[%s3] sm:$0x1]
      %v2563 = vlaneseq
      %v2564 = vshrl.u32 %v2563, 7
      %v2565 = vsub.s32 0, %v2564
      %v2566 = vrot.slane %v2561, %v2565
      %v2568 = vadd.f32 %v2545, %v2566
      %v2569 = vadd.f32 %v2546, %v2566
      %v2570 = vadd.f32 %v2547, %v2566
      %v2571 = vadd.f32 %v2548, %v2566
      %v2572 = vadd.f32 %v2549, %v2566
      %v2573 = vadd.f32 %v2550, %v2566
      %v2574 = vadd.f32 %v2551, %v2566
      %v2575 = vadd.f32 %v2552, %v2566
      %v2576 = vadd.f32 %v2553, %v2566
      %v2577 = vadd.f32 %v2554, %v2566
      %v2578 = vadd.f32 %v2555, %v2566
      %v2579 = vadd.f32 %v2556, %v2566
      %v2580 = vadd.f32 %v2557, %v2566
      %v2581 = vadd.f32 %v2558, %v2566
      %v2582 = vadd.f32 %v2559, %v2566
      %v2583 = vadd.f32 %v2560, %v2566
      %2584 = vst [vmem:[%s335] sm:$0xff] %v2568
      %2585 = vst [vmem:[%s335 + $0x8] sm:$0xff] %v2569
      %2586 = vst [vmem:[%s335 + $0x10] sm:$0xff] %v2570
      %2587 = vst [vmem:[%s335 + $0x18] sm:$0xff] %v2571
      %2588 = vst [vmem:[%s335 + $0x20] sm:$0xff] %v2572
      %2589 = vst [vmem:[%s335 + $0x28] sm:$0xff] %v2573
      %2590 = vst [vmem:[%s335 + $0x30] sm:$0xff] %v2574
      %2591 = vst [vmem:[%s335 + $0x38] sm:$0xff] %v2575
      %2592 = vst [vmem:[%s335 + $0x40] sm:$0xff] %v2576
      %2593 = vst [vmem:[%s335 + $0x48] sm:$0xff] %v2577
      %2594 = vst [vmem:[%s335 + $0x50] sm:$0xff] %v2578
      %2595 = vst [vmem:[%s335 + $0x58] sm:$0xff] %v2579
      %2596 = vst [vmem:[%s335 + $0x60] sm:$0xff] %v2580
      %2597 = vst [vmem:[%s335 + $0x68] sm:$0xff] %v2581
      %2598 = vst [vmem:[%s335 + $0x70] sm:$0xff] %v2582
      %2599 = vst [vmem:[%s335 + $0x78] sm:$0xff] %v2583
      %v2600 = vadd.f32 %v2568, %v2569
      %v2601 = vadd.f32 %v2600, %v2570
      %v2602 = vadd.f32 %v2601, %v2571
      %v2603 = vadd.f32 %v2602, %v2572
      %v2604 = vadd.f32 %v2603, %v2573
      %v2605 = vadd.f32 %v2604, %v2574
      %v2606 = vadd.f32 %v2605, %v2575
      %v2607 = vadd.f32 %v2606, %v2576
      %v2608 = vadd.f32 %v2607, %v2577
      %v2609 = vadd.f32 %v2608, %v2578
      %v2610 = vadd.f32 %v2609, %v2579
      %v2611 = vadd.f32 %v2610, %v2580
      %v2612 = vadd.f32 %v2611, %v2581
      %v2613 = vadd.f32 %v2612, %v2582
      %v2614 = vadd.f32 %v2613, %v2583
      %v2615 = vrot.slane %v2614, 4
      %v2616 = vadd.f32 %v2614, %v2615
      %v2617 = vrot.slane %v2616, 2
      %v2618 = vadd.f32 %v2616, %v2617
      %v2619 = vrot.slane %v2618, 1
      %v2620 = vadd.f32 %v2618, %v2619
      %2621 = vst [vmem:[%s344] sm:$0x1] %v2620
      %v2622 = vmul.f32 %v2568, %v2568
      %v2623 = vmul.f32 %v2569, %v2569
      %v2624 = vmul.f32 %v2570, %v2570
      %v2625 = vmul.f32 %v2571, %v2571
      %v2626 = vmul.f32 %v2572, %v2572
      %v2627 = vmul.f32 %v2573, %v2573
      %v2628 = vmul.f32 %v2574, %v2574
      %v2629 = vmul.f32 %v2575, %v2575
      %v2630 = vmul.f32 %v2576, %v2576
      %v2631 = vmul.f32 %v2577, %v2577
      %v2632 = vmul.f32 %v2578, %v2578
      %v2633 = vmul.f32 %v2579, %v2579
      %v2634 = vmul.f32 %v2580, %v2580
      %v2635 = vmul.f32 %v2581, %v2581
      %v2636 = vmul.f32 %v2582, %v2582
      %v2637 = vmul.f32 %v2583, %v2583
      %v2638 = vadd.f32 %v2622, %v2623
      %v2639 = vadd.f32 %v2638, %v2624
      %v2640 = vadd.f32 %v2639, %v2625
      %v2641 = vadd.f32 %v2640, %v2626
      %v2642 = vadd.f32 %v2641, %v2627
      %v2643 = vadd.f32 %v2642, %v2628
      %v2644 = vadd.f32 %v2643, %v2629
      %v2645 = vadd.f32 %v2644, %v2630
      %v2646 = vadd.f32 %v2645, %v2631
      %v2647 = vadd.f32 %v2646, %v2632
      %v2648 = vadd.f32 %v2647, %v2633
      %v2649 = vadd.f32 %v2648, %v2634
      %v2650 = vadd.f32 %v2649, %v2635
      %v2651 = vadd.f32 %v2650, %v2636
      %v2652 = vadd.f32 %v2651, %v2637
      %v2653 = vrot.slane %v2652, 4
      %v2654 = vadd.f32 %v2652, %v2653
      %v2655 = vrot.slane %v2654, 2
      %v2656 = vadd.f32 %v2654, %v2655
      %v2657 = vrot.slane %v2656, 1
      %v2658 = vadd.f32 %v2656, %v2657
      %2659 = vst [vmem:[%s344 + $0x1] sm:$0x1] %v2658
      %s2660 = smul.u32 %s21, 2
      %s2661 = sadd.s32 %s2660, %s22
      %s2662 = smul.u32 16, %s2661
      %p2663 = scmp.lt.s32.totalorder %s2662, 63
      %s2664 = scalar_select %p2663, %s2662, 63
      %s2665 = smul.addr %s2664, 8
      %s2666 = scalar_lea.vmem %s4, %s2665
      %s2667 = smul.u32 %s21, 2
      %s2668 = sadd.s32 %s2667, %s22
      %p2669 = scmp.lt.s32.totalorder %s2668, 3
      %s2670 = scalar_select %p2669, %s2668, 3
      %s2671 = smul.addr %s2670, 2
      %s2672 = scalar_lea.vmem %s5, %s2671
      // Predicated region
      $region37: #{resblock_pallas.3} parent=35 // pred_check
        %p2673 = pneg %p149
      $region38: #{resblock_pallas.3} parent=35 // pred_check_branch
        %2675 = sbr.rel (%p2673) target = $region40
      $region39: #{resblock_pallas.3} parent=35 // pred_region
        %s2676 = smul.u32 %s21, 2
        %s2677 = sadd.s32 %s2676, %s22
        %s2678 = smul.u32 16, %s2677
      $region40: #{resblock_pallas.3} parent=35 // pred_fallthru
        _
      // Predicated region
      $region41: #{resblock_pallas.3} parent=35 // pred_check
        %p2679 = pneg %p179
      $region42: #{resblock_pallas.3} parent=35 // pred_check_branch
        %2681 = sbr.rel (%p2679) target = $region44
      $region43: #{resblock_pallas.3} parent=35 // pred_region
        %s2682 = smul.u32 %s21, 2
        %s2683 = sadd.s32 %s2682, %s22
      $region44: #{resblock_pallas.3} parent=35 // pred_fallthru
        _
    $region36: #{resblock_pallas.3} parent=5 // pred_fallthru
      _
    %p2684 = scmp.le.s32.totalorder 2, %s12
    // Predicated region
    $region45: #{resblock_pallas.3} parent=5 // pred_check
      %p2685 = pneg %p2684
    $region46: #{resblock_pallas.3} parent=5 // pred_check_branch
      %2687 = sbr.rel (%p2685) target = $region48
    $region47: #{resblock_pallas.3} parent=5 // pred_region
      %s2688 = ssub.s32 %s12, 2
      // Predicated region
      $region49: #{resblock_pallas.3} parent=47 // pred_check
        %p2689 = pneg %p155
      $region50: #{resblock_pallas.3} parent=47 // pred_check_branch
        %2691 = sbr.rel (%p2689) target = $region52
      $region51: #{resblock_pallas.3} parent=47 // pred_region
        %s2692 = smul.u32 %s23, 2
        %s2693 = sadd.s32 %s2692, %s24
        %s2694 = smul.u32 16, %s2693
        %p2695 = scmp.lt.s32.totalorder %s2694, 63
        %s2696 = scalar_select %p2695, %s2694, 63
        %s2697 = smul.addr %s2696, 8
        %s2698 = scalar_lea.vmem %s4, %s2697
      $region52: #{resblock_pallas.3} parent=47 // pred_fallthru
        _
      // Predicated region
      $region53: #{resblock_pallas.3} parent=47 // pred_check
        %p2699 = pneg %p185
      $region54: #{resblock_pallas.3} parent=47 // pred_check_branch
        %2701 = sbr.rel (%p2699) target = $region56
      $region55: #{resblock_pallas.3} parent=47 // pred_region
        %s2702 = smul.u32 %s23, 2
        %s2703 = sadd.s32 %s2702, %s24
        %p2704 = scmp.lt.s32.totalorder %s2703, 3
        %s2705 = scalar_select %p2704, %s2703, 3
        %s2706 = smul.addr %s2705, 2
        %s2707 = scalar_lea.vmem %s5, %s2706
      $region56: #{resblock_pallas.3} parent=47 // pred_fallthru
        _
    $region48: #{resblock_pallas.3} parent=5 // pred_fallthru
      _
  $region6: #{resblock_pallas.3} parent=0 // loop_footer
    %s16 = sadd.s32 1, %s12
  $region7: #{resblock_pallas.3} parent=0 // loop_footer_branch
    %11 = sbr.rel target = $region3
  $region8: #{resblock_pallas.3} parent=0 // loop_exit
    _

</llo_original>
